<compile_context>
chip_gen: v6e
topology: v6e:2x2x1
jax: 0.10.0
libtpu: 0.0.40
codegen_flags: <defaults>
</compile_context>

<pallas_src>
import jax
import jax.numpy as jnp
import numpy as np
from jax.experimental import pallas as pl
from jax.experimental.pallas import tpu as pltpu


def _merge_mask_mlp_kernel(x_ref, sig_ref, omsig_ref,
                           w1_ref, b1_ref, w2_ref, b2_ref,
                           m1_ref, mb1_ref, m2_ref, mb2_ref, m3_ref, mb3_ref,
                           out_x_ref, out_cf_ref, out_m_ref):
    TN, SD = x_ref.shape                     # (row_tile, S*D)
    O = m3_ref.shape[1]

    xr = x_ref[...]                          # (TN, S*D)  x lane-tiled per subject
    xm = xr * sig_ref[...]                   # lane-stacked masked x (= residual)
    xcf = xr * omsig_ref[...]                # lane-stacked counterfactual x
    xin = jnp.concatenate([xm, xcf], axis=0)  # (2*TN, S*D)

    # singleResmlp for all S subjects at once via block-diagonal weights.
    h = jnp.maximum(
        jnp.dot(xin, w1_ref[...], preferred_element_type=jnp.float32) + b1_ref[...],
        0.0)                                  # (2*TN, S*H)
    y_all = jnp.dot(h, w2_ref[...], preferred_element_type=jnp.float32) + b2_ref[...]
    y, ycf = y_all[:TN], y_all[TN:]           # (TN, S*O); subject s in lanes [s*O,(s+1)*O)

    out_x_ref[...] = y + xm                   # residual is the MASKED x (O == D)
    out_cf_ref[...] = 2.0 * ycf               # ycf + ycf

    # mergeResmlp on row-stacked [merge_x ; merge_cf] (shared weights).
    # merge_x / merge_cf are exactly the lane-stacked y / ycf (concat on dim 2).
    h1 = jnp.maximum(
        jnp.dot(y_all, m1_ref[...], preferred_element_type=jnp.float32) + mb1_ref[...],
        0.0)                                  # (2*TN, 2*S*H)
    h2 = jnp.maximum(
        jnp.dot(h1, m2_ref[...], preferred_element_type=jnp.float32) + mb2_ref[...],
        0.0)                                  # (2*TN, S*H)
    mo = jnp.dot(h2, m3_ref[...], preferred_element_type=jnp.float32) + mb3_ref[...]
    out_m_ref[...] = jnp.concatenate([mo[:TN], mo[TN:]], axis=-1)   # (TN, 2*O) lane-dense


def merge_mask_mlp_forward(x, params, *, row_tile=512):
    """x: (B, T, D) float32.

    Returns (out_x, out_cf, out_merge_x, out_merge_cf) where out_x / out_cf are
    (B, T, S, O); out_x[..., s, :] == out_x_list[s] of the PyTorch module.
    """
    B, T, D = x.shape
    N = B * T
    S = params["mask"].shape[0]
    H = params["w1"].shape[1]
    O = params["w2"].shape[1]
    assert O == D, "use_residual=True requires in_dim == out_dim"
    SD, SH, SO = S * D, S * H, S * O

    # Keep >= 2 grid steps (floor 256) so v7x's two TensorCores both get work.
    while row_tile > 256 and pl.cdiv(N, row_tile) < 2:
        row_tile //= 2
    num_steps = pl.cdiv(N, row_tile)
    n_pad = num_steps * row_tile

    x2 = x.reshape(N, D)
    if n_pad != N:
        x2 = jnp.pad(x2, ((0, n_pad - N), (0, 0)))   # pad rows are sliced off below
    x_rep = jnp.tile(x2, (1, S))                      # (n_pad, S*D) lane-dense input

    sig = jax.nn.sigmoid(params["mask"]).reshape(1, SD)   # sigmoid hoisted out of kernel
    omsig = 1.0 - sig

    eye = jnp.eye(S, dtype=jnp.float32)
    w1_bd = jnp.kron(eye, params["w1"])               # (S*D, S*H) block-diagonal
    b1_bd = jnp.tile(params["b1"], (1, S))            # (1, S*H)
    w2_bd = jnp.kron(eye, params["w2"])               # (S*H, S*O) block-diagonal
    b2_bd = jnp.tile(params["b2"], (1, S))            # (1, S*O)

    bcast = lambda i: (0, 0)
    row_map = lambda i: (i, 0)
    in_specs = [
        pl.BlockSpec((row_tile, SD), row_map),                       # x lane-tiled
        pl.BlockSpec((1, SD), bcast), pl.BlockSpec((1, SD), bcast),  # sig, 1-sig
        pl.BlockSpec((SD, SH), bcast), pl.BlockSpec((1, SH), bcast),  # single L1 (block-diag)
        pl.BlockSpec((SH, SO), bcast), pl.BlockSpec((1, SO), bcast),  # single L2 (block-diag)
        pl.BlockSpec((SO, 2 * SH), bcast), pl.BlockSpec((1, 2 * SH), bcast),  # merge L1
        pl.BlockSpec((2 * SH, SH), bcast), pl.BlockSpec((1, SH), bcast),      # merge L2
        pl.BlockSpec((SH, O), bcast), pl.BlockSpec((1, O), bcast),            # merge L3
    ]
    out_specs = (
        pl.BlockSpec((row_tile, SO), row_map),        # per-subject x   (lane-dense, 128)
        pl.BlockSpec((row_tile, SO), row_map),        # per-subject cf  (lane-dense, 128)
        pl.BlockSpec((row_tile, 2 * O), row_map),     # [merge_x | merge_cf]
    )
    out_shape = (
        jax.ShapeDtypeStruct((n_pad, SO), jnp.float32),
        jax.ShapeDtypeStruct((n_pad, SO), jnp.float32),
        jax.ShapeDtypeStruct((n_pad, 2 * O), jnp.float32),
    )

    # Advisory cost estimate (params counted once: constant index_map blocks are
    # only DMA'd once by the pipeline).
    flops = int(2 * (2 * n_pad) * (SD * SH + SH * SO
                                   + SO * 2 * SH + 2 * SH * SH + SH * O))
    param_bytes = 4 * (2 * SD + SD * SH + SH + SH * SO + SO
                       + SO * 2 * SH + 2 * SH + 2 * SH * SH + SH + SH * O + O)
    bytes_accessed = int(4 * n_pad * (SD + 2 * SO + 2 * O) + param_bytes)

    out_x, out_cf, out_m = pl.pallas_call(
        _merge_mask_mlp_kernel,
        out_shape=out_shape,
        grid_spec=pltpu.PrefetchScalarGridSpec(
            num_scalar_prefetch=0,
            grid=(num_steps,),
            in_specs=in_specs,
            out_specs=out_specs,
        ),
        compiler_params=pltpu.CompilerParams(
            dimension_semantics=("parallel",),
            vmem_limit_bytes=32 * 1024 * 1024),
        cost_estimate=pl.CostEstimate(flops=flops,
                                      transcendentals=0,
                                      bytes_accessed=bytes_accessed),
    )(x_rep, sig, omsig,
      w1_bd, b1_bd, w2_bd, b2_bd,
      params["m1"], params["mb1"], params["m2"], params["mb2"],
      params["m3"], params["mb3"])

    out_x = out_x[:N].reshape(B, T, S, O)        # pure reshape (no strided slices)
    out_cf = out_cf[:N].reshape(B, T, S, O)
    out_mx = out_m[:N, :O].reshape(B, T, O)
    out_mcf = out_m[:N, O:].reshape(B, T, O)
    return out_x, out_cf, out_mx, out_mcf


def init_params(key, S, D, H, O):
    """Deterministic synthetic params. Linear weights stored (in, out)."""
    def lin(k, fan_in, fan_out):
        kw, kb = jax.random.split(k)
        bound = 1.0 / float(np.sqrt(fan_in))
        w = jax.random.uniform(kw, (fan_in, fan_out), jnp.float32, -bound, bound)
        b = jax.random.uniform(kb, (1, fan_out), jnp.float32, -bound, bound)
        return w, b

    ks = jax.random.split(key, 5)
    w1, b1 = lin(ks[0], D, H)
    w2, b2 = lin(ks[1], H, O)
    m1, mb1 = lin(ks[2], S * D, 2 * S * H)
    m2, mb2 = lin(ks[3], 2 * S * H, S * H)
    m3, mb3 = lin(ks[4], S * H, O)
    mask = jnp.ones((S, D), jnp.float32)  # matches nn.Parameter(torch.ones(in_dim)) init
    return dict(mask=mask, w1=w1, b1=b1, w2=w2, b2=b2,
                m1=m1, mb1=mb1, m2=m2, mb2=mb2, m3=m3, mb3=mb3)


def reference_forward(x, p):
    """Pure-JAX reference reproducing the PyTorch forward."""
    S = p["mask"].shape[0]
    sig = jax.nn.sigmoid(p["mask"])  # (S, D)

    def single(z):
        h = jnp.maximum(z @ p["w1"] + p["b1"], 0.0)
        return h @ p["w2"] + p["b2"]

    def merge(z):
        h1 = jnp.maximum(z @ p["m1"] + p["mb1"], 0.0)
        h2 = jnp.maximum(h1 @ p["m2"] + p["mb2"], 0.0)
        return h2 @ p["m3"] + p["mb3"]

    xm = [x * sig[i][None, None, :] for i in range(S)]
    xcf = [x * (1.0 - sig[i])[None, None, :] for i in range(S)]
    y = [single(xm[i]) for i in range(S)]
    ycf = [single(xcf[i]) for i in range(S)]
    out_x = [y[i] + xm[i] for i in range(S)]
    out_cf = [ycf[i] + ycf[i] for i in range(S)]
    merge_x = jnp.concatenate(y, axis=2)
    merge_cf = jnp.concatenate(ycf, axis=2)
    return out_x, out_cf, merge(merge_x), merge(merge_cf)


if __name__ == "__main__":
    # Small shapes consistent with the module; N=400 exercises the row_tile
    # auto-halving (512 -> 256), cdiv padding (-> 512) and a 2-step parallel grid.
    B, T = 4, 100
    S, D, H = 4, 32, 32
    O = D  # use_residual=True requires in_dim == out_dim

    key = jax.random.PRNGKey(0)
    kx, kp = jax.random.split(key)
    x = jax.random.normal(kx, (B, T, D), jnp.float32)
    params = init_params(kp, S, D, H, O)

    out_x, out_cf, out_mx, out_mcf = merge_mask_mlp_forward(x, params)
    jax.block_until_ready((out_x, out_cf, out_mx, out_mcf))

    # correctness check against pure-JAX reference
    r_x, r_cf, r_mx, r_mcf = reference_forward(x, params)
    for s in range(S):
        np.testing.assert_allclose(np.asarray(out_x[..., s, :]), np.asarray(r_x[s]),
                                   rtol=1e-5, atol=1e-5)
        np.testing.assert_allclose(np.asarray(out_cf[..., s, :]), np.asarray(r_cf[s]),
                                   rtol=1e-5, atol=1e-5)
    np.testing.assert_allclose(np.asarray(out_mx), np.asarray(r_mx), rtol=1e-5, atol=1e-5)
    np.testing.assert_allclose(np.asarray(out_mcf), np.asarray(r_mcf), rtol=1e-5, atol=1e-5)

    print("KERNEL_OK")
</pallas_src>

<mosaic_0001>
module attributes {stable_mosaic.version = 11 : i64} {
  func.func @_merge_mask_mlp_kernel(%arg0: i32, %arg1: memref<256x128xf32, #tpu.memory_space<vmem>>, %arg2: memref<1x128xf32, #tpu.memory_space<vmem>>, %arg3: memref<1x128xf32, #tpu.memory_space<vmem>>, %arg4: memref<128x128xf32, #tpu.memory_space<vmem>>, %arg5: memref<1x128xf32, #tpu.memory_space<vmem>>, %arg6: memref<128x128xf32, #tpu.memory_space<vmem>>, %arg7: memref<1x128xf32, #tpu.memory_space<vmem>>, %arg8: memref<128x256xf32, #tpu.memory_space<vmem>>, %arg9: memref<1x256xf32, #tpu.memory_space<vmem>>, %arg10: memref<256x128xf32, #tpu.memory_space<vmem>>, %arg11: memref<1x128xf32, #tpu.memory_space<vmem>>, %arg12: memref<128x32xf32, #tpu.memory_space<vmem>>, %arg13: memref<1x32xf32, #tpu.memory_space<vmem>>, %arg14: memref<256x128xf32, #tpu.memory_space<vmem>>, %arg15: memref<256x128xf32, #tpu.memory_space<vmem>>, %arg16: memref<256x64xf32, #tpu.memory_space<vmem>>) attributes {dimension_semantics = [#tpu.dimension_semantics<parallel>], iteration_bounds = array<i64: 2>, scalar_prefetch = 0 : i64, scratch_operands = 0 : i64, tpu.core_type = #tpu.core_type<tc>, window_params = [{transform_indices = @transform_0, window_bounds = array<i64: 256, 128>}, {pipeline_mode = #tpu.pipeline_mode<synchronous>, transform_indices = @transform_1, window_bounds = array<i64: 1, 128>}, {pipeline_mode = #tpu.pipeline_mode<synchronous>, transform_indices = @transform_2, window_bounds = array<i64: 1, 128>}, {pipeline_mode = #tpu.pipeline_mode<synchronous>, transform_indices = @transform_3, window_bounds = array<i64: 128, 128>}, {pipeline_mode = #tpu.pipeline_mode<synchronous>, transform_indices = @transform_4, window_bounds = array<i64: 1, 128>}, {pipeline_mode = #tpu.pipeline_mode<synchronous>, transform_indices = @transform_5, window_bounds = array<i64: 128, 128>}, {pipeline_mode = #tpu.pipeline_mode<synchronous>, transform_indices = @transform_6, window_bounds = array<i64: 1, 128>}, {pipeline_mode = #tpu.pipeline_mode<synchronous>, transform_indices = @transform_7, window_bounds = array<i64: 128, 256>}, {pipeline_mode = #tpu.pipeline_mode<synchronous>, transform_indices = @transform_8, window_bounds = array<i64: 1, 256>}, {pipeline_mode = #tpu.pipeline_mode<synchronous>, transform_indices = @transform_9, window_bounds = array<i64: 256, 128>}, {pipeline_mode = #tpu.pipeline_mode<synchronous>, transform_indices = @transform_10, window_bounds = array<i64: 1, 128>}, {pipeline_mode = #tpu.pipeline_mode<synchronous>, transform_indices = @transform_11, window_bounds = array<i64: 128, 32>}, {pipeline_mode = #tpu.pipeline_mode<synchronous>, transform_indices = @transform_12, window_bounds = array<i64: 1, 32>}, {transform_indices = @transform_13, window_bounds = array<i64: 256, 128>}, {transform_indices = @transform_14, window_bounds = array<i64: 256, 128>}, {transform_indices = @transform_15, window_bounds = array<i64: 256, 64>}]} {
    %c0 = arith.constant 0 : index
    %c0_0 = arith.constant 0 : index
    %0 = vector.load %arg1[%c0, %c0_0] : memref<256x128xf32, #tpu.memory_space<vmem>>, vector<256x128xf32>
    %c0_1 = arith.constant 0 : index
    %c0_2 = arith.constant 0 : index
    %1 = vector.load %arg2[%c0_1, %c0_2] : memref<1x128xf32, #tpu.memory_space<vmem>>, vector<1x128xf32>
    %2 = vector.broadcast %1 : vector<1x128xf32> to vector<256x128xf32>
    %3 = arith.mulf %0, %2 : vector<256x128xf32>
    %c0_3 = arith.constant 0 : index
    %c0_4 = arith.constant 0 : index
    %4 = vector.load %arg3[%c0_3, %c0_4] : memref<1x128xf32, #tpu.memory_space<vmem>>, vector<1x128xf32>
    %5 = vector.broadcast %4 : vector<1x128xf32> to vector<256x128xf32>
    %6 = arith.mulf %0, %5 : vector<256x128xf32>
    %7 = tpu.concatenate %3, %6 in 0 : vector<256x128xf32>, vector<256x128xf32> -> vector<512x128xf32>
    %c0_5 = arith.constant 0 : index
    %c0_6 = arith.constant 0 : index
    %8 = vector.load %arg4[%c0_5, %c0_6] : memref<128x128xf32, #tpu.memory_space<vmem>>, vector<128x128xf32>
    %cst = arith.constant dense<0.000000e+00> : vector<512x128xf32>
    %9 = tpu.matmul %7, %8, %cst {dimension_numbers = #tpu.dot_dimension_numbers<[1], [0], [0], [1], [0, 0, 1, 1], [], []>} : vector<512x128xf32>, vector<128x128xf32>, vector<512x128xf32> -> vector<512x128xf32>
    %c0_7 = arith.constant 0 : index
    %c0_8 = arith.constant 0 : index
    %10 = vector.load %arg5[%c0_7, %c0_8] : memref<1x128xf32, #tpu.memory_space<vmem>>, vector<1x128xf32>
    %11 = vector.broadcast %10 : vector<1x128xf32> to vector<512x128xf32>
    %12 = arith.addf %9, %11 : vector<512x128xf32>
    %cst_9 = arith.constant 0.000000e+00 : f32
    %13 = vector.broadcast %cst_9 : f32 to vector<512x128xf32>
    %14 = arith.maximumf %12, %13 : vector<512x128xf32>
    %c0_10 = arith.constant 0 : index
    %c0_11 = arith.constant 0 : index
    %15 = vector.load %arg6[%c0_10, %c0_11] : memref<128x128xf32, #tpu.memory_space<vmem>>, vector<128x128xf32>
    %cst_12 = arith.constant dense<0.000000e+00> : vector<512x128xf32>
    %16 = tpu.matmul %14, %15, %cst_12 {dimension_numbers = #tpu.dot_dimension_numbers<[1], [0], [0], [1], [0, 0, 1, 1], [], []>} : vector<512x128xf32>, vector<128x128xf32>, vector<512x128xf32> -> vector<512x128xf32>
    %c0_13 = arith.constant 0 : index
    %c0_14 = arith.constant 0 : index
    %17 = vector.load %arg7[%c0_13, %c0_14] : memref<1x128xf32, #tpu.memory_space<vmem>>, vector<1x128xf32>
    %18 = vector.broadcast %17 : vector<1x128xf32> to vector<512x128xf32>
    %19 = arith.addf %16, %18 : vector<512x128xf32>
    %20 = vector.extract_strided_slice %19 {offsets = [0, 0], sizes = [256, 128], strides = [1, 1]} : vector<512x128xf32> to vector<256x128xf32>
    %21 = vector.extract_strided_slice %19 {offsets = [256, 0], sizes = [256, 128], strides = [1, 1]} : vector<512x128xf32> to vector<256x128xf32>
    %22 = arith.addf %20, %3 : vector<256x128xf32>
    %c0_15 = arith.constant 0 : index
    %c0_16 = arith.constant 0 : index
    %23 = vector.load %arg14[%c0_15, %c0_16] : memref<256x128xf32, #tpu.memory_space<vmem>>, vector<256x128xf32>
    tpu.vector_store %arg14[%c0_15, %c0_16], %22 {strides = array<i32>} : memref<256x128xf32, #tpu.memory_space<vmem>>, vector<256x128xf32>,
    %cst_17 = arith.constant 2.000000e+00 : f32
    %24 = vector.broadcast %cst_17 : f32 to vector<256x128xf32>
    %25 = arith.mulf %24, %21 : vector<256x128xf32>
    %c0_18 = arith.constant 0 : index
    %c0_19 = arith.constant 0 : index
    %26 = vector.load %arg15[%c0_18, %c0_19] : memref<256x128xf32, #tpu.memory_space<vmem>>, vector<256x128xf32>
    tpu.vector_store %arg15[%c0_18, %c0_19], %25 {strides = array<i32>} : memref<256x128xf32, #tpu.memory_space<vmem>>, vector<256x128xf32>,
    %c0_20 = arith.constant 0 : index
    %c0_21 = arith.constant 0 : index
    %27 = vector.load %arg8[%c0_20, %c0_21] : memref<128x256xf32, #tpu.memory_space<vmem>>, vector<128x256xf32>
    %cst_22 = arith.constant dense<0.000000e+00> : vector<512x256xf32>
    %28 = tpu.matmul %19, %27, %cst_22 {dimension_numbers = #tpu.dot_dimension_numbers<[1], [0], [0], [1], [0, 0, 1, 1], [], []>} : vector<512x128xf32>, vector<128x256xf32>, vector<512x256xf32> -> vector<512x256xf32>
    %c0_23 = arith.constant 0 : index
    %c0_24 = arith.constant 0 : index
    %29 = vector.load %arg9[%c0_23, %c0_24] : memref<1x256xf32, #tpu.memory_space<vmem>>, vector<1x256xf32>
    %30 = vector.broadcast %29 : vector<1x256xf32> to vector<512x256xf32>
    %31 = arith.addf %28, %30 : vector<512x256xf32>
    %cst_25 = arith.constant 0.000000e+00 : f32
    %32 = vector.broadcast %cst_25 : f32 to vector<512x256xf32>
    %33 = arith.maximumf %31, %32 : vector<512x256xf32>
    %c0_26 = arith.constant 0 : index
    %c0_27 = arith.constant 0 : index
    %34 = vector.load %arg10[%c0_26, %c0_27] : memref<256x128xf32, #tpu.memory_space<vmem>>, vector<256x128xf32>
    %cst_28 = arith.constant dense<0.000000e+00> : vector<512x128xf32>
    %35 = tpu.matmul %33, %34, %cst_28 {dimension_numbers = #tpu.dot_dimension_numbers<[1], [0], [0], [1], [0, 0, 1, 1], [], []>} : vector<512x256xf32>, vector<256x128xf32>, vector<512x128xf32> -> vector<512x128xf32>
    %c0_29 = arith.constant 0 : index
    %c0_30 = arith.constant 0 : index
    %36 = vector.load %arg11[%c0_29, %c0_30] : memref<1x128xf32, #tpu.memory_space<vmem>>, vector<1x128xf32>
    %37 = vector.broadcast %36 : vector<1x128xf32> to vector<512x128xf32>
    %38 = arith.addf %35, %37 : vector<512x128xf32>
    %cst_31 = arith.constant 0.000000e+00 : f32
    %39 = vector.broadcast %cst_31 : f32 to vector<512x128xf32>
    %40 = arith.maximumf %38, %39 : vector<512x128xf32>
    %c0_32 = arith.constant 0 : index
    %c0_33 = arith.constant 0 : index
    %41 = vector.load %arg12[%c0_32, %c0_33] : memref<128x32xf32, #tpu.memory_space<vmem>>, vector<128x32xf32>
    %cst_34 = arith.constant dense<0.000000e+00> : vector<512x32xf32>
    %42 = tpu.matmul %40, %41, %cst_34 {dimension_numbers = #tpu.dot_dimension_numbers<[1], [0], [0], [1], [0, 0, 1, 1], [], []>} : vector<512x128xf32>, vector<128x32xf32>, vector<512x32xf32> -> vector<512x32xf32>
    %c0_35 = arith.constant 0 : index
    %c0_36 = arith.constant 0 : index
    %43 = vector.load %arg13[%c0_35, %c0_36] : memref<1x32xf32, #tpu.memory_space<vmem>>, vector<1x32xf32>
    %44 = vector.broadcast %43 : vector<1x32xf32> to vector<512x32xf32>
    %45 = arith.addf %42, %44 : vector<512x32xf32>
    %46 = vector.extract_strided_slice %45 {offsets = [0, 0], sizes = [256, 32], strides = [1, 1]} : vector<512x32xf32> to vector<256x32xf32>
    %47 = vector.extract_strided_slice %45 {offsets = [256, 0], sizes = [256, 32], strides = [1, 1]} : vector<512x32xf32> to vector<256x32xf32>
    %48 = tpu.concatenate %46, %47 in 1 : vector<256x32xf32>, vector<256x32xf32> -> vector<256x64xf32>
    %c0_37 = arith.constant 0 : index
    %c0_38 = arith.constant 0 : index
    %49 = vector.load %arg16[%c0_37, %c0_38] : memref<256x64xf32, #tpu.memory_space<vmem>>, vector<256x64xf32>
    tpu.vector_store %arg16[%c0_37, %c0_38], %48 {strides = array<i32>} : memref<256x64xf32, #tpu.memory_space<vmem>>, vector<256x64xf32>,
    return
  }
  func.func @transform_0(%arg0: i32) -> (i32, i32) {
    %c0_i32 = arith.constant 0 : i32
    %c0_i32_0 = arith.constant 0 : i32
    return %arg0, %c0_i32 : i32, i32
  }
  func.func @transform_1(%arg0: i32) -> (i32, i32) {
    %c0_i32 = arith.constant 0 : i32
    %c0_i32_0 = arith.constant 0 : i32
    %c0_i32_1 = arith.constant 0 : i32
    return %c0_i32, %c0_i32_0 : i32, i32
  }
  func.func @transform_2(%arg0: i32) -> (i32, i32) {
    %c0_i32 = arith.constant 0 : i32
    %c0_i32_0 = arith.constant 0 : i32
    %c0_i32_1 = arith.constant 0 : i32
    return %c0_i32, %c0_i32_0 : i32, i32
  }
  func.func @transform_3(%arg0: i32) -> (i32, i32) {
    %c0_i32 = arith.constant 0 : i32
    %c0_i32_0 = arith.constant 0 : i32
    %c0_i32_1 = arith.constant 0 : i32
    return %c0_i32, %c0_i32_0 : i32, i32
  }
  func.func @transform_4(%arg0: i32) -> (i32, i32) {
    %c0_i32 = arith.constant 0 : i32
    %c0_i32_0 = arith.constant 0 : i32
    %c0_i32_1 = arith.constant 0 : i32
    return %c0_i32, %c0_i32_0 : i32, i32
  }
  func.func @transform_5(%arg0: i32) -> (i32, i32) {
    %c0_i32 = arith.constant 0 : i32
    %c0_i32_0 = arith.constant 0 : i32
    %c0_i32_1 = arith.constant 0 : i32
    return %c0_i32, %c0_i32_0 : i32, i32
  }
  func.func @transform_6(%arg0: i32) -> (i32, i32) {
    %c0_i32 = arith.constant 0 : i32
    %c0_i32_0 = arith.constant 0 : i32
    %c0_i32_1 = arith.constant 0 : i32
    return %c0_i32, %c0_i32_0 : i32, i32
  }
  func.func @transform_7(%arg0: i32) -> (i32, i32) {
    %c0_i32 = arith.constant 0 : i32
    %c0_i32_0 = arith.constant 0 : i32
    %c0_i32_1 = arith.constant 0 : i32
    return %c0_i32, %c0_i32_0 : i32, i32
  }
  func.func @transform_8(%arg0: i32) -> (i32, i32) {
    %c0_i32 = arith.constant 0 : i32
    %c0_i32_0 = arith.constant 0 : i32
    %c0_i32_1 = arith.constant 0 : i32
    return %c0_i32, %c0_i32_0 : i32, i32
  }
  func.func @transform_9(%arg0: i32) -> (i32, i32) {
    %c0_i32 = arith.constant 0 : i32
    %c0_i32_0 = arith.constant 0 : i32
    %c0_i32_1 = arith.constant 0 : i32
    return %c0_i32, %c0_i32_0 : i32, i32
  }
  func.func @transform_10(%arg0: i32) -> (i32, i32) {
    %c0_i32 = arith.constant 0 : i32
    %c0_i32_0 = arith.constant 0 : i32
    %c0_i32_1 = arith.constant 0 : i32
    return %c0_i32, %c0_i32_0 : i32, i32
  }
  func.func @transform_11(%arg0: i32) -> (i32, i32) {
    %c0_i32 = arith.constant 0 : i32
    %c0_i32_0 = arith.constant 0 : i32
    %c0_i32_1 = arith.constant 0 : i32
    return %c0_i32, %c0_i32_0 : i32, i32
  }
  func.func @transform_12(%arg0: i32) -> (i32, i32) {
    %c0_i32 = arith.constant 0 : i32
    %c0_i32_0 = arith.constant 0 : i32
    %c0_i32_1 = arith.constant 0 : i32
    return %c0_i32, %c0_i32_0 : i32, i32
  }
  func.func @transform_13(%arg0: i32) -> (i32, i32) {
    %c0_i32 = arith.constant 0 : i32
    %c0_i32_0 = arith.constant 0 : i32
    return %arg0, %c0_i32 : i32, i32
  }
  func.func @transform_14(%arg0: i32) -> (i32, i32) {
    %c0_i32 = arith.constant 0 : i32
    %c0_i32_0 = arith.constant 0 : i32
    return %arg0, %c0_i32 : i32, i32
  }
  func.func @transform_15(%arg0: i32) -> (i32, i32) {
    %c0_i32 = arith.constant 0 : i32
    %c0_i32_0 = arith.constant 0 : i32
    return %arg0, %c0_i32 : i32, i32
  }
}

</mosaic_0001>

<llo_original>
// kernel: tpu_custom_call.1
$region0: #{tpu_custom_call.1}
  #allocation0 [shape = 'u32[]', space=smem, size = 0x4, offset = 0x4, fixed_abs, tag = 'smem constant byte address 0x4 - core index']
  #allocation1 [shape = 'u32[144,128]{1,0:T(1,128)}', space=vmem, size = 0x12000, scoped, tag = 'internal scratch']
  %s0 = inlined_call_operand.hbm [shape: f32[512,128], index: 0, kind: input, shape index: {}]
  %s1 = inlined_call_operand.vmem [shape: f32[1,128], index: 1, kind: input, shape index: {}]
  %s2 = inlined_call_operand.vmem [shape: f32[1,128], index: 2, kind: input, shape index: {}]
  %s3 = inlined_call_operand.vmem [shape: f32[128,128], index: 3, kind: input, shape index: {}]
  %s4 = inlined_call_operand.vmem [shape: f32[1,128], index: 4, kind: input, shape index: {}]
  %s5 = inlined_call_operand.hbm [shape: f32[128,128], index: 5, kind: input, shape index: {}]
  %s6 = inlined_call_operand.vmem [shape: f32[1,128], index: 6, kind: input, shape index: {}]
  %s7 = inlined_call_operand.hbm [shape: f32[128,256], index: 7, kind: input, shape index: {}]
  %s8 = inlined_call_operand.vmem [shape: f32[1,256], index: 8, kind: input, shape index: {}]
  %s9 = inlined_call_operand.hbm [shape: f32[256,128], index: 9, kind: input, shape index: {}]
  %s10 = inlined_call_operand.vmem [shape: f32[1,128], index: 10, kind: input, shape index: {}]
  %s11 = inlined_call_operand.vmem [shape: f32[128,32], index: 11, kind: input, shape index: {}]
  %s12 = inlined_call_operand.vmem [shape: f32[1,32], index: 12, kind: input, shape index: {}]
  %s13 = inlined_call_operand.hbm [shape: f32[512,128], index: 13, kind: output, shape index: {0}]
  %s14 = inlined_call_operand.hbm [shape: f32[512,128], index: 14, kind: output, shape index: {1}]
  %s15 = inlined_call_operand.vmem [shape: f32[512,64], index: 15, kind: output, shape index: {2}]
  %16 = xla_tuple %s13, %s14, %s15
  %s17 = sld [smem:[#allocation0]]
  $region117: #{tpu_custom_call.1} parent=0
    _
  %s19 = ssub.s32 1, %s17
  %s20 = scalar_select 0, %s19, %s17
  $region1: #{tpu_custom_call.1} parent=0
    #allocation2 [shape = 'u8[262144]{0}', space=vmem, size = 0x40000, scoped, tag = 'input window, operand 0']
    #allocation3 [shape = 's32[2]{0}', space=sflag, size = 0x8, scoped, tag = 'scoped memory for tpu_custom_call.1']
    #allocation4 [shape = 's32[2]{0}', space=sflag, size = 0x8, scoped, tag = 'scoped memory for tpu_custom_call.1']
    #allocation5 [shape = 'u8[65536]{0}', space=vmem, size = 0x10000, scoped, tag = 'input window, operand 5, single buffered']
    #allocation6 [shape = 's32[1]{0}', space=sflag, size = 0x4, scoped, tag = 'scoped memory for tpu_custom_call.1']
    #allocation7 [shape = 'u8[131072]{0}', space=vmem, size = 0x20000, scoped, tag = 'input window, operand 7, single buffered']
    #allocation8 [shape = 'u8[131072]{0}', space=vmem, size = 0x20000, scoped, tag = 'input window, operand 9, single buffered']
    #allocation9 [shape = 's32[1]{0}', space=sflag, size = 0x4, scoped, tag = 'scoped memory for tpu_custom_call.1']
    #allocation10 [shape = 'u8[262144]{0}', space=vmem, size = 0x40000, scoped, tag = 'output window, operand 0']
    #allocation11 [shape = 'u8[262144]{0}', space=vmem, size = 0x40000, scoped, tag = 'output window, operand 1']
    #allocation12 [shape = 's32[2]{0}', space=sflag, size = 0x8, scoped, tag = 'scoped memory for tpu_custom_call.1']
    %21 = vsyncpa [#allocation3], 0
    %s22 = scalar_lea.sflag [#allocation3], 1
    %23 = vsyncpa %s22, 0
    %24 = vsyncpa [#allocation6], 0
    %25 = vsyncpa [#allocation9], 0
    %26 = vsyncpa [#allocation4], 0
    %s27 = scalar_lea.sflag [#allocation4], 1
    %28 = vsyncpa %s27, 0
    %29 = vsyncpa [#allocation12], 0
    %s30 = scalar_lea.sflag [#allocation12], 1
    %31 = vsyncpa %s30, 0
    loop: start=0, step=1, limit=4
    $region2: #{tpu_custom_call.1} parent=1 // loop_pre_header
      _
    $region3: #{tpu_custom_call.1} parent=1 // loop_header
      %s33 = sphi 0, %s37
      %p34 = scmp.ge.s32.totalorder %s33, 4
      %s43 = sphi 0, %s45
      %s46 = sphi 0, %s43
      %s47 = sphi 0, %s46
      %s63 = sphi 0, %s47
      %s67 = sphi 0, %s67
      %s69 = sphi 0, %s67
      %s70 = sphi 0, %s69
      %s84 = sphi 0, %s70
      %s88 = sphi 0, %s88
      %s90 = sphi 0, %s88
      %s91 = sphi 0, %s90
      %s105 = sphi 0, %s91
      %s109 = sphi 0, %s109
      %s111 = sphi 0, %s109
      %s112 = sphi 0, %s111
      %s126 = sphi 0, %s112
      %s130 = sphi 0, %s130
      %s132 = sphi 0, %s130
      %s133 = sphi 0, %s132
      %s147 = sphi 0, %s133
      %s151 = sphi 0, %s151
      %s153 = sphi 0, %s151
      %s154 = sphi 0, %s153
      %s168 = sphi 0, %s154
      %s172 = sphi 0, %s172
      %s174 = sphi 0, %s172
      %s175 = sphi 0, %s174
      %s189 = sphi 0, %s175
      %s193 = sphi 0, %s193
      %s195 = sphi 0, %s193
      %s196 = sphi 0, %s195
      %s210 = sphi 0, %s196
      %s214 = sphi 0, %s214
      %s216 = sphi 0, %s214
      %s217 = sphi 0, %s216
      %s231 = sphi 0, %s217
      %s235 = sphi 0, %s235
      %s237 = sphi 0, %s235
      %s238 = sphi 0, %s237
      %s252 = sphi 0, %s238
      %s256 = sphi 0, %s256
      %s258 = sphi 0, %s256
      %s259 = sphi 0, %s258
      %s273 = sphi 0, %s259
      %s277 = sphi 0, %s277
      %s279 = sphi 0, %s277
      %s280 = sphi 0, %s279
      %s294 = sphi 0, %s280
      %s298 = sphi 0, %s298
      %s300 = sphi 0, %s298
      %s301 = sphi 0, %s300
      %s315 = sphi 0, %s301
      %s321 = sphi 0, %s323
      %s324 = sphi 0, %s321
      %s325 = sphi 0, %s324
      %s341 = sphi 0, %s325
      %s347 = sphi 0, %s349
      %s350 = sphi 0, %s347
      %s351 = sphi 0, %s350
      %s367 = sphi 0, %s351
      %s373 = sphi 0, %s375
      %s376 = sphi 0, %s373
      %s377 = sphi 0, %s376
      %s393 = sphi 0, %s377
    $region4: #{tpu_custom_call.1} parent=1 // loop_header_branch
      %36 = sbr.rel (%p34) target = $region8
    $region5: #{tpu_custom_call.1} parent=1 // loop_body
      %s38 = ssub.s32 %s33, 1
      %s39 = ssub.s32 %s33, 2
      %s40 = sadd.s32 %s33, 1
      %s41 = ssub.s32 %s33, %s40
      %p42 = scmp.eq.s32.totalorder %s41, 0
      %s44 = sadd.s32 %s43, 1
      %s45 = scalar_select %p42, %s43, %s44
      %p48 = pneg %p42
      %p49 = scmp.eq.s32.totalorder %s33, 1
      %p50 = por %p48, %p49
      %p51 = scmp.ne.s32.totalorder %s43, %s46
      %p52 = scmp.eq.s32.totalorder %s33, 0
      %p53 = por %p51, %p52
      %p54 = scmp.ne.s32.totalorder %s43, %s46
      %p55 = scmp.eq.s32.totalorder %s38, 1
      %p56 = por %p54, %p55
      %p57 = scmp.ne.s32.totalorder %s46, %s47
      %p58 = scmp.eq.s32.totalorder %s38, 0
      %p59 = por %p57, %p58
      %p60 = scmp.ne.s32.totalorder %s46, %s47
      %p61 = scmp.eq.s32.totalorder %s39, 1
      %p62 = por %p60, %p61
      %p64 = scmp.ne.s32.totalorder %s47, %s63
      %p65 = scmp.eq.s32.totalorder %s39, 0
      %p66 = por %p64, %p65
      %s68 = sadd.s32 %s67, 1
      %p71 = scmp.eq.s32.totalorder %s33, 1
      %p72 = scmp.ne.s32.totalorder %s67, %s69
      %p73 = scmp.eq.s32.totalorder %s33, 0
      %p74 = por %p72, %p73
      %p75 = scmp.ne.s32.totalorder %s67, %s69
      %p76 = scmp.eq.s32.totalorder %s38, 1
      %p77 = por %p75, %p76
      %p78 = scmp.ne.s32.totalorder %s69, %s70
      %p79 = scmp.eq.s32.totalorder %s38, 0
      %p80 = por %p78, %p79
      %p81 = scmp.ne.s32.totalorder %s69, %s70
      %p82 = scmp.eq.s32.totalorder %s39, 1
      %p83 = por %p81, %p82
      %p85 = scmp.ne.s32.totalorder %s70, %s84
      %p86 = scmp.eq.s32.totalorder %s39, 0
      %p87 = por %p85, %p86
      %s89 = sadd.s32 %s88, 1
      %p92 = scmp.eq.s32.totalorder %s33, 1
      %p93 = scmp.ne.s32.totalorder %s88, %s90
      %p94 = scmp.eq.s32.totalorder %s33, 0
      %p95 = por %p93, %p94
      %p96 = scmp.ne.s32.totalorder %s88, %s90
      %p97 = scmp.eq.s32.totalorder %s38, 1
      %p98 = por %p96, %p97
      %p99 = scmp.ne.s32.totalorder %s90, %s91
      %p100 = scmp.eq.s32.totalorder %s38, 0
      %p101 = por %p99, %p100
      %p102 = scmp.ne.s32.totalorder %s90, %s91
      %p103 = scmp.eq.s32.totalorder %s39, 1
      %p104 = por %p102, %p103
      %p106 = scmp.ne.s32.totalorder %s91, %s105
      %p107 = scmp.eq.s32.totalorder %s39, 0
      %p108 = por %p106, %p107
      %s110 = sadd.s32 %s109, 1
      %p113 = scmp.eq.s32.totalorder %s33, 1
      %p114 = scmp.ne.s32.totalorder %s109, %s111
      %p115 = scmp.eq.s32.totalorder %s33, 0
      %p116 = por %p114, %p115
      %p117 = scmp.ne.s32.totalorder %s109, %s111
      %p118 = scmp.eq.s32.totalorder %s38, 1
      %p119 = por %p117, %p118
      %p120 = scmp.ne.s32.totalorder %s111, %s112
      %p121 = scmp.eq.s32.totalorder %s38, 0
      %p122 = por %p120, %p121
      %p123 = scmp.ne.s32.totalorder %s111, %s112
      %p124 = scmp.eq.s32.totalorder %s39, 1
      %p125 = por %p123, %p124
      %p127 = scmp.ne.s32.totalorder %s112, %s126
      %p128 = scmp.eq.s32.totalorder %s39, 0
      %p129 = por %p127, %p128
      %s131 = sadd.s32 %s130, 1
      %p134 = scmp.eq.s32.totalorder %s33, 1
      %p135 = scmp.ne.s32.totalorder %s130, %s132
      %p136 = scmp.eq.s32.totalorder %s33, 0
      %p137 = por %p135, %p136
      %p138 = scmp.ne.s32.totalorder %s130, %s132
      %p139 = scmp.eq.s32.totalorder %s38, 1
      %p140 = por %p138, %p139
      %p141 = scmp.ne.s32.totalorder %s132, %s133
      %p142 = scmp.eq.s32.totalorder %s38, 0
      %p143 = por %p141, %p142
      %p144 = scmp.ne.s32.totalorder %s132, %s133
      %p145 = scmp.eq.s32.totalorder %s39, 1
      %p146 = por %p144, %p145
      %p148 = scmp.ne.s32.totalorder %s133, %s147
      %p149 = scmp.eq.s32.totalorder %s39, 0
      %p150 = por %p148, %p149
      %s152 = sadd.s32 %s151, 1
      %p155 = scmp.eq.s32.totalorder %s33, 1
      %p156 = scmp.ne.s32.totalorder %s151, %s153
      %p157 = scmp.eq.s32.totalorder %s33, 0
      %p158 = por %p156, %p157
      %p159 = scmp.ne.s32.totalorder %s151, %s153
      %p160 = scmp.eq.s32.totalorder %s38, 1
      %p161 = por %p159, %p160
      %p162 = scmp.ne.s32.totalorder %s153, %s154
      %p163 = scmp.eq.s32.totalorder %s38, 0
      %p164 = por %p162, %p163
      %p165 = scmp.ne.s32.totalorder %s153, %s154
      %p166 = scmp.eq.s32.totalorder %s39, 1
      %p167 = por %p165, %p166
      %p169 = scmp.ne.s32.totalorder %s154, %s168
      %p170 = scmp.eq.s32.totalorder %s39, 0
      %p171 = por %p169, %p170
      %s173 = sadd.s32 %s172, 1
      %p176 = scmp.eq.s32.totalorder %s33, 1
      %p177 = scmp.ne.s32.totalorder %s172, %s174
      %p178 = scmp.eq.s32.totalorder %s33, 0
      %p179 = por %p177, %p178
      %p180 = scmp.ne.s32.totalorder %s172, %s174
      %p181 = scmp.eq.s32.totalorder %s38, 1
      %p182 = por %p180, %p181
      %p183 = scmp.ne.s32.totalorder %s174, %s175
      %p184 = scmp.eq.s32.totalorder %s38, 0
      %p185 = por %p183, %p184
      %p186 = scmp.ne.s32.totalorder %s174, %s175
      %p187 = scmp.eq.s32.totalorder %s39, 1
      %p188 = por %p186, %p187
      %p190 = scmp.ne.s32.totalorder %s175, %s189
      %p191 = scmp.eq.s32.totalorder %s39, 0
      %p192 = por %p190, %p191
      %s194 = sadd.s32 %s193, 1
      %p197 = scmp.eq.s32.totalorder %s33, 1
      %p198 = scmp.ne.s32.totalorder %s193, %s195
      %p199 = scmp.eq.s32.totalorder %s33, 0
      %p200 = por %p198, %p199
      %p201 = scmp.ne.s32.totalorder %s193, %s195
      %p202 = scmp.eq.s32.totalorder %s38, 1
      %p203 = por %p201, %p202
      %p204 = scmp.ne.s32.totalorder %s195, %s196
      %p205 = scmp.eq.s32.totalorder %s38, 0
      %p206 = por %p204, %p205
      %p207 = scmp.ne.s32.totalorder %s195, %s196
      %p208 = scmp.eq.s32.totalorder %s39, 1
      %p209 = por %p207, %p208
      %p211 = scmp.ne.s32.totalorder %s196, %s210
      %p212 = scmp.eq.s32.totalorder %s39, 0
      %p213 = por %p211, %p212
      %s215 = sadd.s32 %s214, 1
      %p218 = scmp.eq.s32.totalorder %s33, 1
      %p219 = scmp.ne.s32.totalorder %s214, %s216
      %p220 = scmp.eq.s32.totalorder %s33, 0
      %p221 = por %p219, %p220
      %p222 = scmp.ne.s32.totalorder %s214, %s216
      %p223 = scmp.eq.s32.totalorder %s38, 1
      %p224 = por %p222, %p223
      %p225 = scmp.ne.s32.totalorder %s216, %s217
      %p226 = scmp.eq.s32.totalorder %s38, 0
      %p227 = por %p225, %p226
      %p228 = scmp.ne.s32.totalorder %s216, %s217
      %p229 = scmp.eq.s32.totalorder %s39, 1
      %p230 = por %p228, %p229
      %p232 = scmp.ne.s32.totalorder %s217, %s231
      %p233 = scmp.eq.s32.totalorder %s39, 0
      %p234 = por %p232, %p233
      %s236 = sadd.s32 %s235, 1
      %p239 = scmp.eq.s32.totalorder %s33, 1
      %p240 = scmp.ne.s32.totalorder %s235, %s237
      %p241 = scmp.eq.s32.totalorder %s33, 0
      %p242 = por %p240, %p241
      %p243 = scmp.ne.s32.totalorder %s235, %s237
      %p244 = scmp.eq.s32.totalorder %s38, 1
      %p245 = por %p243, %p244
      %p246 = scmp.ne.s32.totalorder %s237, %s238
      %p247 = scmp.eq.s32.totalorder %s38, 0
      %p248 = por %p246, %p247
      %p249 = scmp.ne.s32.totalorder %s237, %s238
      %p250 = scmp.eq.s32.totalorder %s39, 1
      %p251 = por %p249, %p250
      %p253 = scmp.ne.s32.totalorder %s238, %s252
      %p254 = scmp.eq.s32.totalorder %s39, 0
      %p255 = por %p253, %p254
      %s257 = sadd.s32 %s256, 1
      %p260 = scmp.eq.s32.totalorder %s33, 1
      %p261 = scmp.ne.s32.totalorder %s256, %s258
      %p262 = scmp.eq.s32.totalorder %s33, 0
      %p263 = por %p261, %p262
      %p264 = scmp.ne.s32.totalorder %s256, %s258
      %p265 = scmp.eq.s32.totalorder %s38, 1
      %p266 = por %p264, %p265
      %p267 = scmp.ne.s32.totalorder %s258, %s259
      %p268 = scmp.eq.s32.totalorder %s38, 0
      %p269 = por %p267, %p268
      %p270 = scmp.ne.s32.totalorder %s258, %s259
      %p271 = scmp.eq.s32.totalorder %s39, 1
      %p272 = por %p270, %p271
      %p274 = scmp.ne.s32.totalorder %s259, %s273
      %p275 = scmp.eq.s32.totalorder %s39, 0
      %p276 = por %p274, %p275
      %s278 = sadd.s32 %s277, 1
      %p281 = scmp.eq.s32.totalorder %s33, 1
      %p282 = scmp.ne.s32.totalorder %s277, %s279
      %p283 = scmp.eq.s32.totalorder %s33, 0
      %p284 = por %p282, %p283
      %p285 = scmp.ne.s32.totalorder %s277, %s279
      %p286 = scmp.eq.s32.totalorder %s38, 1
      %p287 = por %p285, %p286
      %p288 = scmp.ne.s32.totalorder %s279, %s280
      %p289 = scmp.eq.s32.totalorder %s38, 0
      %p290 = por %p288, %p289
      %p291 = scmp.ne.s32.totalorder %s279, %s280
      %p292 = scmp.eq.s32.totalorder %s39, 1
      %p293 = por %p291, %p292
      %p295 = scmp.ne.s32.totalorder %s280, %s294
      %p296 = scmp.eq.s32.totalorder %s39, 0
      %p297 = por %p295, %p296
      %s299 = sadd.s32 %s298, 1
      %p302 = scmp.eq.s32.totalorder %s33, 1
      %p303 = scmp.ne.s32.totalorder %s298, %s300
      %p304 = scmp.eq.s32.totalorder %s33, 0
      %p305 = por %p303, %p304
      %p306 = scmp.ne.s32.totalorder %s298, %s300
      %p307 = scmp.eq.s32.totalorder %s38, 1
      %p308 = por %p306, %p307
      %p309 = scmp.ne.s32.totalorder %s300, %s301
      %p310 = scmp.eq.s32.totalorder %s38, 0
      %p311 = por %p309, %p310
      %p312 = scmp.ne.s32.totalorder %s300, %s301
      %p313 = scmp.eq.s32.totalorder %s39, 1
      %p314 = por %p312, %p313
      %p316 = scmp.ne.s32.totalorder %s301, %s315
      %p317 = scmp.eq.s32.totalorder %s39, 0
      %p318 = por %p316, %p317
      %s319 = ssub.s32 %s33, %s40
      %p320 = scmp.eq.s32.totalorder %s319, 0
      %s322 = sadd.s32 %s321, 1
      %s323 = scalar_select %p320, %s321, %s322
      %p326 = pneg %p320
      %p327 = scmp.eq.s32.totalorder %s33, 1
      %p328 = por %p326, %p327
      %p329 = scmp.ne.s32.totalorder %s321, %s324
      %p330 = scmp.eq.s32.totalorder %s33, 0
      %p331 = por %p329, %p330
      %p332 = scmp.ne.s32.totalorder %s321, %s324
      %p333 = scmp.eq.s32.totalorder %s38, 1
      %p334 = por %p332, %p333
      %p335 = scmp.ne.s32.totalorder %s324, %s325
      %p336 = scmp.eq.s32.totalorder %s38, 0
      %p337 = por %p335, %p336
      %p338 = scmp.ne.s32.totalorder %s324, %s325
      %p339 = scmp.eq.s32.totalorder %s39, 1
      %p340 = por %p338, %p339
      %p342 = scmp.ne.s32.totalorder %s325, %s341
      %p343 = scmp.eq.s32.totalorder %s39, 0
      %p344 = por %p342, %p343
      %s345 = ssub.s32 %s33, %s40
      %p346 = scmp.eq.s32.totalorder %s345, 0
      %s348 = sadd.s32 %s347, 1
      %s349 = scalar_select %p346, %s347, %s348
      %p352 = pneg %p346
      %p353 = scmp.eq.s32.totalorder %s33, 1
      %p354 = por %p352, %p353
      %p355 = scmp.ne.s32.totalorder %s347, %s350
      %p356 = scmp.eq.s32.totalorder %s33, 0
      %p357 = por %p355, %p356
      %p358 = scmp.ne.s32.totalorder %s347, %s350
      %p359 = scmp.eq.s32.totalorder %s38, 1
      %p360 = por %p358, %p359
      %p361 = scmp.ne.s32.totalorder %s350, %s351
      %p362 = scmp.eq.s32.totalorder %s38, 0
      %p363 = por %p361, %p362
      %p364 = scmp.ne.s32.totalorder %s350, %s351
      %p365 = scmp.eq.s32.totalorder %s39, 1
      %p366 = por %p364, %p365
      %p368 = scmp.ne.s32.totalorder %s351, %s367
      %p369 = scmp.eq.s32.totalorder %s39, 0
      %p370 = por %p368, %p369
      %s371 = ssub.s32 %s33, %s40
      %p372 = scmp.eq.s32.totalorder %s371, 0
      %s374 = sadd.s32 %s373, 1
      %s375 = scalar_select %p372, %s373, %s374
      %p378 = pneg %p372
      %p379 = scmp.eq.s32.totalorder %s33, 1
      %p380 = por %p378, %p379
      %p381 = scmp.ne.s32.totalorder %s373, %s376
      %p382 = scmp.eq.s32.totalorder %s33, 0
      %p383 = por %p381, %p382
      %p384 = scmp.ne.s32.totalorder %s373, %s376
      %p385 = scmp.eq.s32.totalorder %s38, 1
      %p386 = por %p384, %p385
      %p387 = scmp.ne.s32.totalorder %s376, %s377
      %p388 = scmp.eq.s32.totalorder %s38, 0
      %p389 = por %p387, %p388
      %p390 = scmp.ne.s32.totalorder %s376, %s377
      %p391 = scmp.eq.s32.totalorder %s39, 1
      %p392 = por %p390, %p391
      %p394 = scmp.ne.s32.totalorder %s377, %s393
      %p395 = scmp.eq.s32.totalorder %s39, 0
      %p396 = por %p394, %p395
      %p397 = scmp.le.s32.totalorder 1, %s33
      %p398 = scmp.lt.s32.totalorder %s33, 3
      %p399 = pnand %p397, %p398
      %p400 = pneg %p399
      // Predicated region
      $region9: #{tpu_custom_call.1} parent=5 // pred_check
        _
      $region10: #{tpu_custom_call.1} parent=5 // pred_check_branch
        %402 = sbr.rel (%p399) target = $region12
      $region11: #{tpu_custom_call.1} parent=5 // pred_region
        %s403 = ssub.s32 %s33, 1
        // Predicated region
        $region13: #{tpu_custom_call.1} parent=11 // pred_check
          %p404 = pneg %p80
        $region14: #{tpu_custom_call.1} parent=11 // pred_check_branch
          %406 = sbr.rel (%p404) target = $region16
        $region15: #{tpu_custom_call.1} parent=11 // pred_region
          _
        $region16: #{tpu_custom_call.1} parent=11 // pred_fallthru
          _
        // Predicated region
        $region17: #{tpu_custom_call.1} parent=11 // pred_check
          %p407 = pneg %p101
        $region18: #{tpu_custom_call.1} parent=11 // pred_check_branch
          %409 = sbr.rel (%p407) target = $region20
        $region19: #{tpu_custom_call.1} parent=11 // pred_region
          _
        $region20: #{tpu_custom_call.1} parent=11 // pred_fallthru
          _
        // Predicated region
        $region21: #{tpu_custom_call.1} parent=11 // pred_check
          %p410 = pneg %p122
        $region22: #{tpu_custom_call.1} parent=11 // pred_check_branch
          %412 = sbr.rel (%p410) target = $region24
        $region23: #{tpu_custom_call.1} parent=11 // pred_region
          _
        $region24: #{tpu_custom_call.1} parent=11 // pred_fallthru
          _
        // Predicated region
        $region25: #{tpu_custom_call.1} parent=11 // pred_check
          %p413 = pneg %p143
        $region26: #{tpu_custom_call.1} parent=11 // pred_check_branch
          %415 = sbr.rel (%p413) target = $region28
        $region27: #{tpu_custom_call.1} parent=11 // pred_region
          _
        $region28: #{tpu_custom_call.1} parent=11 // pred_fallthru
          _
        // Predicated region
        $region29: #{tpu_custom_call.1} parent=11 // pred_check
          %p416 = pneg %p164
        $region30: #{tpu_custom_call.1} parent=11 // pred_check_branch
          %418 = sbr.rel (%p416) target = $region32
        $region31: #{tpu_custom_call.1} parent=11 // pred_region
          %s420 = ssub.s32 2048, 2048
          %421 = vsyncadd [#allocation6], %s420
          %s422 = sshll.u32 [#allocation5], 4
          %s423 = int_to_ptr.vmem [resolvable:$true] %s422
          %428 = dma.hbm_to_vmem [thread:$0]  %s5, 2048, %s423, [#allocation6], 128, 128, 8
        $region32: #{tpu_custom_call.1} parent=11 // pred_fallthru
          _
        // Predicated region
        $region33: #{tpu_custom_call.1} parent=11 // pred_check
          %p429 = pneg %p185
        $region34: #{tpu_custom_call.1} parent=11 // pred_check_branch
          %431 = sbr.rel (%p429) target = $region36
        $region35: #{tpu_custom_call.1} parent=11 // pred_region
          _
        $region36: #{tpu_custom_call.1} parent=11 // pred_fallthru
          _
        // Predicated region
        $region37: #{tpu_custom_call.1} parent=11 // pred_check
          %p432 = pneg %p206
        $region38: #{tpu_custom_call.1} parent=11 // pred_check_branch
          %434 = sbr.rel (%p432) target = $region40
        $region39: #{tpu_custom_call.1} parent=11 // pred_region
          %s436 = ssub.s32 4096, 4096
          %437 = vsyncadd [#allocation6], %s436
          %s438 = sshll.u32 [#allocation7], 4
          %s439 = int_to_ptr.vmem [resolvable:$true] %s438
          %444 = dma.hbm_to_vmem [thread:$0]  %s7, 4096, %s439, [#allocation6], 256, 256, 16
        $region40: #{tpu_custom_call.1} parent=11 // pred_fallthru
          _
        // Predicated region
        $region41: #{tpu_custom_call.1} parent=11 // pred_check
          %p445 = pneg %p227
        $region42: #{tpu_custom_call.1} parent=11 // pred_check_branch
          %447 = sbr.rel (%p445) target = $region44
        $region43: #{tpu_custom_call.1} parent=11 // pred_region
          _
        $region44: #{tpu_custom_call.1} parent=11 // pred_fallthru
          _
        // Predicated region
        $region45: #{tpu_custom_call.1} parent=11 // pred_check
          %p448 = pneg %p248
        $region46: #{tpu_custom_call.1} parent=11 // pred_check_branch
          %450 = sbr.rel (%p448) target = $region48
        $region47: #{tpu_custom_call.1} parent=11 // pred_region
          %s452 = ssub.s32 4096, 4096
          %453 = vsyncadd [#allocation9], %s452
          %s454 = sshll.u32 [#allocation8], 4
          %s455 = int_to_ptr.vmem [resolvable:$true] %s454
          %460 = dma.hbm_to_vmem [thread:$0]  %s9, 4096, %s455, [#allocation9], 128, 128, 8
        $region48: #{tpu_custom_call.1} parent=11 // pred_fallthru
          _
        // Predicated region
        $region49: #{tpu_custom_call.1} parent=11 // pred_check
          %p461 = pneg %p269
        $region50: #{tpu_custom_call.1} parent=11 // pred_check_branch
          %463 = sbr.rel (%p461) target = $region52
        $region51: #{tpu_custom_call.1} parent=11 // pred_region
          _
        $region52: #{tpu_custom_call.1} parent=11 // pred_fallthru
          _
        // Predicated region
        $region53: #{tpu_custom_call.1} parent=11 // pred_check
          %p464 = pneg %p290
        $region54: #{tpu_custom_call.1} parent=11 // pred_check_branch
          %466 = sbr.rel (%p464) target = $region56
        $region55: #{tpu_custom_call.1} parent=11 // pred_region
          _
        $region56: #{tpu_custom_call.1} parent=11 // pred_fallthru
          _
        // Predicated region
        $region57: #{tpu_custom_call.1} parent=11 // pred_check
          %p467 = pneg %p311
        $region58: #{tpu_custom_call.1} parent=11 // pred_check_branch
          %469 = sbr.rel (%p467) target = $region60
        $region59: #{tpu_custom_call.1} parent=11 // pred_region
          _
        $region60: #{tpu_custom_call.1} parent=11 // pred_fallthru
          _
      $region12: #{tpu_custom_call.1} parent=5 // pred_fallthru
        _
      %p470 = scmp.lt.s32.totalorder %s33, 2
      // Predicated region
      $region61: #{tpu_custom_call.1} parent=5 // pred_check
        %p471 = pneg %p470
      $region62: #{tpu_custom_call.1} parent=5 // pred_check_branch
        %473 = sbr.rel (%p471) target = $region64
      $region63: #{tpu_custom_call.1} parent=5 // pred_region
        // Predicated region
        $region65: #{tpu_custom_call.1} parent=63 // pred_check
          %p474 = pneg %p53
        $region66: #{tpu_custom_call.1} parent=63 // pred_check_branch
          %476 = sbr.rel (%p474) target = $region68
        $region67: #{tpu_custom_call.1} parent=63 // pred_region
          %s477 = sand.u32 %s43, 1
          %s478 = scalar_lea.sflag [#allocation3], %s477
          %s479 = sand.u32 %s43, 1
          %s480 = smul.addr %s479, 256
          %s481 = scalar_lea.vmem [#allocation2], %s480
          %s482 = smul.u32 32, %s33
          %s484 = ssub.s32 4096, 4096
          %485 = vsyncadd %s478, %s484
          %s486 = smul.addr %s482, 128
          %s487 = scalar_lea.hbm %s0, %s486
          %s488 = sshll.u32 %s481, 4
          %s489 = int_to_ptr.vmem [resolvable:$true] %s488
          %494 = dma.hbm_to_vmem [thread:$0]  %s487, 4096, %s489, %s478, 128, 128, 8
        $region68: #{tpu_custom_call.1} parent=63 // pred_fallthru
          _
      $region64: #{tpu_custom_call.1} parent=5 // pred_fallthru
        _
      %p495 = scmp.le.s32.totalorder 1, %s33
      %p496 = scmp.lt.s32.totalorder %s33, 3
      %p497 = pnand %p495, %p496
      %p498 = pneg %p497
      // Predicated region
      $region69: #{tpu_custom_call.1} parent=5 // pred_check
        _
      $region70: #{tpu_custom_call.1} parent=5 // pred_check_branch
        %500 = sbr.rel (%p497) target = $region72
      $region71: #{tpu_custom_call.1} parent=5 // pred_region
        %s501 = ssub.s32 %s33, 1
        %s502 = sand.u32 %s46, 1
        %s503 = scalar_lea.sflag [#allocation3], %s502
        %s504 = sand.u32 %s46, 1
        %s505 = smul.addr %s504, 256
        %s506 = scalar_lea.vmem [#allocation2], %s505
        // Predicated region
        $region73: #{tpu_custom_call.1} parent=71 // pred_check
          %p507 = pneg %p59
        $region74: #{tpu_custom_call.1} parent=71 // pred_check_branch
          %509 = sbr.rel (%p507) target = $region76
        $region75: #{tpu_custom_call.1} parent=71 // pred_region
          %510 = dma.done %s503, 4096
        $region76: #{tpu_custom_call.1} parent=71 // pred_fallthru
          _
        // Predicated region
        $region77: #{tpu_custom_call.1} parent=71 // pred_check
          %p511 = pneg %p164
        $region78: #{tpu_custom_call.1} parent=71 // pred_check_branch
          %513 = sbr.rel (%p511) target = $region80
        $region79: #{tpu_custom_call.1} parent=71 // pred_region
          %514 = dma.done [#allocation6], 2048
        $region80: #{tpu_custom_call.1} parent=71 // pred_fallthru
          _
        // Predicated region
        $region81: #{tpu_custom_call.1} parent=71 // pred_check
          %p515 = pneg %p206
        $region82: #{tpu_custom_call.1} parent=71 // pred_check_branch
          %517 = sbr.rel (%p515) target = $region84
        $region83: #{tpu_custom_call.1} parent=71 // pred_region
          %518 = dma.done [#allocation6], 4096
        $region84: #{tpu_custom_call.1} parent=71 // pred_fallthru
          _
        // Predicated region
        $region85: #{tpu_custom_call.1} parent=71 // pred_check
          %p519 = pneg %p248
        $region86: #{tpu_custom_call.1} parent=71 // pred_check_branch
          %521 = sbr.rel (%p519) target = $region88
        $region87: #{tpu_custom_call.1} parent=71 // pred_region
          %522 = dma.done [#allocation9], 4096
        $region88: #{tpu_custom_call.1} parent=71 // pred_fallthru
          _
        %s523 = sand.u32 %s46, 1
        %s524 = scalar_lea.sflag [#allocation3], %s523
        %s525 = sand.u32 %s46, 1
        %s526 = smul.addr %s525, 256
        %s527 = scalar_lea.vmem [#allocation2], %s526
        %p528 = pneg %p59
        %p529 = pneg %p56
        %p530 = pneg %p80
        %p531 = pneg %p77
        %p532 = pneg %p101
        %p533 = pneg %p98
        %p534 = pneg %p122
        %p535 = pneg %p119
        %p536 = pneg %p143
        %p537 = pneg %p140
        %p538 = pneg %p164
        %p539 = pneg %p161
        %p540 = pneg %p185
        %p541 = pneg %p182
        %p542 = pneg %p206
        %p543 = pneg %p203
        %p544 = pneg %p227
        %p545 = pneg %p224
        %p546 = pneg %p248
        %p547 = pneg %p245
        %p548 = pneg %p269
        %p549 = pneg %p266
        %p550 = pneg %p290
        %p551 = pneg %p287
        %p552 = pneg %p311
        %p553 = pneg %p308
        %p554 = pneg %p337
        %p555 = pneg %p334
        %s556 = sand.u32 %s324, 1
        %s557 = scalar_lea.sflag [#allocation4], %s556
        %s558 = sand.u32 %s324, 1
        %s559 = smul.addr %s558, 256
        %s560 = scalar_lea.vmem [#allocation10], %s559
        %p561 = pneg %p363
        %p562 = pneg %p360
        %s563 = sand.u32 %s350, 1
        %s564 = scalar_lea.sflag [#allocation12], %s563
        %s565 = sand.u32 %s350, 1
        %s566 = smul.addr %s565, 256
        %s567 = scalar_lea.vmem [#allocation11], %s566
        %p568 = pneg %p389
        %p569 = pneg %p386
        %s570 = smul.u32 32, %s38
        %p571 = scmp.lt.s32.totalorder %s570, 63
        %s572 = scalar_select %p571, %s570, 63
        %s573 = smul.addr %s572, 8
        %s574 = scalar_lea.vmem %s15, %s573
        %s575 = smul.u32 32, %s38
        %s576 = smul.u32 32, %s38
        %s577 = smul.u32 32, %s38
        %s578 = smul.u32 32, %s38
        %p579 = scmp.lt.s32.totalorder %s578, 63
        %s580 = scalar_select %p579, %s578, 63
        %s581 = smul.addr %s580, 8
        %s582 = scalar_lea.vmem %s15, %s581
        %s583 = smul.u32 32, %s38
        %v584 = vld [vmem:[%s506] sm:$0xff]
        %v585 = vld [vmem:[%s506 + $0x8] sm:$0xff]
        %v586 = vld [vmem:[%s506 + $0x10] sm:$0xff]
        %v587 = vld [vmem:[%s506 + $0x18] sm:$0xff]
        %v588 = vld [vmem:[%s506 + $0x20] sm:$0xff]
        %v589 = vld [vmem:[%s506 + $0x28] sm:$0xff]
        %v590 = vld [vmem:[%s506 + $0x30] sm:$0xff]
        %v591 = vld [vmem:[%s506 + $0x38] sm:$0xff]
        %v592 = vld [vmem:[%s506 + $0x40] sm:$0xff]
        %v593 = vld [vmem:[%s506 + $0x48] sm:$0xff]
        %v594 = vld [vmem:[%s506 + $0x50] sm:$0xff]
        %v595 = vld [vmem:[%s506 + $0x58] sm:$0xff]
        %v596 = vld [vmem:[%s506 + $0x60] sm:$0xff]
        %v597 = vld [vmem:[%s506 + $0x68] sm:$0xff]
        %v598 = vld [vmem:[%s506 + $0x70] sm:$0xff]
        %v599 = vld [vmem:[%s506 + $0x78] sm:$0xff]
        %v600 = vld [vmem:[%s506 + $0x80] sm:$0xff]
        %v601 = vld [vmem:[%s506 + $0x88] sm:$0xff]
        %v602 = vld [vmem:[%s506 + $0x90] sm:$0xff]
        %v603 = vld [vmem:[%s506 + $0x98] sm:$0xff]
        %v604 = vld [vmem:[%s506 + $0xa0] sm:$0xff]
        %v605 = vld [vmem:[%s506 + $0xa8] sm:$0xff]
        %v606 = vld [vmem:[%s506 + $0xb0] sm:$0xff]
        %v607 = vld [vmem:[%s506 + $0xb8] sm:$0xff]
        %v608 = vld [vmem:[%s506 + $0xc0] sm:$0xff]
        %v609 = vld [vmem:[%s506 + $0xc8] sm:$0xff]
        %v610 = vld [vmem:[%s506 + $0xd0] sm:$0xff]
        %v611 = vld [vmem:[%s506 + $0xd8] sm:$0xff]
        %v612 = vld [vmem:[%s506 + $0xe0] sm:$0xff]
        %v613 = vld [vmem:[%s506 + $0xe8] sm:$0xff]
        %v614 = vld [vmem:[%s506 + $0xf0] sm:$0xff]
        %v615 = vld [vmem:[%s506 + $0xf8] sm:$0xff]
        %v616 = vld [vmem:[%s1] sm:$0x1]
        %v618 = vlaneseq
        %v619 = vshrl.u32 %v618, 7
        %v620 = vsub.s32 0, %v619
        %v621 = vrot.slane %v616, %v620
        %v623 = vmul.f32 %v584, %v621
        %v624 = vmul.f32 %v585, %v621
        %v625 = vmul.f32 %v586, %v621
        %v626 = vmul.f32 %v587, %v621
        %v627 = vmul.f32 %v588, %v621
        %v628 = vmul.f32 %v589, %v621
        %v629 = vmul.f32 %v590, %v621
        %v630 = vmul.f32 %v591, %v621
        %v631 = vmul.f32 %v592, %v621
        %v632 = vmul.f32 %v593, %v621
        %v633 = vmul.f32 %v594, %v621
        %v634 = vmul.f32 %v595, %v621
        %v635 = vmul.f32 %v596, %v621
        %v636 = vmul.f32 %v597, %v621
        %v637 = vmul.f32 %v598, %v621
        %v638 = vmul.f32 %v599, %v621
        %v639 = vmul.f32 %v600, %v621
        %v640 = vmul.f32 %v601, %v621
        %v641 = vmul.f32 %v602, %v621
        %v642 = vmul.f32 %v603, %v621
        %v643 = vmul.f32 %v604, %v621
        %v644 = vmul.f32 %v605, %v621
        %v645 = vmul.f32 %v606, %v621
        %v646 = vmul.f32 %v607, %v621
        %v647 = vmul.f32 %v608, %v621
        %v648 = vmul.f32 %v609, %v621
        %v649 = vmul.f32 %v610, %v621
        %v650 = vmul.f32 %v611, %v621
        %v651 = vmul.f32 %v612, %v621
        %v652 = vmul.f32 %v613, %v621
        %v653 = vmul.f32 %v614, %v621
        %v654 = vmul.f32 %v615, %v621
        %v655 = vld [vmem:[%s2] sm:$0x1]
        %v657 = vlaneseq
        %v658 = vshrl.u32 %v657, 7
        %v659 = vsub.s32 0, %v658
        %v660 = vrot.slane %v655, %v659
        %v662 = vmul.f32 %v584, %v660
        %v663 = vmul.f32 %v585, %v660
        %v664 = vmul.f32 %v586, %v660
        %v665 = vmul.f32 %v587, %v660
        %v666 = vmul.f32 %v588, %v660
        %v667 = vmul.f32 %v589, %v660
        %v668 = vmul.f32 %v590, %v660
        %v669 = vmul.f32 %v591, %v660
        %v670 = vmul.f32 %v592, %v660
        %v671 = vmul.f32 %v593, %v660
        %v672 = vmul.f32 %v594, %v660
        %v673 = vmul.f32 %v595, %v660
        %v674 = vmul.f32 %v596, %v660
        %v675 = vmul.f32 %v597, %v660
        %v676 = vmul.f32 %v598, %v660
        %v677 = vmul.f32 %v599, %v660
        %v678 = vmul.f32 %v600, %v660
        %v679 = vmul.f32 %v601, %v660
        %v680 = vmul.f32 %v602, %v660
        %v681 = vmul.f32 %v603, %v660
        %v682 = vmul.f32 %v604, %v660
        %v683 = vmul.f32 %v605, %v660
        %v684 = vmul.f32 %v606, %v660
        %v685 = vmul.f32 %v607, %v660
        %v686 = vmul.f32 %v608, %v660
        %v687 = vmul.f32 %v609, %v660
        %v688 = vmul.f32 %v610, %v660
        %v689 = vmul.f32 %v611, %v660
        %v690 = vmul.f32 %v612, %v660
        %v691 = vmul.f32 %v613, %v660
        %v692 = vmul.f32 %v614, %v660
        %v693 = vmul.f32 %v615, %v660
        %v694 = vld [vmem:[%s3] sm:$0xff]
        %v695 = vld [vmem:[%s3 + $0x8] sm:$0xff]
        %v696 = vld [vmem:[%s3 + $0x10] sm:$0xff]
        %v697 = vld [vmem:[%s3 + $0x18] sm:$0xff]
        %v698 = vld [vmem:[%s3 + $0x20] sm:$0xff]
        %v699 = vld [vmem:[%s3 + $0x28] sm:$0xff]
        %v700 = vld [vmem:[%s3 + $0x30] sm:$0xff]
        %v701 = vld [vmem:[%s3 + $0x38] sm:$0xff]
        %v702 = vld [vmem:[%s3 + $0x40] sm:$0xff]
        %v703 = vld [vmem:[%s3 + $0x48] sm:$0xff]
        %v704 = vld [vmem:[%s3 + $0x50] sm:$0xff]
        %v705 = vld [vmem:[%s3 + $0x58] sm:$0xff]
        %v706 = vld [vmem:[%s3 + $0x60] sm:$0xff]
        %v707 = vld [vmem:[%s3 + $0x68] sm:$0xff]
        %v708 = vld [vmem:[%s3 + $0x70] sm:$0xff]
        %v709 = vld [vmem:[%s3 + $0x78] sm:$0xff]
        %v710 = vld [vmem:[%s4] sm:$0x1]
        %v712 = vlaneseq
        %v713 = vshrl.u32 %v712, 7
        %v714 = vsub.s32 0, %v713
        %v715 = vrot.slane %v710, %v714
        %717 = vmatprep.subr.mxu0 0.0
        %718 = vmatpush1.msra.mxu0 %v709
        %719 = vmatprep.subr.mxu0 0.0
        %720 = vmatpush1.msra.mxu0 %v708
        %721 = vmatprep.subr.mxu0 0.0
        %722 = vmatpush1.msra.mxu0 %v707
        %723 = vmatprep.subr.mxu0 0.0
        %724 = vmatpush1.msra.mxu0 %v706
        %725 = vmatprep.subr.mxu0 0.0
        %726 = vmatpush1.msra.mxu0 %v705
        %727 = vmatprep.subr.mxu0 0.0
        %728 = vmatpush1.msra.mxu0 %v704
        %729 = vmatprep.subr.mxu0 0.0
        %730 = vmatpush1.msra.mxu0 %v703
        %731 = vmatprep.subr.mxu0 0.0
        %732 = vmatpush1.msra.mxu0 %v702
        %733 = vmatprep.subr.mxu0 0.0
        %734 = vmatpush1.msra.mxu0 %v701
        %735 = vmatprep.subr.mxu0 0.0
        %736 = vmatpush1.msra.mxu0 %v700
        %737 = vmatprep.subr.mxu0 0.0
        %738 = vmatpush1.msra.mxu0 %v699
        %739 = vmatprep.subr.mxu0 0.0
        %740 = vmatpush1.msra.mxu0 %v698
        %741 = vmatprep.subr.mxu0 0.0
        %742 = vmatpush1.msra.mxu0 %v697
        %743 = vmatprep.subr.mxu0 0.0
        %744 = vmatpush1.msra.mxu0 %v696
        %745 = vmatprep.subr.mxu0 0.0
        %746 = vmatpush1.msra.mxu0 %v695
        %747 = vmatprep.subr.mxu0 0.0
        %748 = vmatpush1.msra.mxu0 %v694
        %749 = vmatprep.subr.mxu0 0.0
        %750 = vmatpush2.msra.mxu0 0.0
        %751 = vmatprep.subr.mxu0 0.0
        %752 = vmatpush2.msra.mxu0 0.0
        %753 = vmatprep.subr.mxu0 0.0
        %754 = vmatpush2.msra.mxu0 0.0
        %755 = vmatprep.subr.mxu0 0.0
        %756 = vmatpush2.msra.mxu0 0.0
        %757 = vmatprep.subr.mxu0 0.0
        %758 = vmatpush2.msra.mxu0 0.0
        %759 = vmatprep.subr.mxu0 0.0
        %760 = vmatpush2.msra.mxu0 0.0
        %761 = vmatprep.subr.mxu0 0.0
        %762 = vmatpush2.msra.mxu0 0.0
        %763 = vmatprep.subr.mxu0 0.0
        %764 = vmatpush2.msra.mxu0 0.0
        %765 = vmatprep.subr.mxu0 0.0
        %766 = vmatpush2.msra.mxu0 0.0
        %767 = vmatprep.subr.mxu0 0.0
        %768 = vmatpush2.msra.mxu0 0.0
        %769 = vmatprep.subr.mxu0 0.0
        %770 = vmatpush2.msra.mxu0 0.0
        %771 = vmatprep.subr.mxu0 0.0
        %772 = vmatpush2.msra.mxu0 0.0
        %773 = vmatprep.subr.mxu0 0.0
        %774 = vmatpush2.msra.mxu0 0.0
        %775 = vmatprep.subr.mxu0 0.0
        %776 = vmatpush2.msra.mxu0 0.0
        %777 = vmatprep.subr.mxu0 0.0
        %778 = vmatpush2.msra.mxu0 0.0
        %779 = vmatprep.subr.mxu0 0.0
        %780 = vmatpush2.msra.mxu0 0.0
        %781 = vmatprep.mubr.f32.mxu0 0.0
        %782 = vmatmul.mubr.f32.gmra.mxu0 %v623
        %v783 = vpop.f32.mrf.mxu0
        %v784 = vadd.f32 %v715, %v783
        %v785 = vpop.f32.mrf.mxu0
        %786 = vmatprep.mubr.f32.mxu0 0.0
        %787 = vmatmul.mubr.f32.gmra.mxu0 %v624
        %v788 = vpop.f32.mrf.mxu0
        %v789 = vadd.f32 %v715, %v788
        %v790 = vpop.f32.mrf.mxu0
        %791 = vmatprep.mubr.f32.mxu0 0.0
        %792 = vmatmul.mubr.f32.gmra.mxu0 %v625
        %v793 = vpop.f32.mrf.mxu0
        %v794 = vadd.f32 %v715, %v793
        %v795 = vpop.f32.mrf.mxu0
        %796 = vmatprep.mubr.f32.mxu0 0.0
        %797 = vmatmul.mubr.f32.gmra.mxu0 %v626
        %v798 = vpop.f32.mrf.mxu0
        %v799 = vadd.f32 %v715, %v798
        %v800 = vpop.f32.mrf.mxu0
        %801 = vmatprep.mubr.f32.mxu0 0.0
        %802 = vmatmul.mubr.f32.gmra.mxu0 %v627
        %v803 = vpop.f32.mrf.mxu0
        %v804 = vadd.f32 %v715, %v803
        %v805 = vpop.f32.mrf.mxu0
        %806 = vmatprep.mubr.f32.mxu0 0.0
        %807 = vmatmul.mubr.f32.gmra.mxu0 %v628
        %v808 = vpop.f32.mrf.mxu0
        %v809 = vadd.f32 %v715, %v808
        %v810 = vpop.f32.mrf.mxu0
        %811 = vmatprep.mubr.f32.mxu0 0.0
        %812 = vmatmul.mubr.f32.gmra.mxu0 %v629
        %v813 = vpop.f32.mrf.mxu0
        %v814 = vadd.f32 %v715, %v813
        %v815 = vpop.f32.mrf.mxu0
        %816 = vmatprep.mubr.f32.mxu0 0.0
        %817 = vmatmul.mubr.f32.gmra.mxu0 %v630
        %v818 = vpop.f32.mrf.mxu0
        %v819 = vadd.f32 %v715, %v818
        %v820 = vpop.f32.mrf.mxu0
        %821 = vmatprep.mubr.f32.mxu0 0.0
        %822 = vmatmul.mubr.f32.gmra.mxu0 %v631
        %v823 = vpop.f32.mrf.mxu0
        %v824 = vadd.f32 %v715, %v823
        %v825 = vpop.f32.mrf.mxu0
        %826 = vmatprep.mubr.f32.mxu0 0.0
        %827 = vmatmul.mubr.f32.gmra.mxu0 %v632
        %v828 = vpop.f32.mrf.mxu0
        %v829 = vadd.f32 %v715, %v828
        %v830 = vpop.f32.mrf.mxu0
        %831 = vmatprep.mubr.f32.mxu0 0.0
        %832 = vmatmul.mubr.f32.gmra.mxu0 %v633
        %v833 = vpop.f32.mrf.mxu0
        %v834 = vadd.f32 %v715, %v833
        %v835 = vpop.f32.mrf.mxu0
        %836 = vmatprep.mubr.f32.mxu0 0.0
        %837 = vmatmul.mubr.f32.gmra.mxu0 %v634
        %v838 = vpop.f32.mrf.mxu0
        %v839 = vadd.f32 %v715, %v838
        %v840 = vpop.f32.mrf.mxu0
        %841 = vmatprep.mubr.f32.mxu0 0.0
        %842 = vmatmul.mubr.f32.gmra.mxu0 %v635
        %v843 = vpop.f32.mrf.mxu0
        %v844 = vadd.f32 %v715, %v843
        %v845 = vpop.f32.mrf.mxu0
        %846 = vmatprep.mubr.f32.mxu0 0.0
        %847 = vmatmul.mubr.f32.gmra.mxu0 %v636
        %v848 = vpop.f32.mrf.mxu0
        %v849 = vadd.f32 %v715, %v848
        %v850 = vpop.f32.mrf.mxu0
        %851 = vmatprep.mubr.f32.mxu0 0.0
        %852 = vmatmul.mubr.f32.gmra.mxu0 %v637
        %v853 = vpop.f32.mrf.mxu0
        %v854 = vadd.f32 %v715, %v853
        %v855 = vpop.f32.mrf.mxu0
        %856 = vmatprep.mubr.f32.mxu0 0.0
        %857 = vmatmul.mubr.f32.gmra.mxu0 %v638
        %v858 = vpop.f32.mrf.mxu0
        %v859 = vadd.f32 %v715, %v858
        %v860 = vpop.f32.mrf.mxu0
        %861 = vmatprep.mubr.f32.mxu0 0.0
        %862 = vmatmul.mubr.f32.gmra.mxu0 %v639
        %v863 = vpop.f32.mrf.mxu0
        %v864 = vadd.f32 %v715, %v863
        %v865 = vpop.f32.mrf.mxu0
        %866 = vmatprep.mubr.f32.mxu0 0.0
        %867 = vmatmul.mubr.f32.gmra.mxu0 %v640
        %v868 = vpop.f32.mrf.mxu0
        %v869 = vadd.f32 %v715, %v868
        %v870 = vpop.f32.mrf.mxu0
        %871 = vmatprep.mubr.f32.mxu0 0.0
        %872 = vmatmul.mubr.f32.gmra.mxu0 %v641
        %v873 = vpop.f32.mrf.mxu0
        %v874 = vadd.f32 %v715, %v873
        %v875 = vpop.f32.mrf.mxu0
        %876 = vmatprep.mubr.f32.mxu0 0.0
        %877 = vmatmul.mubr.f32.gmra.mxu0 %v642
        %v878 = vpop.f32.mrf.mxu0
        %v879 = vadd.f32 %v715, %v878
        %v880 = vpop.f32.mrf.mxu0
        %881 = vmatprep.mubr.f32.mxu0 0.0
        %882 = vmatmul.mubr.f32.gmra.mxu0 %v643
        %v883 = vpop.f32.mrf.mxu0
        %v884 = vadd.f32 %v715, %v883
        %v885 = vpop.f32.mrf.mxu0
        %886 = vmatprep.mubr.f32.mxu0 0.0
        %887 = vmatmul.mubr.f32.gmra.mxu0 %v644
        %v888 = vpop.f32.mrf.mxu0
        %v889 = vadd.f32 %v715, %v888
        %v890 = vpop.f32.mrf.mxu0
        %891 = vmatprep.mubr.f32.mxu0 0.0
        %892 = vmatmul.mubr.f32.gmra.mxu0 %v645
        %v893 = vpop.f32.mrf.mxu0
        %v894 = vadd.f32 %v715, %v893
        %v895 = vpop.f32.mrf.mxu0
        %896 = vmatprep.mubr.f32.mxu0 0.0
        %897 = vmatmul.mubr.f32.gmra.mxu0 %v646
        %v898 = vpop.f32.mrf.mxu0
        %v899 = vadd.f32 %v715, %v898
        %v900 = vpop.f32.mrf.mxu0
        %901 = vmatprep.mubr.f32.mxu0 0.0
        %902 = vmatmul.mubr.f32.gmra.mxu0 %v647
        %v903 = vpop.f32.mrf.mxu0
        %v904 = vadd.f32 %v715, %v903
        %v905 = vpop.f32.mrf.mxu0
        %906 = vmatprep.mubr.f32.mxu0 0.0
        %907 = vmatmul.mubr.f32.gmra.mxu0 %v648
        %v908 = vpop.f32.mrf.mxu0
        %v909 = vadd.f32 %v715, %v908
        %v910 = vpop.f32.mrf.mxu0
        %911 = vmatprep.mubr.f32.mxu0 0.0
        %912 = vmatmul.mubr.f32.gmra.mxu0 %v649
        %v913 = vpop.f32.mrf.mxu0
        %v914 = vadd.f32 %v715, %v913
        %v915 = vpop.f32.mrf.mxu0
        %916 = vmatprep.mubr.f32.mxu0 0.0
        %917 = vmatmul.mubr.f32.gmra.mxu0 %v650
        %v918 = vpop.f32.mrf.mxu0
        %v919 = vadd.f32 %v715, %v918
        %v920 = vpop.f32.mrf.mxu0
        %921 = vmatprep.mubr.f32.mxu0 0.0
        %922 = vmatmul.mubr.f32.gmra.mxu0 %v651
        %v923 = vpop.f32.mrf.mxu0
        %v924 = vadd.f32 %v715, %v923
        %v925 = vpop.f32.mrf.mxu0
        %926 = vmatprep.mubr.f32.mxu0 0.0
        %927 = vmatmul.mubr.f32.gmra.mxu0 %v652
        %v928 = vpop.f32.mrf.mxu0
        %v929 = vadd.f32 %v715, %v928
        %v930 = vpop.f32.mrf.mxu0
        %931 = vmatprep.mubr.f32.mxu0 0.0
        %932 = vmatmul.mubr.f32.gmra.mxu0 %v653
        %v933 = vpop.f32.mrf.mxu0
        %v934 = vadd.f32 %v715, %v933
        %v935 = vpop.f32.mrf.mxu0
        %936 = vmatprep.mubr.f32.mxu0 0.0
        %937 = vmatmul.mubr.f32.gmra.mxu0 %v654
        %v938 = vpop.f32.mrf.mxu0
        %v939 = vadd.f32 %v715, %v938
        %v940 = vpop.f32.mrf.mxu0
        %941 = vmatprep.mubr.f32.mxu0 0.0
        %942 = vmatmul.mubr.f32.gmra.mxu0 %v662
        %v943 = vpop.f32.mrf.mxu0
        %v944 = vadd.f32 %v715, %v943
        %v945 = vpop.f32.mrf.mxu0
        %946 = vmatprep.mubr.f32.mxu0 0.0
        %947 = vmatmul.mubr.f32.gmra.mxu0 %v663
        %v948 = vpop.f32.mrf.mxu0
        %v949 = vadd.f32 %v715, %v948
        %v950 = vpop.f32.mrf.mxu0
        %951 = vmatprep.mubr.f32.mxu0 0.0
        %952 = vmatmul.mubr.f32.gmra.mxu0 %v664
        %v953 = vpop.f32.mrf.mxu0
        %v954 = vadd.f32 %v715, %v953
        %v955 = vpop.f32.mrf.mxu0
        %956 = vmatprep.mubr.f32.mxu0 0.0
        %957 = vmatmul.mubr.f32.gmra.mxu0 %v665
        %v958 = vpop.f32.mrf.mxu0
        %v959 = vadd.f32 %v715, %v958
        %v960 = vpop.f32.mrf.mxu0
        %961 = vmatprep.mubr.f32.mxu0 0.0
        %962 = vmatmul.mubr.f32.gmra.mxu0 %v666
        %v963 = vpop.f32.mrf.mxu0
        %v964 = vadd.f32 %v715, %v963
        %v965 = vpop.f32.mrf.mxu0
        %966 = vmatprep.mubr.f32.mxu0 0.0
        %967 = vmatmul.mubr.f32.gmra.mxu0 %v667
        %v968 = vpop.f32.mrf.mxu0
        %v969 = vadd.f32 %v715, %v968
        %v970 = vpop.f32.mrf.mxu0
        %971 = vmatprep.mubr.f32.mxu0 0.0
        %972 = vmatmul.mubr.f32.gmra.mxu0 %v668
        %v973 = vpop.f32.mrf.mxu0
        %v974 = vadd.f32 %v715, %v973
        %v975 = vpop.f32.mrf.mxu0
        %976 = vmatprep.mubr.f32.mxu0 0.0
        %977 = vmatmul.mubr.f32.gmra.mxu0 %v669
        %v978 = vpop.f32.mrf.mxu0
        %v979 = vadd.f32 %v715, %v978
        %v980 = vpop.f32.mrf.mxu0
        %981 = vmatprep.mubr.f32.mxu0 0.0
        %982 = vmatmul.mubr.f32.gmra.mxu0 %v670
        %v983 = vpop.f32.mrf.mxu0
        %v984 = vadd.f32 %v715, %v983
        %v985 = vpop.f32.mrf.mxu0
        %986 = vmatprep.mubr.f32.mxu0 0.0
        %987 = vmatmul.mubr.f32.gmra.mxu0 %v671
        %v988 = vpop.f32.mrf.mxu0
        %v989 = vadd.f32 %v715, %v988
        %v990 = vpop.f32.mrf.mxu0
        %991 = vmatprep.mubr.f32.mxu0 0.0
        %992 = vmatmul.mubr.f32.gmra.mxu0 %v672
        %v993 = vpop.f32.mrf.mxu0
        %v994 = vadd.f32 %v715, %v993
        %v995 = vpop.f32.mrf.mxu0
        %996 = vmatprep.mubr.f32.mxu0 0.0
        %997 = vmatmul.mubr.f32.gmra.mxu0 %v673
        %v998 = vpop.f32.mrf.mxu0
        %v999 = vadd.f32 %v715, %v998
        %v1000 = vpop.f32.mrf.mxu0
        %1001 = vmatprep.mubr.f32.mxu0 0.0
        %1002 = vmatmul.mubr.f32.gmra.mxu0 %v674
        %v1003 = vpop.f32.mrf.mxu0
        %v1004 = vadd.f32 %v715, %v1003
        %v1005 = vpop.f32.mrf.mxu0
        %1006 = vmatprep.mubr.f32.mxu0 0.0
        %1007 = vmatmul.mubr.f32.gmra.mxu0 %v675
        %v1008 = vpop.f32.mrf.mxu0
        %v1009 = vadd.f32 %v715, %v1008
        %v1010 = vpop.f32.mrf.mxu0
        %1011 = vmatprep.mubr.f32.mxu0 0.0
        %1012 = vmatmul.mubr.f32.gmra.mxu0 %v676
        %v1013 = vpop.f32.mrf.mxu0
        %v1014 = vadd.f32 %v715, %v1013
        %v1015 = vpop.f32.mrf.mxu0
        %1016 = vmatprep.mubr.f32.mxu0 0.0
        %1017 = vmatmul.mubr.f32.gmra.mxu0 %v677
        %v1018 = vpop.f32.mrf.mxu0
        %v1019 = vadd.f32 %v715, %v1018
        %v1020 = vpop.f32.mrf.mxu0
        %1021 = vmatprep.mubr.f32.mxu0 0.0
        %1022 = vmatmul.mubr.f32.gmra.mxu0 %v678
        %v1023 = vpop.f32.mrf.mxu0
        %v1024 = vadd.f32 %v715, %v1023
        %v1025 = vpop.f32.mrf.mxu0
        %1026 = vmatprep.mubr.f32.mxu0 0.0
        %1027 = vmatmul.mubr.f32.gmra.mxu0 %v679
        %v1028 = vpop.f32.mrf.mxu0
        %v1029 = vadd.f32 %v715, %v1028
        %v1030 = vpop.f32.mrf.mxu0
        %1031 = vmatprep.mubr.f32.mxu0 0.0
        %1032 = vmatmul.mubr.f32.gmra.mxu0 %v680
        %v1033 = vpop.f32.mrf.mxu0
        %v1034 = vadd.f32 %v715, %v1033
        %v1035 = vpop.f32.mrf.mxu0
        %1036 = vmatprep.mubr.f32.mxu0 0.0
        %1037 = vmatmul.mubr.f32.gmra.mxu0 %v681
        %v1038 = vpop.f32.mrf.mxu0
        %v1039 = vadd.f32 %v715, %v1038
        %v1040 = vpop.f32.mrf.mxu0
        %1041 = vmatprep.mubr.f32.mxu0 0.0
        %1042 = vmatmul.mubr.f32.gmra.mxu0 %v682
        %v1043 = vpop.f32.mrf.mxu0
        %v1044 = vadd.f32 %v715, %v1043
        %v1045 = vpop.f32.mrf.mxu0
        %1046 = vmatprep.mubr.f32.mxu0 0.0
        %1047 = vmatmul.mubr.f32.gmra.mxu0 %v683
        %v1048 = vpop.f32.mrf.mxu0
        %v1049 = vadd.f32 %v715, %v1048
        %v1050 = vpop.f32.mrf.mxu0
        %1051 = vmatprep.mubr.f32.mxu0 0.0
        %1052 = vmatmul.mubr.f32.gmra.mxu0 %v684
        %v1053 = vpop.f32.mrf.mxu0
        %v1054 = vadd.f32 %v715, %v1053
        %v1055 = vpop.f32.mrf.mxu0
        %1056 = vmatprep.mubr.f32.mxu0 0.0
        %1057 = vmatmul.mubr.f32.gmra.mxu0 %v685
        %v1058 = vpop.f32.mrf.mxu0
        %v1059 = vadd.f32 %v715, %v1058
        %v1060 = vpop.f32.mrf.mxu0
        %1061 = vmatprep.mubr.f32.mxu0 0.0
        %1062 = vmatmul.mubr.f32.gmra.mxu0 %v686
        %v1063 = vpop.f32.mrf.mxu0
        %v1064 = vadd.f32 %v715, %v1063
        %v1065 = vpop.f32.mrf.mxu0
        %1066 = vmatprep.mubr.f32.mxu0 0.0
        %1067 = vmatmul.mubr.f32.gmra.mxu0 %v687
        %v1068 = vpop.f32.mrf.mxu0
        %v1069 = vadd.f32 %v715, %v1068
        %v1070 = vpop.f32.mrf.mxu0
        %1071 = vmatprep.mubr.f32.mxu0 0.0
        %1072 = vmatmul.mubr.f32.gmra.mxu0 %v688
        %v1073 = vpop.f32.mrf.mxu0
        %v1074 = vadd.f32 %v715, %v1073
        %v1075 = vpop.f32.mrf.mxu0
        %1076 = vmatprep.mubr.f32.mxu0 0.0
        %1077 = vmatmul.mubr.f32.gmra.mxu0 %v689
        %v1078 = vpop.f32.mrf.mxu0
        %v1079 = vadd.f32 %v715, %v1078
        %v1080 = vpop.f32.mrf.mxu0
        %1081 = vmatprep.mubr.f32.mxu0 0.0
        %1082 = vmatmul.mubr.f32.gmra.mxu0 %v690
        %v1083 = vpop.f32.mrf.mxu0
        %v1084 = vadd.f32 %v715, %v1083
        %v1085 = vpop.f32.mrf.mxu0
        %1086 = vmatprep.mubr.f32.mxu0 0.0
        %1087 = vmatmul.mubr.f32.gmra.mxu0 %v691
        %v1088 = vpop.f32.mrf.mxu0
        %v1089 = vadd.f32 %v715, %v1088
        %v1090 = vpop.f32.mrf.mxu0
        %1091 = vmatprep.mubr.f32.mxu0 0.0
        %1092 = vmatmul.mubr.f32.gmra.mxu0 %v692
        %v1093 = vpop.f32.mrf.mxu0
        %v1094 = vadd.f32 %v715, %v1093
        %v1095 = vpop.f32.mrf.mxu0
        %1096 = vmatprep.mubr.f32.mxu0 0.0
        %1097 = vmatmul.mubr.f32.gmra.mxu0 %v693
        %v1098 = vpop.f32.mrf.mxu0
        %v1099 = vadd.f32 %v715, %v1098
        %v1100 = vpop.f32.mrf.mxu0
        %1101 = vdwg.mxu0
        %v1102 = vmax.f32 %v784, 0.0
        %v1103 = vmax.f32 %v789, 0.0
        %v1104 = vmax.f32 %v794, 0.0
        %v1105 = vmax.f32 %v799, 0.0
        %v1106 = vmax.f32 %v804, 0.0
        %v1107 = vmax.f32 %v809, 0.0
        %v1108 = vmax.f32 %v814, 0.0
        %v1109 = vmax.f32 %v819, 0.0
        %v1110 = vmax.f32 %v824, 0.0
        %v1111 = vmax.f32 %v829, 0.0
        %v1112 = vmax.f32 %v834, 0.0
        %v1113 = vmax.f32 %v839, 0.0
        %v1114 = vmax.f32 %v844, 0.0
        %v1115 = vmax.f32 %v849, 0.0
        %v1116 = vmax.f32 %v854, 0.0
        %v1117 = vmax.f32 %v859, 0.0
        %v1118 = vmax.f32 %v864, 0.0
        %v1119 = vmax.f32 %v869, 0.0
        %v1120 = vmax.f32 %v874, 0.0
        %v1121 = vmax.f32 %v879, 0.0
        %v1122 = vmax.f32 %v884, 0.0
        %v1123 = vmax.f32 %v889, 0.0
        %v1124 = vmax.f32 %v894, 0.0
        %v1125 = vmax.f32 %v899, 0.0
        %v1126 = vmax.f32 %v904, 0.0
        %v1127 = vmax.f32 %v909, 0.0
        %v1128 = vmax.f32 %v914, 0.0
        %v1129 = vmax.f32 %v919, 0.0
        %v1130 = vmax.f32 %v924, 0.0
        %v1131 = vmax.f32 %v929, 0.0
        %v1132 = vmax.f32 %v934, 0.0
        %v1133 = vmax.f32 %v939, 0.0
        %v1134 = vmax.f32 %v944, 0.0
        %v1135 = vmax.f32 %v949, 0.0
        %v1136 = vmax.f32 %v954, 0.0
        %v1137 = vmax.f32 %v959, 0.0
        %v1138 = vmax.f32 %v964, 0.0
        %v1139 = vmax.f32 %v969, 0.0
        %v1140 = vmax.f32 %v974, 0.0
        %v1141 = vmax.f32 %v979, 0.0
        %v1142 = vmax.f32 %v984, 0.0
        %v1143 = vmax.f32 %v989, 0.0
        %v1144 = vmax.f32 %v994, 0.0
        %v1145 = vmax.f32 %v999, 0.0
        %v1146 = vmax.f32 %v1004, 0.0
        %v1147 = vmax.f32 %v1009, 0.0
        %v1148 = vmax.f32 %v1014, 0.0
        %v1149 = vmax.f32 %v1019, 0.0
        %v1150 = vmax.f32 %v1024, 0.0
        %v1151 = vmax.f32 %v1029, 0.0
        %v1152 = vmax.f32 %v1034, 0.0
        %v1153 = vmax.f32 %v1039, 0.0
        %v1154 = vmax.f32 %v1044, 0.0
        %v1155 = vmax.f32 %v1049, 0.0
        %v1156 = vmax.f32 %v1054, 0.0
        %v1157 = vmax.f32 %v1059, 0.0
        %v1158 = vmax.f32 %v1064, 0.0
        %v1159 = vmax.f32 %v1069, 0.0
        %v1160 = vmax.f32 %v1074, 0.0
        %v1161 = vmax.f32 %v1079, 0.0
        %v1162 = vmax.f32 %v1084, 0.0
        %v1163 = vmax.f32 %v1089, 0.0
        %v1164 = vmax.f32 %v1094, 0.0
        %v1165 = vmax.f32 %v1099, 0.0
        %v1166 = vld [vmem:[#allocation5] sm:$0xff]
        %v1167 = vld [vmem:[#allocation5 + $0x8] sm:$0xff]
        %v1168 = vld [vmem:[#allocation5 + $0x10] sm:$0xff]
        %v1169 = vld [vmem:[#allocation5 + $0x18] sm:$0xff]
        %v1170 = vld [vmem:[#allocation5 + $0x20] sm:$0xff]
        %v1171 = vld [vmem:[#allocation5 + $0x28] sm:$0xff]
        %v1172 = vld [vmem:[#allocation5 + $0x30] sm:$0xff]
        %v1173 = vld [vmem:[#allocation5 + $0x38] sm:$0xff]
        %v1174 = vld [vmem:[#allocation5 + $0x40] sm:$0xff]
        %v1175 = vld [vmem:[#allocation5 + $0x48] sm:$0xff]
        %v1176 = vld [vmem:[#allocation5 + $0x50] sm:$0xff]
        %v1177 = vld [vmem:[#allocation5 + $0x58] sm:$0xff]
        %v1178 = vld [vmem:[#allocation5 + $0x60] sm:$0xff]
        %v1179 = vld [vmem:[#allocation5 + $0x68] sm:$0xff]
        %v1180 = vld [vmem:[#allocation5 + $0x70] sm:$0xff]
        %v1181 = vld [vmem:[#allocation5 + $0x78] sm:$0xff]
        %v1182 = vld [vmem:[%s6] sm:$0x1]
        %v1184 = vlaneseq
        %v1185 = vshrl.u32 %v1184, 7
        %v1186 = vsub.s32 0, %v1185
        %v1187 = vrot.slane %v1182, %v1186
        %1189 = vmatprep.subr.mxu0 0.0
        %1190 = vmatpush1.msra.mxu0 %v1181
        %1191 = vmatprep.subr.mxu0 0.0
        %1192 = vmatpush1.msra.mxu0 %v1180
        %1193 = vmatprep.subr.mxu0 0.0
        %1194 = vmatpush1.msra.mxu0 %v1179
        %1195 = vmatprep.subr.mxu0 0.0
        %1196 = vmatpush1.msra.mxu0 %v1178
        %1197 = vmatprep.subr.mxu0 0.0
        %1198 = vmatpush1.msra.mxu0 %v1177
        %1199 = vmatprep.subr.mxu0 0.0
        %1200 = vmatpush1.msra.mxu0 %v1176
        %1201 = vmatprep.subr.mxu0 0.0
        %1202 = vmatpush1.msra.mxu0 %v1175
        %1203 = vmatprep.subr.mxu0 0.0
        %1204 = vmatpush1.msra.mxu0 %v1174
        %1205 = vmatprep.subr.mxu0 0.0
        %1206 = vmatpush1.msra.mxu0 %v1173
        %1207 = vmatprep.subr.mxu0 0.0
        %1208 = vmatpush1.msra.mxu0 %v1172
        %1209 = vmatprep.subr.mxu0 0.0
        %1210 = vmatpush1.msra.mxu0 %v1171
        %1211 = vmatprep.subr.mxu0 0.0
        %1212 = vmatpush1.msra.mxu0 %v1170
        %1213 = vmatprep.subr.mxu0 0.0
        %1214 = vmatpush1.msra.mxu0 %v1169
        %1215 = vmatprep.subr.mxu0 0.0
        %1216 = vmatpush1.msra.mxu0 %v1168
        %1217 = vmatprep.subr.mxu0 0.0
        %1218 = vmatpush1.msra.mxu0 %v1167
        %1219 = vmatprep.subr.mxu0 0.0
        %1220 = vmatpush1.msra.mxu0 %v1166
        %1221 = vmatprep.subr.mxu0 0.0
        %1222 = vmatpush2.msra.mxu0 0.0
        %1223 = vmatprep.subr.mxu0 0.0
        %1224 = vmatpush2.msra.mxu0 0.0
        %1225 = vmatprep.subr.mxu0 0.0
        %1226 = vmatpush2.msra.mxu0 0.0
        %1227 = vmatprep.subr.mxu0 0.0
        %1228 = vmatpush2.msra.mxu0 0.0
        %1229 = vmatprep.subr.mxu0 0.0
        %1230 = vmatpush2.msra.mxu0 0.0
        %1231 = vmatprep.subr.mxu0 0.0
        %1232 = vmatpush2.msra.mxu0 0.0
        %1233 = vmatprep.subr.mxu0 0.0
        %1234 = vmatpush2.msra.mxu0 0.0
        %1235 = vmatprep.subr.mxu0 0.0
        %1236 = vmatpush2.msra.mxu0 0.0
        %1237 = vmatprep.subr.mxu0 0.0
        %1238 = vmatpush2.msra.mxu0 0.0
        %1239 = vmatprep.subr.mxu0 0.0
        %1240 = vmatpush2.msra.mxu0 0.0
        %1241 = vmatprep.subr.mxu0 0.0
        %1242 = vmatpush2.msra.mxu0 0.0
        %1243 = vmatprep.subr.mxu0 0.0
        %1244 = vmatpush2.msra.mxu0 0.0
        %1245 = vmatprep.subr.mxu0 0.0
        %1246 = vmatpush2.msra.mxu0 0.0
        %1247 = vmatprep.subr.mxu0 0.0
        %1248 = vmatpush2.msra.mxu0 0.0
        %1249 = vmatprep.subr.mxu0 0.0
        %1250 = vmatpush2.msra.mxu0 0.0
        %1251 = vmatprep.subr.mxu0 0.0
        %1252 = vmatpush2.msra.mxu0 0.0
        %1253 = vmatprep.mubr.f32.mxu0 0.0
        %1254 = vmatmul.mubr.f32.gmra.mxu0 %v1102
        %v1255 = vpop.f32.mrf.mxu0
        %v1256 = vadd.f32 %v1187, %v1255
        %v1257 = vpop.f32.mrf.mxu0
        %1258 = vmatprep.mubr.f32.mxu0 0.0
        %1259 = vmatmul.mubr.f32.gmra.mxu0 %v1103
        %v1260 = vpop.f32.mrf.mxu0
        %v1261 = vadd.f32 %v1187, %v1260
        %v1262 = vpop.f32.mrf.mxu0
        %1263 = vmatprep.mubr.f32.mxu0 0.0
        %1264 = vmatmul.mubr.f32.gmra.mxu0 %v1104
        %v1265 = vpop.f32.mrf.mxu0
        %v1266 = vadd.f32 %v1187, %v1265
        %v1267 = vpop.f32.mrf.mxu0
        %1268 = vmatprep.mubr.f32.mxu0 0.0
        %1269 = vmatmul.mubr.f32.gmra.mxu0 %v1105
        %v1270 = vpop.f32.mrf.mxu0
        %v1271 = vadd.f32 %v1187, %v1270
        %v1272 = vpop.f32.mrf.mxu0
        %1273 = vmatprep.mubr.f32.mxu0 0.0
        %1274 = vmatmul.mubr.f32.gmra.mxu0 %v1106
        %v1275 = vpop.f32.mrf.mxu0
        %v1276 = vadd.f32 %v1187, %v1275
        %v1277 = vpop.f32.mrf.mxu0
        %1278 = vmatprep.mubr.f32.mxu0 0.0
        %1279 = vmatmul.mubr.f32.gmra.mxu0 %v1107
        %v1280 = vpop.f32.mrf.mxu0
        %v1281 = vadd.f32 %v1187, %v1280
        %v1282 = vpop.f32.mrf.mxu0
        %1283 = vmatprep.mubr.f32.mxu0 0.0
        %1284 = vmatmul.mubr.f32.gmra.mxu0 %v1108
        %v1285 = vpop.f32.mrf.mxu0
        %v1286 = vadd.f32 %v1187, %v1285
        %v1287 = vpop.f32.mrf.mxu0
        %1288 = vmatprep.mubr.f32.mxu0 0.0
        %1289 = vmatmul.mubr.f32.gmra.mxu0 %v1109
        %v1290 = vpop.f32.mrf.mxu0
        %v1291 = vadd.f32 %v1187, %v1290
        %v1292 = vpop.f32.mrf.mxu0
        %1293 = vmatprep.mubr.f32.mxu0 0.0
        %1294 = vmatmul.mubr.f32.gmra.mxu0 %v1110
        %v1295 = vpop.f32.mrf.mxu0
        %v1296 = vadd.f32 %v1187, %v1295
        %v1297 = vpop.f32.mrf.mxu0
        %1298 = vmatprep.mubr.f32.mxu0 0.0
        %1299 = vmatmul.mubr.f32.gmra.mxu0 %v1111
        %v1300 = vpop.f32.mrf.mxu0
        %v1301 = vadd.f32 %v1187, %v1300
        %v1302 = vpop.f32.mrf.mxu0
        %1303 = vmatprep.mubr.f32.mxu0 0.0
        %1304 = vmatmul.mubr.f32.gmra.mxu0 %v1112
        %v1305 = vpop.f32.mrf.mxu0
        %v1306 = vadd.f32 %v1187, %v1305
        %v1307 = vpop.f32.mrf.mxu0
        %1308 = vmatprep.mubr.f32.mxu0 0.0
        %1309 = vmatmul.mubr.f32.gmra.mxu0 %v1113
        %v1310 = vpop.f32.mrf.mxu0
        %v1311 = vadd.f32 %v1187, %v1310
        %v1312 = vpop.f32.mrf.mxu0
        %1313 = vmatprep.mubr.f32.mxu0 0.0
        %1314 = vmatmul.mubr.f32.gmra.mxu0 %v1114
        %v1315 = vpop.f32.mrf.mxu0
        %v1316 = vadd.f32 %v1187, %v1315
        %v1317 = vpop.f32.mrf.mxu0
        %1318 = vmatprep.mubr.f32.mxu0 0.0
        %1319 = vmatmul.mubr.f32.gmra.mxu0 %v1115
        %v1320 = vpop.f32.mrf.mxu0
        %v1321 = vadd.f32 %v1187, %v1320
        %v1322 = vpop.f32.mrf.mxu0
        %1323 = vmatprep.mubr.f32.mxu0 0.0
        %1324 = vmatmul.mubr.f32.gmra.mxu0 %v1116
        %v1325 = vpop.f32.mrf.mxu0
        %v1326 = vadd.f32 %v1187, %v1325
        %v1327 = vpop.f32.mrf.mxu0
        %1328 = vmatprep.mubr.f32.mxu0 0.0
        %1329 = vmatmul.mubr.f32.gmra.mxu0 %v1117
        %v1330 = vpop.f32.mrf.mxu0
        %v1331 = vadd.f32 %v1187, %v1330
        %v1332 = vpop.f32.mrf.mxu0
        %1333 = vmatprep.mubr.f32.mxu0 0.0
        %1334 = vmatmul.mubr.f32.gmra.mxu0 %v1118
        %v1335 = vpop.f32.mrf.mxu0
        %v1336 = vadd.f32 %v1187, %v1335
        %v1337 = vpop.f32.mrf.mxu0
        %1338 = vmatprep.mubr.f32.mxu0 0.0
        %1339 = vmatmul.mubr.f32.gmra.mxu0 %v1119
        %v1340 = vpop.f32.mrf.mxu0
        %v1341 = vadd.f32 %v1187, %v1340
        %v1342 = vpop.f32.mrf.mxu0
        %1343 = vmatprep.mubr.f32.mxu0 0.0
        %1344 = vmatmul.mubr.f32.gmra.mxu0 %v1120
        %v1345 = vpop.f32.mrf.mxu0
        %v1346 = vadd.f32 %v1187, %v1345
        %v1347 = vpop.f32.mrf.mxu0
        %1348 = vmatprep.mubr.f32.mxu0 0.0
        %1349 = vmatmul.mubr.f32.gmra.mxu0 %v1121
        %v1350 = vpop.f32.mrf.mxu0
        %v1351 = vadd.f32 %v1187, %v1350
        %v1352 = vpop.f32.mrf.mxu0
        %1353 = vmatprep.mubr.f32.mxu0 0.0
        %1354 = vmatmul.mubr.f32.gmra.mxu0 %v1122
        %v1355 = vpop.f32.mrf.mxu0
        %v1356 = vadd.f32 %v1187, %v1355
        %v1357 = vpop.f32.mrf.mxu0
        %1358 = vmatprep.mubr.f32.mxu0 0.0
        %1359 = vmatmul.mubr.f32.gmra.mxu0 %v1123
        %v1360 = vpop.f32.mrf.mxu0
        %v1361 = vadd.f32 %v1187, %v1360
        %v1362 = vpop.f32.mrf.mxu0
        %1363 = vmatprep.mubr.f32.mxu0 0.0
        %1364 = vmatmul.mubr.f32.gmra.mxu0 %v1124
        %v1365 = vpop.f32.mrf.mxu0
        %v1366 = vadd.f32 %v1187, %v1365
        %v1367 = vpop.f32.mrf.mxu0
        %1368 = vmatprep.mubr.f32.mxu0 0.0
        %1369 = vmatmul.mubr.f32.gmra.mxu0 %v1125
        %v1370 = vpop.f32.mrf.mxu0
        %v1371 = vadd.f32 %v1187, %v1370
        %v1372 = vpop.f32.mrf.mxu0
        %1373 = vmatprep.mubr.f32.mxu0 0.0
        %1374 = vmatmul.mubr.f32.gmra.mxu0 %v1126
        %v1375 = vpop.f32.mrf.mxu0
        %v1376 = vadd.f32 %v1187, %v1375
        %v1377 = vpop.f32.mrf.mxu0
        %1378 = vmatprep.mubr.f32.mxu0 0.0
        %1379 = vmatmul.mubr.f32.gmra.mxu0 %v1127
        %v1380 = vpop.f32.mrf.mxu0
        %v1381 = vadd.f32 %v1187, %v1380
        %v1382 = vpop.f32.mrf.mxu0
        %1383 = vmatprep.mubr.f32.mxu0 0.0
        %1384 = vmatmul.mubr.f32.gmra.mxu0 %v1128
        %v1385 = vpop.f32.mrf.mxu0
        %v1386 = vadd.f32 %v1187, %v1385
        %v1387 = vpop.f32.mrf.mxu0
        %1388 = vmatprep.mubr.f32.mxu0 0.0
        %1389 = vmatmul.mubr.f32.gmra.mxu0 %v1129
        %v1390 = vpop.f32.mrf.mxu0
        %v1391 = vadd.f32 %v1187, %v1390
        %v1392 = vpop.f32.mrf.mxu0
        %1393 = vmatprep.mubr.f32.mxu0 0.0
        %1394 = vmatmul.mubr.f32.gmra.mxu0 %v1130
        %v1395 = vpop.f32.mrf.mxu0
        %v1396 = vadd.f32 %v1187, %v1395
        %v1397 = vpop.f32.mrf.mxu0
        %1398 = vmatprep.mubr.f32.mxu0 0.0
        %1399 = vmatmul.mubr.f32.gmra.mxu0 %v1131
        %v1400 = vpop.f32.mrf.mxu0
        %v1401 = vadd.f32 %v1187, %v1400
        %v1402 = vpop.f32.mrf.mxu0
        %1403 = vmatprep.mubr.f32.mxu0 0.0
        %1404 = vmatmul.mubr.f32.gmra.mxu0 %v1132
        %v1405 = vpop.f32.mrf.mxu0
        %v1406 = vadd.f32 %v1187, %v1405
        %v1407 = vpop.f32.mrf.mxu0
        %1408 = vmatprep.mubr.f32.mxu0 0.0
        %1409 = vmatmul.mubr.f32.gmra.mxu0 %v1133
        %v1410 = vpop.f32.mrf.mxu0
        %v1411 = vadd.f32 %v1187, %v1410
        %v1412 = vpop.f32.mrf.mxu0
        %1413 = vmatprep.mubr.f32.mxu0 0.0
        %1414 = vmatmul.mubr.f32.gmra.mxu0 %v1134
        %v1415 = vpop.f32.mrf.mxu0
        %v1416 = vadd.f32 %v1187, %v1415
        %v1417 = vpop.f32.mrf.mxu0
        %1418 = vmatprep.mubr.f32.mxu0 0.0
        %1419 = vmatmul.mubr.f32.gmra.mxu0 %v1135
        %v1420 = vpop.f32.mrf.mxu0
        %v1421 = vadd.f32 %v1187, %v1420
        %v1422 = vpop.f32.mrf.mxu0
        %1423 = vmatprep.mubr.f32.mxu0 0.0
        %1424 = vmatmul.mubr.f32.gmra.mxu0 %v1136
        %v1425 = vpop.f32.mrf.mxu0
        %v1426 = vadd.f32 %v1187, %v1425
        %v1427 = vpop.f32.mrf.mxu0
        %1428 = vmatprep.mubr.f32.mxu0 0.0
        %1429 = vmatmul.mubr.f32.gmra.mxu0 %v1137
        %v1430 = vpop.f32.mrf.mxu0
        %v1431 = vadd.f32 %v1187, %v1430
        %v1432 = vpop.f32.mrf.mxu0
        %1433 = vmatprep.mubr.f32.mxu0 0.0
        %1434 = vmatmul.mubr.f32.gmra.mxu0 %v1138
        %v1435 = vpop.f32.mrf.mxu0
        %v1436 = vadd.f32 %v1187, %v1435
        %v1437 = vpop.f32.mrf.mxu0
        %1438 = vmatprep.mubr.f32.mxu0 0.0
        %1439 = vmatmul.mubr.f32.gmra.mxu0 %v1139
        %v1440 = vpop.f32.mrf.mxu0
        %v1441 = vadd.f32 %v1187, %v1440
        %v1442 = vpop.f32.mrf.mxu0
        %1443 = vmatprep.mubr.f32.mxu0 0.0
        %1444 = vmatmul.mubr.f32.gmra.mxu0 %v1140
        %v1445 = vpop.f32.mrf.mxu0
        %v1446 = vadd.f32 %v1187, %v1445
        %v1447 = vpop.f32.mrf.mxu0
        %1448 = vmatprep.mubr.f32.mxu0 0.0
        %1449 = vmatmul.mubr.f32.gmra.mxu0 %v1141
        %v1450 = vpop.f32.mrf.mxu0
        %v1451 = vadd.f32 %v1187, %v1450
        %v1452 = vpop.f32.mrf.mxu0
        %1453 = vmatprep.mubr.f32.mxu0 0.0
        %1454 = vmatmul.mubr.f32.gmra.mxu0 %v1142
        %v1455 = vpop.f32.mrf.mxu0
        %v1456 = vadd.f32 %v1187, %v1455
        %v1457 = vpop.f32.mrf.mxu0
        %1458 = vmatprep.mubr.f32.mxu0 0.0
        %1459 = vmatmul.mubr.f32.gmra.mxu0 %v1143
        %v1460 = vpop.f32.mrf.mxu0
        %v1461 = vadd.f32 %v1187, %v1460
        %v1462 = vpop.f32.mrf.mxu0
        %1463 = vmatprep.mubr.f32.mxu0 0.0
        %1464 = vmatmul.mubr.f32.gmra.mxu0 %v1144
        %v1465 = vpop.f32.mrf.mxu0
        %v1466 = vadd.f32 %v1187, %v1465
        %v1467 = vpop.f32.mrf.mxu0
        %1468 = vmatprep.mubr.f32.mxu0 0.0
        %1469 = vmatmul.mubr.f32.gmra.mxu0 %v1145
        %v1470 = vpop.f32.mrf.mxu0
        %v1471 = vadd.f32 %v1187, %v1470
        %v1472 = vpop.f32.mrf.mxu0
        %1473 = vmatprep.mubr.f32.mxu0 0.0
        %1474 = vmatmul.mubr.f32.gmra.mxu0 %v1146
        %v1475 = vpop.f32.mrf.mxu0
        %v1476 = vadd.f32 %v1187, %v1475
        %v1477 = vpop.f32.mrf.mxu0
        %1478 = vmatprep.mubr.f32.mxu0 0.0
        %1479 = vmatmul.mubr.f32.gmra.mxu0 %v1147
        %v1480 = vpop.f32.mrf.mxu0
        %v1481 = vadd.f32 %v1187, %v1480
        %v1482 = vpop.f32.mrf.mxu0
        %1483 = vmatprep.mubr.f32.mxu0 0.0
        %1484 = vmatmul.mubr.f32.gmra.mxu0 %v1148
        %v1485 = vpop.f32.mrf.mxu0
        %v1486 = vadd.f32 %v1187, %v1485
        %v1487 = vpop.f32.mrf.mxu0
        %1488 = vmatprep.mubr.f32.mxu0 0.0
        %1489 = vmatmul.mubr.f32.gmra.mxu0 %v1149
        %v1490 = vpop.f32.mrf.mxu0
        %v1491 = vadd.f32 %v1187, %v1490
        %v1492 = vpop.f32.mrf.mxu0
        %1493 = vmatprep.mubr.f32.mxu0 0.0
        %1494 = vmatmul.mubr.f32.gmra.mxu0 %v1150
        %v1495 = vpop.f32.mrf.mxu0
        %v1496 = vadd.f32 %v1187, %v1495
        %v1497 = vpop.f32.mrf.mxu0
        %1498 = vmatprep.mubr.f32.mxu0 0.0
        %1499 = vmatmul.mubr.f32.gmra.mxu0 %v1151
        %v1500 = vpop.f32.mrf.mxu0
        %v1501 = vadd.f32 %v1187, %v1500
        %v1502 = vpop.f32.mrf.mxu0
        %1503 = vmatprep.mubr.f32.mxu0 0.0
        %1504 = vmatmul.mubr.f32.gmra.mxu0 %v1152
        %v1505 = vpop.f32.mrf.mxu0
        %v1506 = vadd.f32 %v1187, %v1505
        %v1507 = vpop.f32.mrf.mxu0
        %1508 = vmatprep.mubr.f32.mxu0 0.0
        %1509 = vmatmul.mubr.f32.gmra.mxu0 %v1153
        %v1510 = vpop.f32.mrf.mxu0
        %v1511 = vadd.f32 %v1187, %v1510
        %v1512 = vpop.f32.mrf.mxu0
        %1513 = vmatprep.mubr.f32.mxu0 0.0
        %1514 = vmatmul.mubr.f32.gmra.mxu0 %v1154
        %v1515 = vpop.f32.mrf.mxu0
        %v1516 = vadd.f32 %v1187, %v1515
        %v1517 = vpop.f32.mrf.mxu0
        %1518 = vmatprep.mubr.f32.mxu0 0.0
        %1519 = vmatmul.mubr.f32.gmra.mxu0 %v1155
        %v1520 = vpop.f32.mrf.mxu0
        %v1521 = vadd.f32 %v1187, %v1520
        %v1522 = vpop.f32.mrf.mxu0
        %1523 = vmatprep.mubr.f32.mxu0 0.0
        %1524 = vmatmul.mubr.f32.gmra.mxu0 %v1156
        %v1525 = vpop.f32.mrf.mxu0
        %v1526 = vadd.f32 %v1187, %v1525
        %v1527 = vpop.f32.mrf.mxu0
        %1528 = vmatprep.mubr.f32.mxu0 0.0
        %1529 = vmatmul.mubr.f32.gmra.mxu0 %v1157
        %v1530 = vpop.f32.mrf.mxu0
        %v1531 = vadd.f32 %v1187, %v1530
        %v1532 = vpop.f32.mrf.mxu0
        %1533 = vmatprep.mubr.f32.mxu0 0.0
        %1534 = vmatmul.mubr.f32.gmra.mxu0 %v1158
        %v1535 = vpop.f32.mrf.mxu0
        %v1536 = vadd.f32 %v1187, %v1535
        %v1537 = vpop.f32.mrf.mxu0
        %1538 = vmatprep.mubr.f32.mxu0 0.0
        %1539 = vmatmul.mubr.f32.gmra.mxu0 %v1159
        %v1540 = vpop.f32.mrf.mxu0
        %v1541 = vadd.f32 %v1187, %v1540
        %v1542 = vpop.f32.mrf.mxu0
        %1543 = vmatprep.mubr.f32.mxu0 0.0
        %1544 = vmatmul.mubr.f32.gmra.mxu0 %v1160
        %v1545 = vpop.f32.mrf.mxu0
        %v1546 = vadd.f32 %v1187, %v1545
        %v1547 = vpop.f32.mrf.mxu0
        %1548 = vmatprep.mubr.f32.mxu0 0.0
        %1549 = vmatmul.mubr.f32.gmra.mxu0 %v1161
        %v1550 = vpop.f32.mrf.mxu0
        %v1551 = vadd.f32 %v1187, %v1550
        %v1552 = vpop.f32.mrf.mxu0
        %1553 = vmatprep.mubr.f32.mxu0 0.0
        %1554 = vmatmul.mubr.f32.gmra.mxu0 %v1162
        %v1555 = vpop.f32.mrf.mxu0
        %v1556 = vadd.f32 %v1187, %v1555
        %v1557 = vpop.f32.mrf.mxu0
        %1558 = vmatprep.mubr.f32.mxu0 0.0
        %1559 = vmatmul.mubr.f32.gmra.mxu0 %v1163
        %v1560 = vpop.f32.mrf.mxu0
        %v1561 = vadd.f32 %v1187, %v1560
        %v1562 = vpop.f32.mrf.mxu0
        %1563 = vmatprep.mubr.f32.mxu0 0.0
        %1564 = vmatmul.mubr.f32.gmra.mxu0 %v1164
        %v1565 = vpop.f32.mrf.mxu0
        %v1566 = vadd.f32 %v1187, %v1565
        %v1567 = vpop.f32.mrf.mxu0
        %1568 = vmatprep.mubr.f32.mxu0 0.0
        %1569 = vmatmul.mubr.f32.gmra.mxu0 %v1165
        %v1570 = vpop.f32.mrf.mxu0
        %v1571 = vadd.f32 %v1187, %v1570
        %v1572 = vpop.f32.mrf.mxu0
        %1573 = vdwg.mxu0
        %v1574 = vadd.f32 %v1256, %v623
        %v1575 = vadd.f32 %v1261, %v624
        %v1576 = vadd.f32 %v1266, %v625
        %v1577 = vadd.f32 %v1271, %v626
        %v1578 = vadd.f32 %v1276, %v627
        %v1579 = vadd.f32 %v1281, %v628
        %v1580 = vadd.f32 %v1286, %v629
        %v1581 = vadd.f32 %v1291, %v630
        %v1582 = vadd.f32 %v1296, %v631
        %v1583 = vadd.f32 %v1301, %v632
        %v1584 = vadd.f32 %v1306, %v633
        %v1585 = vadd.f32 %v1311, %v634
        %v1586 = vadd.f32 %v1316, %v635
        %v1587 = vadd.f32 %v1321, %v636
        %v1588 = vadd.f32 %v1326, %v637
        %v1589 = vadd.f32 %v1331, %v638
        %v1590 = vadd.f32 %v1336, %v639
        %v1591 = vadd.f32 %v1341, %v640
        %v1592 = vadd.f32 %v1346, %v641
        %v1593 = vadd.f32 %v1351, %v642
        %v1594 = vadd.f32 %v1356, %v643
        %v1595 = vadd.f32 %v1361, %v644
        %v1596 = vadd.f32 %v1366, %v645
        %v1597 = vadd.f32 %v1371, %v646
        %v1598 = vadd.f32 %v1376, %v647
        %v1599 = vadd.f32 %v1381, %v648
        %v1600 = vadd.f32 %v1386, %v649
        %v1601 = vadd.f32 %v1391, %v650
        %v1602 = vadd.f32 %v1396, %v651
        %v1603 = vadd.f32 %v1401, %v652
        %v1604 = vadd.f32 %v1406, %v653
        %v1605 = vadd.f32 %v1411, %v654
        %1606 = vst [vmem:[%s560] sm:$0xff] %v1574
        %1607 = vst [vmem:[%s560 + $0x8] sm:$0xff] %v1575
        %1608 = vst [vmem:[%s560 + $0x10] sm:$0xff] %v1576
        %1609 = vst [vmem:[%s560 + $0x18] sm:$0xff] %v1577
        %1610 = vst [vmem:[%s560 + $0x20] sm:$0xff] %v1578
        %1611 = vst [vmem:[%s560 + $0x28] sm:$0xff] %v1579
        %1612 = vst [vmem:[%s560 + $0x30] sm:$0xff] %v1580
        %1613 = vst [vmem:[%s560 + $0x38] sm:$0xff] %v1581
        %1614 = vst [vmem:[%s560 + $0x40] sm:$0xff] %v1582
        %1615 = vst [vmem:[%s560 + $0x48] sm:$0xff] %v1583
        %1616 = vst [vmem:[%s560 + $0x50] sm:$0xff] %v1584
        %1617 = vst [vmem:[%s560 + $0x58] sm:$0xff] %v1585
        %1618 = vst [vmem:[%s560 + $0x60] sm:$0xff] %v1586
        %1619 = vst [vmem:[%s560 + $0x68] sm:$0xff] %v1587
        %1620 = vst [vmem:[%s560 + $0x70] sm:$0xff] %v1588
        %1621 = vst [vmem:[%s560 + $0x78] sm:$0xff] %v1589
        %1622 = vst [vmem:[%s560 + $0x80] sm:$0xff] %v1590
        %1623 = vst [vmem:[%s560 + $0x88] sm:$0xff] %v1591
        %1624 = vst [vmem:[%s560 + $0x90] sm:$0xff] %v1592
        %1625 = vst [vmem:[%s560 + $0x98] sm:$0xff] %v1593
        %1626 = vst [vmem:[%s560 + $0xa0] sm:$0xff] %v1594
        %1627 = vst [vmem:[%s560 + $0xa8] sm:$0xff] %v1595
        %1628 = vst [vmem:[%s560 + $0xb0] sm:$0xff] %v1596
        %1629 = vst [vmem:[%s560 + $0xb8] sm:$0xff] %v1597
        %1630 = vst [vmem:[%s560 + $0xc0] sm:$0xff] %v1598
        %1631 = vst [vmem:[%s560 + $0xc8] sm:$0xff] %v1599
        %1632 = vst [vmem:[%s560 + $0xd0] sm:$0xff] %v1600
        %1633 = vst [vmem:[%s560 + $0xd8] sm:$0xff] %v1601
        %1634 = vst [vmem:[%s560 + $0xe0] sm:$0xff] %v1602
        %1635 = vst [vmem:[%s560 + $0xe8] sm:$0xff] %v1603
        %1636 = vst [vmem:[%s560 + $0xf0] sm:$0xff] %v1604
        %1637 = vst [vmem:[%s560 + $0xf8] sm:$0xff] %v1605
        %v1638 = vmul.f32 %v1416, 2.0
        %v1639 = vmul.f32 %v1421, 2.0
        %v1640 = vmul.f32 %v1426, 2.0
        %v1641 = vmul.f32 %v1431, 2.0
        %v1642 = vmul.f32 %v1436, 2.0
        %v1643 = vmul.f32 %v1441, 2.0
        %v1644 = vmul.f32 %v1446, 2.0
        %v1645 = vmul.f32 %v1451, 2.0
        %v1646 = vmul.f32 %v1456, 2.0
        %v1647 = vmul.f32 %v1461, 2.0
        %v1648 = vmul.f32 %v1466, 2.0
        %v1649 = vmul.f32 %v1471, 2.0
        %v1650 = vmul.f32 %v1476, 2.0
        %v1651 = vmul.f32 %v1481, 2.0
        %v1652 = vmul.f32 %v1486, 2.0
        %v1653 = vmul.f32 %v1491, 2.0
        %v1654 = vmul.f32 %v1496, 2.0
        %v1655 = vmul.f32 %v1501, 2.0
        %v1656 = vmul.f32 %v1506, 2.0
        %v1657 = vmul.f32 %v1511, 2.0
        %v1658 = vmul.f32 %v1516, 2.0
        %v1659 = vmul.f32 %v1521, 2.0
        %v1660 = vmul.f32 %v1526, 2.0
        %v1661 = vmul.f32 %v1531, 2.0
        %v1662 = vmul.f32 %v1536, 2.0
        %v1663 = vmul.f32 %v1541, 2.0
        %v1664 = vmul.f32 %v1546, 2.0
        %v1665 = vmul.f32 %v1551, 2.0
        %v1666 = vmul.f32 %v1556, 2.0
        %v1667 = vmul.f32 %v1561, 2.0
        %v1668 = vmul.f32 %v1566, 2.0
        %v1669 = vmul.f32 %v1571, 2.0
        %1670 = vst [vmem:[%s567] sm:$0xff] %v1638
        %1671 = vst [vmem:[%s567 + $0x8] sm:$0xff] %v1639
        %1672 = vst [vmem:[%s567 + $0x10] sm:$0xff] %v1640
        %1673 = vst [vmem:[%s567 + $0x18] sm:$0xff] %v1641
        %1674 = vst [vmem:[%s567 + $0x20] sm:$0xff] %v1642
        %1675 = vst [vmem:[%s567 + $0x28] sm:$0xff] %v1643
        %1676 = vst [vmem:[%s567 + $0x30] sm:$0xff] %v1644
        %1677 = vst [vmem:[%s567 + $0x38] sm:$0xff] %v1645
        %1678 = vst [vmem:[%s567 + $0x40] sm:$0xff] %v1646
        %1679 = vst [vmem:[%s567 + $0x48] sm:$0xff] %v1647
        %1680 = vst [vmem:[%s567 + $0x50] sm:$0xff] %v1648
        %1681 = vst [vmem:[%s567 + $0x58] sm:$0xff] %v1649
        %1682 = vst [vmem:[%s567 + $0x60] sm:$0xff] %v1650
        %1683 = vst [vmem:[%s567 + $0x68] sm:$0xff] %v1651
        %1684 = vst [vmem:[%s567 + $0x70] sm:$0xff] %v1652
        %1685 = vst [vmem:[%s567 + $0x78] sm:$0xff] %v1653
        %1686 = vst [vmem:[%s567 + $0x80] sm:$0xff] %v1654
        %1687 = vst [vmem:[%s567 + $0x88] sm:$0xff] %v1655
        %1688 = vst [vmem:[%s567 + $0x90] sm:$0xff] %v1656
        %1689 = vst [vmem:[%s567 + $0x98] sm:$0xff] %v1657
        %1690 = vst [vmem:[%s567 + $0xa0] sm:$0xff] %v1658
        %1691 = vst [vmem:[%s567 + $0xa8] sm:$0xff] %v1659
        %1692 = vst [vmem:[%s567 + $0xb0] sm:$0xff] %v1660
        %1693 = vst [vmem:[%s567 + $0xb8] sm:$0xff] %v1661
        %1694 = vst [vmem:[%s567 + $0xc0] sm:$0xff] %v1662
        %1695 = vst [vmem:[%s567 + $0xc8] sm:$0xff] %v1663
        %1696 = vst [vmem:[%s567 + $0xd0] sm:$0xff] %v1664
        %1697 = vst [vmem:[%s567 + $0xd8] sm:$0xff] %v1665
        %1698 = vst [vmem:[%s567 + $0xe0] sm:$0xff] %v1666
        %1699 = vst [vmem:[%s567 + $0xe8] sm:$0xff] %v1667
        %1700 = vst [vmem:[%s567 + $0xf0] sm:$0xff] %v1668
        %1701 = vst [vmem:[%s567 + $0xf8] sm:$0xff] %v1669
        %v1702 = vld [vmem:[#allocation7] sm:$0xff]
        %v1703 = vld [vmem:[#allocation7 + $0x8] sm:$0xff]
        %v1704 = vld [vmem:[#allocation7 + $0x10] sm:$0xff]
        %v1705 = vld [vmem:[#allocation7 + $0x18] sm:$0xff]
        %v1706 = vld [vmem:[#allocation7 + $0x20] sm:$0xff]
        %v1707 = vld [vmem:[#allocation7 + $0x28] sm:$0xff]
        %v1708 = vld [vmem:[#allocation7 + $0x30] sm:$0xff]
        %v1709 = vld [vmem:[#allocation7 + $0x38] sm:$0xff]
        %v1710 = vld [vmem:[#allocation7 + $0x40] sm:$0xff]
        %v1711 = vld [vmem:[#allocation7 + $0x48] sm:$0xff]
        %v1712 = vld [vmem:[#allocation7 + $0x50] sm:$0xff]
        %v1713 = vld [vmem:[#allocation7 + $0x58] sm:$0xff]
        %v1714 = vld [vmem:[#allocation7 + $0x60] sm:$0xff]
        %v1715 = vld [vmem:[#allocation7 + $0x68] sm:$0xff]
        %v1716 = vld [vmem:[#allocation7 + $0x70] sm:$0xff]
        %v1717 = vld [vmem:[#allocation7 + $0x78] sm:$0xff]
        %v1718 = vld [vmem:[#allocation7 + $0x80] sm:$0xff]
        %v1719 = vld [vmem:[#allocation7 + $0x88] sm:$0xff]
        %v1720 = vld [vmem:[#allocation7 + $0x90] sm:$0xff]
        %v1721 = vld [vmem:[#allocation7 + $0x98] sm:$0xff]
        %v1722 = vld [vmem:[#allocation7 + $0xa0] sm:$0xff]
        %v1723 = vld [vmem:[#allocation7 + $0xa8] sm:$0xff]
        %v1724 = vld [vmem:[#allocation7 + $0xb0] sm:$0xff]
        %v1725 = vld [vmem:[#allocation7 + $0xb8] sm:$0xff]
        %v1726 = vld [vmem:[#allocation7 + $0xc0] sm:$0xff]
        %v1727 = vld [vmem:[#allocation7 + $0xc8] sm:$0xff]
        %v1728 = vld [vmem:[#allocation7 + $0xd0] sm:$0xff]
        %v1729 = vld [vmem:[#allocation7 + $0xd8] sm:$0xff]
        %v1730 = vld [vmem:[#allocation7 + $0xe0] sm:$0xff]
        %v1731 = vld [vmem:[#allocation7 + $0xe8] sm:$0xff]
        %v1732 = vld [vmem:[#allocation7 + $0xf0] sm:$0xff]
        %v1733 = vld [vmem:[#allocation7 + $0xf8] sm:$0xff]
        %v1734 = vld [vmem:[%s8] sm:$0x3]
        %v1736 = vlaneseq
        %v1737 = vshrl.u32 %v1736, 7
        %v1738 = vsub.s32 0, %v1737
        %v1739 = vrot.slane %v1734, %v1738
        %v1740 = vlaneseq
        %v1741 = vshrl.u32 %v1740, 7
        %v1742 = vsub.s32 1, %v1741
        %v1743 = vrot.slane %v1734, %v1742
        %1746 = vmatprep.subr.mxu0 %v1733
        %1747 = vmatpush1.msra.mxu0 %v1732
        %1748 = vmatprep.subr.mxu0 %v1731
        %1749 = vmatpush1.msra.mxu0 %v1730
        %1750 = vmatprep.subr.mxu0 %v1729
        %1751 = vmatpush1.msra.mxu0 %v1728
        %1752 = vmatprep.subr.mxu0 %v1727
        %1753 = vmatpush1.msra.mxu0 %v1726
        %1754 = vmatprep.subr.mxu0 %v1725
        %1755 = vmatpush1.msra.mxu0 %v1724
        %1756 = vmatprep.subr.mxu0 %v1723
        %1757 = vmatpush1.msra.mxu0 %v1722
        %1758 = vmatprep.subr.mxu0 %v1721
        %1759 = vmatpush1.msra.mxu0 %v1720
        %1760 = vmatprep.subr.mxu0 %v1719
        %1761 = vmatpush1.msra.mxu0 %v1718
        %1762 = vmatprep.subr.mxu0 %v1717
        %1763 = vmatpush1.msra.mxu0 %v1716
        %1764 = vmatprep.subr.mxu0 %v1715
        %1765 = vmatpush1.msra.mxu0 %v1714
        %1766 = vmatprep.subr.mxu0 %v1713
        %1767 = vmatpush1.msra.mxu0 %v1712
        %1768 = vmatprep.subr.mxu0 %v1711
        %1769 = vmatpush1.msra.mxu0 %v1710
        %1770 = vmatprep.subr.mxu0 %v1709
        %1771 = vmatpush1.msra.mxu0 %v1708
        %1772 = vmatprep.subr.mxu0 %v1707
        %1773 = vmatpush1.msra.mxu0 %v1706
        %1774 = vmatprep.subr.mxu0 %v1705
        %1775 = vmatpush1.msra.mxu0 %v1704
        %1776 = vmatprep.subr.mxu0 %v1703
        %1777 = vmatpush1.msra.mxu0 %v1702
        %1778 = vmatprep.subr.mxu0 0.0
        %1779 = vmatpush2.msra.mxu0 0.0
        %1780 = vmatprep.subr.mxu0 0.0
        %1781 = vmatpush2.msra.mxu0 0.0
        %1782 = vmatprep.subr.mxu0 0.0
        %1783 = vmatpush2.msra.mxu0 0.0
        %1784 = vmatprep.subr.mxu0 0.0
        %1785 = vmatpush2.msra.mxu0 0.0
        %1786 = vmatprep.subr.mxu0 0.0
        %1787 = vmatpush2.msra.mxu0 0.0
        %1788 = vmatprep.subr.mxu0 0.0
        %1789 = vmatpush2.msra.mxu0 0.0
        %1790 = vmatprep.subr.mxu0 0.0
        %1791 = vmatpush2.msra.mxu0 0.0
        %1792 = vmatprep.subr.mxu0 0.0
        %1793 = vmatpush2.msra.mxu0 0.0
        %1794 = vmatprep.subr.mxu0 0.0
        %1795 = vmatpush2.msra.mxu0 0.0
        %1796 = vmatprep.subr.mxu0 0.0
        %1797 = vmatpush2.msra.mxu0 0.0
        %1798 = vmatprep.subr.mxu0 0.0
        %1799 = vmatpush2.msra.mxu0 0.0
        %1800 = vmatprep.subr.mxu0 0.0
        %1801 = vmatpush2.msra.mxu0 0.0
        %1802 = vmatprep.subr.mxu0 0.0
        %1803 = vmatpush2.msra.mxu0 0.0
        %1804 = vmatprep.subr.mxu0 0.0
        %1805 = vmatpush2.msra.mxu0 0.0
        %1806 = vmatprep.subr.mxu0 0.0
        %1807 = vmatpush2.msra.mxu0 0.0
        %1808 = vmatprep.subr.mxu0 0.0
        %1809 = vmatpush2.msra.mxu0 0.0
        %1810 = vmatprep.mubr.f32.mxu0 0.0
        %1811 = vmatmul.mubr.f32.gmra.mxu0 %v1256
        %v1812 = vpop.f32.mrf.mxu0
        %v1813 = vadd.f32 %v1739, %v1812
        %v1814 = vpop.f32.mrf.mxu0
        %v1815 = vadd.f32 %v1743, %v1814
        %1816 = vmatprep.mubr.f32.mxu0 0.0
        %1817 = vmatmul.mubr.f32.gmra.mxu0 %v1261
        %v1818 = vpop.f32.mrf.mxu0
        %v1819 = vadd.f32 %v1739, %v1818
        %v1820 = vpop.f32.mrf.mxu0
        %v1821 = vadd.f32 %v1743, %v1820
        %1822 = vmatprep.mubr.f32.mxu0 0.0
        %1823 = vmatmul.mubr.f32.gmra.mxu0 %v1266
        %v1824 = vpop.f32.mrf.mxu0
        %v1825 = vadd.f32 %v1739, %v1824
        %v1826 = vpop.f32.mrf.mxu0
        %v1827 = vadd.f32 %v1743, %v1826
        %1828 = vmatprep.mubr.f32.mxu0 0.0
        %1829 = vmatmul.mubr.f32.gmra.mxu0 %v1271
        %v1830 = vpop.f32.mrf.mxu0
        %v1831 = vadd.f32 %v1739, %v1830
        %v1832 = vpop.f32.mrf.mxu0
        %v1833 = vadd.f32 %v1743, %v1832
        %1834 = vmatprep.mubr.f32.mxu0 0.0
        %1835 = vmatmul.mubr.f32.gmra.mxu0 %v1276
        %v1836 = vpop.f32.mrf.mxu0
        %v1837 = vadd.f32 %v1739, %v1836
        %v1838 = vpop.f32.mrf.mxu0
        %v1839 = vadd.f32 %v1743, %v1838
        %1840 = vmatprep.mubr.f32.mxu0 0.0
        %1841 = vmatmul.mubr.f32.gmra.mxu0 %v1281
        %v1842 = vpop.f32.mrf.mxu0
        %v1843 = vadd.f32 %v1739, %v1842
        %v1844 = vpop.f32.mrf.mxu0
        %v1845 = vadd.f32 %v1743, %v1844
        %1846 = vmatprep.mubr.f32.mxu0 0.0
        %1847 = vmatmul.mubr.f32.gmra.mxu0 %v1286
        %v1848 = vpop.f32.mrf.mxu0
        %v1849 = vadd.f32 %v1739, %v1848
        %v1850 = vpop.f32.mrf.mxu0
        %v1851 = vadd.f32 %v1743, %v1850
        %1852 = vmatprep.mubr.f32.mxu0 0.0
        %1853 = vmatmul.mubr.f32.gmra.mxu0 %v1291
        %v1854 = vpop.f32.mrf.mxu0
        %v1855 = vadd.f32 %v1739, %v1854
        %v1856 = vpop.f32.mrf.mxu0
        %v1857 = vadd.f32 %v1743, %v1856
        %1858 = vmatprep.mubr.f32.mxu0 0.0
        %1859 = vmatmul.mubr.f32.gmra.mxu0 %v1296
        %v1860 = vpop.f32.mrf.mxu0
        %v1861 = vadd.f32 %v1739, %v1860
        %v1862 = vpop.f32.mrf.mxu0
        %v1863 = vadd.f32 %v1743, %v1862
        %1864 = vmatprep.mubr.f32.mxu0 0.0
        %1865 = vmatmul.mubr.f32.gmra.mxu0 %v1301
        %v1866 = vpop.f32.mrf.mxu0
        %v1867 = vadd.f32 %v1739, %v1866
        %v1868 = vpop.f32.mrf.mxu0
        %v1869 = vadd.f32 %v1743, %v1868
        %1870 = vmatprep.mubr.f32.mxu0 0.0
        %1871 = vmatmul.mubr.f32.gmra.mxu0 %v1306
        %v1872 = vpop.f32.mrf.mxu0
        %v1873 = vadd.f32 %v1739, %v1872
        %v1874 = vpop.f32.mrf.mxu0
        %v1875 = vadd.f32 %v1743, %v1874
        %1876 = vmatprep.mubr.f32.mxu0 0.0
        %1877 = vmatmul.mubr.f32.gmra.mxu0 %v1311
        %v1878 = vpop.f32.mrf.mxu0
        %v1879 = vadd.f32 %v1739, %v1878
        %v1880 = vpop.f32.mrf.mxu0
        %v1881 = vadd.f32 %v1743, %v1880
        %1882 = vmatprep.mubr.f32.mxu0 0.0
        %1883 = vmatmul.mubr.f32.gmra.mxu0 %v1316
        %v1884 = vpop.f32.mrf.mxu0
        %v1885 = vadd.f32 %v1739, %v1884
        %v1886 = vpop.f32.mrf.mxu0
        %v1887 = vadd.f32 %v1743, %v1886
        %1888 = vmatprep.mubr.f32.mxu0 0.0
        %1889 = vmatmul.mubr.f32.gmra.mxu0 %v1321
        %v1890 = vpop.f32.mrf.mxu0
        %v1891 = vadd.f32 %v1739, %v1890
        %v1892 = vpop.f32.mrf.mxu0
        %v1893 = vadd.f32 %v1743, %v1892
        %1894 = vmatprep.mubr.f32.mxu0 0.0
        %1895 = vmatmul.mubr.f32.gmra.mxu0 %v1326
        %v1896 = vpop.f32.mrf.mxu0
        %v1897 = vadd.f32 %v1739, %v1896
        %v1898 = vpop.f32.mrf.mxu0
        %v1899 = vadd.f32 %v1743, %v1898
        %1900 = vmatprep.mubr.f32.mxu0 0.0
        %1901 = vmatmul.mubr.f32.gmra.mxu0 %v1331
        %v1902 = vpop.f32.mrf.mxu0
        %v1903 = vadd.f32 %v1739, %v1902
        %v1904 = vpop.f32.mrf.mxu0
        %v1905 = vadd.f32 %v1743, %v1904
        %1906 = vmatprep.mubr.f32.mxu0 0.0
        %1907 = vmatmul.mubr.f32.gmra.mxu0 %v1336
        %v1908 = vpop.f32.mrf.mxu0
        %v1909 = vadd.f32 %v1739, %v1908
        %v1910 = vpop.f32.mrf.mxu0
        %v1911 = vadd.f32 %v1743, %v1910
        %1912 = vmatprep.mubr.f32.mxu0 0.0
        %1913 = vmatmul.mubr.f32.gmra.mxu0 %v1341
        %v1914 = vpop.f32.mrf.mxu0
        %v1915 = vadd.f32 %v1739, %v1914
        %v1916 = vpop.f32.mrf.mxu0
        %v1917 = vadd.f32 %v1743, %v1916
        %1918 = vmatprep.mubr.f32.mxu0 0.0
        %1919 = vmatmul.mubr.f32.gmra.mxu0 %v1346
        %v1920 = vpop.f32.mrf.mxu0
        %v1921 = vadd.f32 %v1739, %v1920
        %v1922 = vpop.f32.mrf.mxu0
        %v1923 = vadd.f32 %v1743, %v1922
        %1924 = vmatprep.mubr.f32.mxu0 0.0
        %1925 = vmatmul.mubr.f32.gmra.mxu0 %v1351
        %v1926 = vpop.f32.mrf.mxu0
        %v1927 = vadd.f32 %v1739, %v1926
        %v1928 = vpop.f32.mrf.mxu0
        %v1929 = vadd.f32 %v1743, %v1928
        %1930 = vmatprep.mubr.f32.mxu0 0.0
        %1931 = vmatmul.mubr.f32.gmra.mxu0 %v1356
        %v1932 = vpop.f32.mrf.mxu0
        %v1933 = vadd.f32 %v1739, %v1932
        %v1934 = vpop.f32.mrf.mxu0
        %v1935 = vadd.f32 %v1743, %v1934
        %1936 = vmatprep.mubr.f32.mxu0 0.0
        %1937 = vmatmul.mubr.f32.gmra.mxu0 %v1361
        %v1938 = vpop.f32.mrf.mxu0
        %v1939 = vadd.f32 %v1739, %v1938
        %v1940 = vpop.f32.mrf.mxu0
        %v1941 = vadd.f32 %v1743, %v1940
        %1942 = vmatprep.mubr.f32.mxu0 0.0
        %1943 = vmatmul.mubr.f32.gmra.mxu0 %v1366
        %v1944 = vpop.f32.mrf.mxu0
        %v1945 = vadd.f32 %v1739, %v1944
        %v1946 = vpop.f32.mrf.mxu0
        %v1947 = vadd.f32 %v1743, %v1946
        %1948 = vmatprep.mubr.f32.mxu0 0.0
        %1949 = vmatmul.mubr.f32.gmra.mxu0 %v1371
        %v1950 = vpop.f32.mrf.mxu0
        %v1951 = vadd.f32 %v1739, %v1950
        %v1952 = vpop.f32.mrf.mxu0
        %v1953 = vadd.f32 %v1743, %v1952
        %1954 = vmatprep.mubr.f32.mxu0 0.0
        %1955 = vmatmul.mubr.f32.gmra.mxu0 %v1376
        %v1956 = vpop.f32.mrf.mxu0
        %v1957 = vadd.f32 %v1739, %v1956
        %v1958 = vpop.f32.mrf.mxu0
        %v1959 = vadd.f32 %v1743, %v1958
        %1960 = vmatprep.mubr.f32.mxu0 0.0
        %1961 = vmatmul.mubr.f32.gmra.mxu0 %v1381
        %v1962 = vpop.f32.mrf.mxu0
        %v1963 = vadd.f32 %v1739, %v1962
        %v1964 = vpop.f32.mrf.mxu0
        %v1965 = vadd.f32 %v1743, %v1964
        %1966 = vmatprep.mubr.f32.mxu0 0.0
        %1967 = vmatmul.mubr.f32.gmra.mxu0 %v1386
        %v1968 = vpop.f32.mrf.mxu0
        %v1969 = vadd.f32 %v1739, %v1968
        %v1970 = vpop.f32.mrf.mxu0
        %v1971 = vadd.f32 %v1743, %v1970
        %1972 = vmatprep.mubr.f32.mxu0 0.0
        %1973 = vmatmul.mubr.f32.gmra.mxu0 %v1391
        %v1974 = vpop.f32.mrf.mxu0
        %v1975 = vadd.f32 %v1739, %v1974
        %v1976 = vpop.f32.mrf.mxu0
        %v1977 = vadd.f32 %v1743, %v1976
        %1978 = vmatprep.mubr.f32.mxu0 0.0
        %1979 = vmatmul.mubr.f32.gmra.mxu0 %v1396
        %v1980 = vpop.f32.mrf.mxu0
        %v1981 = vadd.f32 %v1739, %v1980
        %v1982 = vpop.f32.mrf.mxu0
        %v1983 = vadd.f32 %v1743, %v1982
        %1984 = vmatprep.mubr.f32.mxu0 0.0
        %1985 = vmatmul.mubr.f32.gmra.mxu0 %v1401
        %v1986 = vpop.f32.mrf.mxu0
        %v1987 = vadd.f32 %v1739, %v1986
        %v1988 = vpop.f32.mrf.mxu0
        %v1989 = vadd.f32 %v1743, %v1988
        %1990 = vmatprep.mubr.f32.mxu0 0.0
        %1991 = vmatmul.mubr.f32.gmra.mxu0 %v1406
        %v1992 = vpop.f32.mrf.mxu0
        %v1993 = vadd.f32 %v1739, %v1992
        %v1994 = vpop.f32.mrf.mxu0
        %v1995 = vadd.f32 %v1743, %v1994
        %1996 = vmatprep.mubr.f32.mxu0 0.0
        %1997 = vmatmul.mubr.f32.gmra.mxu0 %v1411
        %v1998 = vpop.f32.mrf.mxu0
        %v1999 = vadd.f32 %v1739, %v1998
        %v2000 = vpop.f32.mrf.mxu0
        %v2001 = vadd.f32 %v1743, %v2000
        %2002 = vmatprep.mubr.f32.mxu0 0.0
        %2003 = vmatmul.mubr.f32.gmra.mxu0 %v1416
        %v2004 = vpop.f32.mrf.mxu0
        %v2005 = vadd.f32 %v1739, %v2004
        %v2006 = vpop.f32.mrf.mxu0
        %v2007 = vadd.f32 %v1743, %v2006
        %2008 = vmatprep.mubr.f32.mxu0 0.0
        %2009 = vmatmul.mubr.f32.gmra.mxu0 %v1421
        %v2010 = vpop.f32.mrf.mxu0
        %v2011 = vadd.f32 %v1739, %v2010
        %v2012 = vpop.f32.mrf.mxu0
        %v2013 = vadd.f32 %v1743, %v2012
        %2014 = vmatprep.mubr.f32.mxu0 0.0
        %2015 = vmatmul.mubr.f32.gmra.mxu0 %v1426
        %v2016 = vpop.f32.mrf.mxu0
        %v2017 = vadd.f32 %v1739, %v2016
        %v2018 = vpop.f32.mrf.mxu0
        %v2019 = vadd.f32 %v1743, %v2018
        %2020 = vmatprep.mubr.f32.mxu0 0.0
        %2021 = vmatmul.mubr.f32.gmra.mxu0 %v1431
        %v2022 = vpop.f32.mrf.mxu0
        %v2023 = vadd.f32 %v1739, %v2022
        %v2024 = vpop.f32.mrf.mxu0
        %v2025 = vadd.f32 %v1743, %v2024
        %2026 = vmatprep.mubr.f32.mxu0 0.0
        %2027 = vmatmul.mubr.f32.gmra.mxu0 %v1436
        %v2028 = vpop.f32.mrf.mxu0
        %v2029 = vadd.f32 %v1739, %v2028
        %v2030 = vpop.f32.mrf.mxu0
        %v2031 = vadd.f32 %v1743, %v2030
        %2032 = vmatprep.mubr.f32.mxu0 0.0
        %2033 = vmatmul.mubr.f32.gmra.mxu0 %v1441
        %v2034 = vpop.f32.mrf.mxu0
        %v2035 = vadd.f32 %v1739, %v2034
        %v2036 = vpop.f32.mrf.mxu0
        %v2037 = vadd.f32 %v1743, %v2036
        %2038 = vmatprep.mubr.f32.mxu0 0.0
        %2039 = vmatmul.mubr.f32.gmra.mxu0 %v1446
        %v2040 = vpop.f32.mrf.mxu0
        %v2041 = vadd.f32 %v1739, %v2040
        %v2042 = vpop.f32.mrf.mxu0
        %v2043 = vadd.f32 %v1743, %v2042
        %2044 = vmatprep.mubr.f32.mxu0 0.0
        %2045 = vmatmul.mubr.f32.gmra.mxu0 %v1451
        %v2046 = vpop.f32.mrf.mxu0
        %v2047 = vadd.f32 %v1739, %v2046
        %v2048 = vpop.f32.mrf.mxu0
        %v2049 = vadd.f32 %v1743, %v2048
        %2050 = vmatprep.mubr.f32.mxu0 0.0
        %2051 = vmatmul.mubr.f32.gmra.mxu0 %v1456
        %v2052 = vpop.f32.mrf.mxu0
        %v2053 = vadd.f32 %v1739, %v2052
        %v2054 = vpop.f32.mrf.mxu0
        %v2055 = vadd.f32 %v1743, %v2054
        %2056 = vmatprep.mubr.f32.mxu0 0.0
        %2057 = vmatmul.mubr.f32.gmra.mxu0 %v1461
        %v2058 = vpop.f32.mrf.mxu0
        %v2059 = vadd.f32 %v1739, %v2058
        %v2060 = vpop.f32.mrf.mxu0
        %v2061 = vadd.f32 %v1743, %v2060
        %2062 = vmatprep.mubr.f32.mxu0 0.0
        %2063 = vmatmul.mubr.f32.gmra.mxu0 %v1466
        %v2064 = vpop.f32.mrf.mxu0
        %v2065 = vadd.f32 %v1739, %v2064
        %v2066 = vpop.f32.mrf.mxu0
        %v2067 = vadd.f32 %v1743, %v2066
        %2068 = vmatprep.mubr.f32.mxu0 0.0
        %2069 = vmatmul.mubr.f32.gmra.mxu0 %v1471
        %v2070 = vpop.f32.mrf.mxu0
        %v2071 = vadd.f32 %v1739, %v2070
        %v2072 = vpop.f32.mrf.mxu0
        %v2073 = vadd.f32 %v1743, %v2072
        %2074 = vmatprep.mubr.f32.mxu0 0.0
        %2075 = vmatmul.mubr.f32.gmra.mxu0 %v1476
        %v2076 = vpop.f32.mrf.mxu0
        %v2077 = vadd.f32 %v1739, %v2076
        %v2078 = vpop.f32.mrf.mxu0
        %v2079 = vadd.f32 %v1743, %v2078
        %2080 = vmatprep.mubr.f32.mxu0 0.0
        %2081 = vmatmul.mubr.f32.gmra.mxu0 %v1481
        %v2082 = vpop.f32.mrf.mxu0
        %v2083 = vadd.f32 %v1739, %v2082
        %v2084 = vpop.f32.mrf.mxu0
        %v2085 = vadd.f32 %v1743, %v2084
        %2086 = vmatprep.mubr.f32.mxu0 0.0
        %2087 = vmatmul.mubr.f32.gmra.mxu0 %v1486
        %v2088 = vpop.f32.mrf.mxu0
        %v2089 = vadd.f32 %v1739, %v2088
        %v2090 = vpop.f32.mrf.mxu0
        %v2091 = vadd.f32 %v1743, %v2090
        %2092 = vmatprep.mubr.f32.mxu0 0.0
        %2093 = vmatmul.mubr.f32.gmra.mxu0 %v1491
        %v2094 = vpop.f32.mrf.mxu0
        %v2095 = vadd.f32 %v1739, %v2094
        %v2096 = vpop.f32.mrf.mxu0
        %v2097 = vadd.f32 %v1743, %v2096
        %2098 = vmatprep.mubr.f32.mxu0 0.0
        %2099 = vmatmul.mubr.f32.gmra.mxu0 %v1496
        %v2100 = vpop.f32.mrf.mxu0
        %v2101 = vadd.f32 %v1739, %v2100
        %v2102 = vpop.f32.mrf.mxu0
        %v2103 = vadd.f32 %v1743, %v2102
        %2104 = vmatprep.mubr.f32.mxu0 0.0
        %2105 = vmatmul.mubr.f32.gmra.mxu0 %v1501
        %v2106 = vpop.f32.mrf.mxu0
        %v2107 = vadd.f32 %v1739, %v2106
        %v2108 = vpop.f32.mrf.mxu0
        %v2109 = vadd.f32 %v1743, %v2108
        %2110 = vmatprep.mubr.f32.mxu0 0.0
        %2111 = vmatmul.mubr.f32.gmra.mxu0 %v1506
        %v2112 = vpop.f32.mrf.mxu0
        %v2113 = vadd.f32 %v1739, %v2112
        %v2114 = vpop.f32.mrf.mxu0
        %v2115 = vadd.f32 %v1743, %v2114
        %2116 = vmatprep.mubr.f32.mxu0 0.0
        %2117 = vmatmul.mubr.f32.gmra.mxu0 %v1511
        %v2118 = vpop.f32.mrf.mxu0
        %v2119 = vadd.f32 %v1739, %v2118
        %v2120 = vpop.f32.mrf.mxu0
        %v2121 = vadd.f32 %v1743, %v2120
        %2122 = vmatprep.mubr.f32.mxu0 0.0
        %2123 = vmatmul.mubr.f32.gmra.mxu0 %v1516
        %v2124 = vpop.f32.mrf.mxu0
        %v2125 = vadd.f32 %v1739, %v2124
        %v2126 = vpop.f32.mrf.mxu0
        %v2127 = vadd.f32 %v1743, %v2126
        %2128 = vmatprep.mubr.f32.mxu0 0.0
        %2129 = vmatmul.mubr.f32.gmra.mxu0 %v1521
        %v2130 = vpop.f32.mrf.mxu0
        %v2131 = vadd.f32 %v1739, %v2130
        %v2132 = vpop.f32.mrf.mxu0
        %v2133 = vadd.f32 %v1743, %v2132
        %2134 = vmatprep.mubr.f32.mxu0 0.0
        %2135 = vmatmul.mubr.f32.gmra.mxu0 %v1526
        %v2136 = vpop.f32.mrf.mxu0
        %v2137 = vadd.f32 %v1739, %v2136
        %v2138 = vpop.f32.mrf.mxu0
        %v2139 = vadd.f32 %v1743, %v2138
        %2140 = vmatprep.mubr.f32.mxu0 0.0
        %2141 = vmatmul.mubr.f32.gmra.mxu0 %v1531
        %v2142 = vpop.f32.mrf.mxu0
        %v2143 = vadd.f32 %v1739, %v2142
        %v2144 = vpop.f32.mrf.mxu0
        %v2145 = vadd.f32 %v1743, %v2144
        %2146 = vmatprep.mubr.f32.mxu0 0.0
        %2147 = vmatmul.mubr.f32.gmra.mxu0 %v1536
        %v2148 = vpop.f32.mrf.mxu0
        %v2149 = vadd.f32 %v1739, %v2148
        %v2150 = vpop.f32.mrf.mxu0
        %v2151 = vadd.f32 %v1743, %v2150
        %2152 = vmatprep.mubr.f32.mxu0 0.0
        %2153 = vmatmul.mubr.f32.gmra.mxu0 %v1541
        %v2154 = vpop.f32.mrf.mxu0
        %v2155 = vadd.f32 %v1739, %v2154
        %v2156 = vpop.f32.mrf.mxu0
        %v2157 = vadd.f32 %v1743, %v2156
        %2158 = vmatprep.mubr.f32.mxu0 0.0
        %2159 = vmatmul.mubr.f32.gmra.mxu0 %v1546
        %v2160 = vpop.f32.mrf.mxu0
        %v2161 = vadd.f32 %v1739, %v2160
        %v2162 = vpop.f32.mrf.mxu0
        %v2163 = vadd.f32 %v1743, %v2162
        %2164 = vmatprep.mubr.f32.mxu0 0.0
        %2165 = vmatmul.mubr.f32.gmra.mxu0 %v1551
        %v2166 = vpop.f32.mrf.mxu0
        %v2167 = vadd.f32 %v1739, %v2166
        %v2168 = vpop.f32.mrf.mxu0
        %v2169 = vadd.f32 %v1743, %v2168
        %2170 = vmatprep.mubr.f32.mxu0 0.0
        %2171 = vmatmul.mubr.f32.gmra.mxu0 %v1556
        %v2172 = vpop.f32.mrf.mxu0
        %v2173 = vadd.f32 %v1739, %v2172
        %v2174 = vpop.f32.mrf.mxu0
        %v2175 = vadd.f32 %v1743, %v2174
        %2176 = vmatprep.mubr.f32.mxu0 0.0
        %2177 = vmatmul.mubr.f32.gmra.mxu0 %v1561
        %v2178 = vpop.f32.mrf.mxu0
        %v2179 = vadd.f32 %v1739, %v2178
        %v2180 = vpop.f32.mrf.mxu0
        %v2181 = vadd.f32 %v1743, %v2180
        %2182 = vmatprep.mubr.f32.mxu0 0.0
        %2183 = vmatmul.mubr.f32.gmra.mxu0 %v1566
        %v2184 = vpop.f32.mrf.mxu0
        %v2185 = vadd.f32 %v1739, %v2184
        %v2186 = vpop.f32.mrf.mxu0
        %v2187 = vadd.f32 %v1743, %v2186
        %2188 = vmatprep.mubr.f32.mxu0 0.0
        %2189 = vmatmul.mubr.f32.gmra.mxu0 %v1571
        %v2190 = vpop.f32.mrf.mxu0
        %v2191 = vadd.f32 %v1739, %v2190
        %v2192 = vpop.f32.mrf.mxu0
        %v2193 = vadd.f32 %v1743, %v2192
        %2194 = vdwg.mxu0
        %v2195 = vmax.f32 %v1813, 0.0
        %v2196 = vmax.f32 %v1815, 0.0
        %v2197 = vmax.f32 %v1819, 0.0
        %v2198 = vmax.f32 %v1821, 0.0
        %v2199 = vmax.f32 %v1825, 0.0
        %v2200 = vmax.f32 %v1827, 0.0
        %v2201 = vmax.f32 %v1831, 0.0
        %v2202 = vmax.f32 %v1833, 0.0
        %v2203 = vmax.f32 %v1837, 0.0
        %v2204 = vmax.f32 %v1839, 0.0
        %v2205 = vmax.f32 %v1843, 0.0
        %v2206 = vmax.f32 %v1845, 0.0
        %v2207 = vmax.f32 %v1849, 0.0
        %v2208 = vmax.f32 %v1851, 0.0
        %v2209 = vmax.f32 %v1855, 0.0
        %v2210 = vmax.f32 %v1857, 0.0
        %v2211 = vmax.f32 %v1861, 0.0
        %v2212 = vmax.f32 %v1863, 0.0
        %v2213 = vmax.f32 %v1867, 0.0
        %v2214 = vmax.f32 %v1869, 0.0
        %v2215 = vmax.f32 %v1873, 0.0
        %v2216 = vmax.f32 %v1875, 0.0
        %v2217 = vmax.f32 %v1879, 0.0
        %v2218 = vmax.f32 %v1881, 0.0
        %v2219 = vmax.f32 %v1885, 0.0
        %v2220 = vmax.f32 %v1887, 0.0
        %v2221 = vmax.f32 %v1891, 0.0
        %v2222 = vmax.f32 %v1893, 0.0
        %v2223 = vmax.f32 %v1897, 0.0
        %v2224 = vmax.f32 %v1899, 0.0
        %v2225 = vmax.f32 %v1903, 0.0
        %v2226 = vmax.f32 %v1905, 0.0
        %v2227 = vmax.f32 %v1909, 0.0
        %v2228 = vmax.f32 %v1911, 0.0
        %v2229 = vmax.f32 %v1915, 0.0
        %v2230 = vmax.f32 %v1917, 0.0
        %v2231 = vmax.f32 %v1921, 0.0
        %v2232 = vmax.f32 %v1923, 0.0
        %v2233 = vmax.f32 %v1927, 0.0
        %v2234 = vmax.f32 %v1929, 0.0
        %v2235 = vmax.f32 %v1933, 0.0
        %v2236 = vmax.f32 %v1935, 0.0
        %v2237 = vmax.f32 %v1939, 0.0
        %v2238 = vmax.f32 %v1941, 0.0
        %v2239 = vmax.f32 %v1945, 0.0
        %v2240 = vmax.f32 %v1947, 0.0
        %v2241 = vmax.f32 %v1951, 0.0
        %v2242 = vmax.f32 %v1953, 0.0
        %v2243 = vmax.f32 %v1957, 0.0
        %v2244 = vmax.f32 %v1959, 0.0
        %v2245 = vmax.f32 %v1963, 0.0
        %v2246 = vmax.f32 %v1965, 0.0
        %v2247 = vmax.f32 %v1969, 0.0
        %v2248 = vmax.f32 %v1971, 0.0
        %v2249 = vmax.f32 %v1975, 0.0
        %v2250 = vmax.f32 %v1977, 0.0
        %v2251 = vmax.f32 %v1981, 0.0
        %v2252 = vmax.f32 %v1983, 0.0
        %v2253 = vmax.f32 %v1987, 0.0
        %v2254 = vmax.f32 %v1989, 0.0
        %v2255 = vmax.f32 %v1993, 0.0
        %v2256 = vmax.f32 %v1995, 0.0
        %v2257 = vmax.f32 %v1999, 0.0
        %v2258 = vmax.f32 %v2001, 0.0
        %v2259 = vmax.f32 %v2005, 0.0
        %v2260 = vmax.f32 %v2007, 0.0
        %v2261 = vmax.f32 %v2011, 0.0
        %v2262 = vmax.f32 %v2013, 0.0
        %v2263 = vmax.f32 %v2017, 0.0
        %v2264 = vmax.f32 %v2019, 0.0
        %v2265 = vmax.f32 %v2023, 0.0
        %v2266 = vmax.f32 %v2025, 0.0
        %v2267 = vmax.f32 %v2029, 0.0
        %v2268 = vmax.f32 %v2031, 0.0
        %v2269 = vmax.f32 %v2035, 0.0
        %v2270 = vmax.f32 %v2037, 0.0
        %v2271 = vmax.f32 %v2041, 0.0
        %v2272 = vmax.f32 %v2043, 0.0
        %v2273 = vmax.f32 %v2047, 0.0
        %v2274 = vmax.f32 %v2049, 0.0
        %v2275 = vmax.f32 %v2053, 0.0
        %v2276 = vmax.f32 %v2055, 0.0
        %v2277 = vmax.f32 %v2059, 0.0
        %v2278 = vmax.f32 %v2061, 0.0
        %v2279 = vmax.f32 %v2065, 0.0
        %v2280 = vmax.f32 %v2067, 0.0
        %v2281 = vmax.f32 %v2071, 0.0
        %v2282 = vmax.f32 %v2073, 0.0
        %v2283 = vmax.f32 %v2077, 0.0
        %v2284 = vmax.f32 %v2079, 0.0
        %v2285 = vmax.f32 %v2083, 0.0
        %v2286 = vmax.f32 %v2085, 0.0
        %v2287 = vmax.f32 %v2089, 0.0
        %v2288 = vmax.f32 %v2091, 0.0
        %v2289 = vmax.f32 %v2095, 0.0
        %v2290 = vmax.f32 %v2097, 0.0
        %v2291 = vmax.f32 %v2101, 0.0
        %v2292 = vmax.f32 %v2103, 0.0
        %v2293 = vmax.f32 %v2107, 0.0
        %v2294 = vmax.f32 %v2109, 0.0
        %v2295 = vmax.f32 %v2113, 0.0
        %v2296 = vmax.f32 %v2115, 0.0
        %v2297 = vmax.f32 %v2119, 0.0
        %v2298 = vmax.f32 %v2121, 0.0
        %v2299 = vmax.f32 %v2125, 0.0
        %v2300 = vmax.f32 %v2127, 0.0
        %v2301 = vmax.f32 %v2131, 0.0
        %v2302 = vmax.f32 %v2133, 0.0
        %v2303 = vmax.f32 %v2137, 0.0
        %v2304 = vmax.f32 %v2139, 0.0
        %v2305 = vmax.f32 %v2143, 0.0
        %v2306 = vmax.f32 %v2145, 0.0
        %v2307 = vmax.f32 %v2149, 0.0
        %v2308 = vmax.f32 %v2151, 0.0
        %v2309 = vmax.f32 %v2155, 0.0
        %v2310 = vmax.f32 %v2157, 0.0
        %v2311 = vmax.f32 %v2161, 0.0
        %v2312 = vmax.f32 %v2163, 0.0
        %v2313 = vmax.f32 %v2167, 0.0
        %v2314 = vmax.f32 %v2169, 0.0
        %v2315 = vmax.f32 %v2173, 0.0
        %v2316 = vmax.f32 %v2175, 0.0
        %v2317 = vmax.f32 %v2179, 0.0
        %v2318 = vmax.f32 %v2181, 0.0
        %v2319 = vmax.f32 %v2185, 0.0
        %v2320 = vmax.f32 %v2187, 0.0
        %v2321 = vmax.f32 %v2191, 0.0
        %v2322 = vmax.f32 %v2193, 0.0
        %v2323 = vld [vmem:[#allocation8] sm:$0xff]
        %v2324 = vld [vmem:[#allocation8 + $0x8] sm:$0xff]
        %v2325 = vld [vmem:[#allocation8 + $0x10] sm:$0xff]
        %v2326 = vld [vmem:[#allocation8 + $0x18] sm:$0xff]
        %v2327 = vld [vmem:[#allocation8 + $0x20] sm:$0xff]
        %v2328 = vld [vmem:[#allocation8 + $0x28] sm:$0xff]
        %v2329 = vld [vmem:[#allocation8 + $0x30] sm:$0xff]
        %v2330 = vld [vmem:[#allocation8 + $0x38] sm:$0xff]
        %v2331 = vld [vmem:[#allocation8 + $0x40] sm:$0xff]
        %v2332 = vld [vmem:[#allocation8 + $0x48] sm:$0xff]
        %v2333 = vld [vmem:[#allocation8 + $0x50] sm:$0xff]
        %v2334 = vld [vmem:[#allocation8 + $0x58] sm:$0xff]
        %v2335 = vld [vmem:[#allocation8 + $0x60] sm:$0xff]
        %v2336 = vld [vmem:[#allocation8 + $0x68] sm:$0xff]
        %v2337 = vld [vmem:[#allocation8 + $0x70] sm:$0xff]
        %v2338 = vld [vmem:[#allocation8 + $0x78] sm:$0xff]
        %v2339 = vld [vmem:[#allocation8 + $0x80] sm:$0xff]
        %v2340 = vld [vmem:[#allocation8 + $0x88] sm:$0xff]
        %v2341 = vld [vmem:[#allocation8 + $0x90] sm:$0xff]
        %v2342 = vld [vmem:[#allocation8 + $0x98] sm:$0xff]
        %v2343 = vld [vmem:[#allocation8 + $0xa0] sm:$0xff]
        %v2344 = vld [vmem:[#allocation8 + $0xa8] sm:$0xff]
        %v2345 = vld [vmem:[#allocation8 + $0xb0] sm:$0xff]
        %v2346 = vld [vmem:[#allocation8 + $0xb8] sm:$0xff]
        %v2347 = vld [vmem:[#allocation8 + $0xc0] sm:$0xff]
        %v2348 = vld [vmem:[#allocation8 + $0xc8] sm:$0xff]
        %v2349 = vld [vmem:[#allocation8 + $0xd0] sm:$0xff]
        %v2350 = vld [vmem:[#allocation8 + $0xd8] sm:$0xff]
        %v2351 = vld [vmem:[#allocation8 + $0xe0] sm:$0xff]
        %v2352 = vld [vmem:[#allocation8 + $0xe8] sm:$0xff]
        %v2353 = vld [vmem:[#allocation8 + $0xf0] sm:$0xff]
        %v2354 = vld [vmem:[#allocation8 + $0xf8] sm:$0xff]
        %v2355 = vld [vmem:[%s10] sm:$0x1]
        %v2357 = vlaneseq
        %v2358 = vshrl.u32 %v2357, 7
        %v2359 = vsub.s32 0, %v2358
        %v2360 = vrot.slane %v2355, %v2359
        %2362 = vmatprep.subr.mxu0 0.0
        %2363 = vmatpush1.msra.mxu0 %v2338
        %2364 = vmatprep.subr.mxu0 0.0
        %2365 = vmatpush1.msra.mxu0 %v2337
        %2366 = vmatprep.subr.mxu0 0.0
        %2367 = vmatpush1.msra.mxu0 %v2336
        %2368 = vmatprep.subr.mxu0 0.0
        %2369 = vmatpush1.msra.mxu0 %v2335
        %2370 = vmatprep.subr.mxu0 0.0
        %2371 = vmatpush1.msra.mxu0 %v2334
        %2372 = vmatprep.subr.mxu0 0.0
        %2373 = vmatpush1.msra.mxu0 %v2333
        %2374 = vmatprep.subr.mxu0 0.0
        %2375 = vmatpush1.msra.mxu0 %v2332
        %2376 = vmatprep.subr.mxu0 0.0
        %2377 = vmatpush1.msra.mxu0 %v2331
        %2378 = vmatprep.subr.mxu0 0.0
        %2379 = vmatpush1.msra.mxu0 %v2330
        %2380 = vmatprep.subr.mxu0 0.0
        %2381 = vmatpush1.msra.mxu0 %v2329
        %2382 = vmatprep.subr.mxu0 0.0
        %2383 = vmatpush1.msra.mxu0 %v2328
        %2384 = vmatprep.subr.mxu0 0.0
        %2385 = vmatpush1.msra.mxu0 %v2327
        %2386 = vmatprep.subr.mxu0 0.0
        %2387 = vmatpush1.msra.mxu0 %v2326
        %2388 = vmatprep.subr.mxu0 0.0
        %2389 = vmatpush1.msra.mxu0 %v2325
        %2390 = vmatprep.subr.mxu0 0.0
        %2391 = vmatpush1.msra.mxu0 %v2324
        %2392 = vmatprep.subr.mxu0 0.0
        %2393 = vmatpush1.msra.mxu0 %v2323
        %2394 = vmatprep.subr.mxu0 0.0
        %2395 = vmatpush2.msra.mxu0 %v2354
        %2396 = vmatprep.subr.mxu0 0.0
        %2397 = vmatpush2.msra.mxu0 %v2353
        %2398 = vmatprep.subr.mxu0 0.0
        %2399 = vmatpush2.msra.mxu0 %v2352
        %2400 = vmatprep.subr.mxu0 0.0
        %2401 = vmatpush2.msra.mxu0 %v2351
        %2402 = vmatprep.subr.mxu0 0.0
        %2403 = vmatpush2.msra.mxu0 %v2350
        %2404 = vmatprep.subr.mxu0 0.0
        %2405 = vmatpush2.msra.mxu0 %v2349
        %2406 = vmatprep.subr.mxu0 0.0
        %2407 = vmatpush2.msra.mxu0 %v2348
        %2408 = vmatprep.subr.mxu0 0.0
        %2409 = vmatpush2.msra.mxu0 %v2347
        %2410 = vmatprep.subr.mxu0 0.0
        %2411 = vmatpush2.msra.mxu0 %v2346
        %2412 = vmatprep.subr.mxu0 0.0
        %2413 = vmatpush2.msra.mxu0 %v2345
        %2414 = vmatprep.subr.mxu0 0.0
        %2415 = vmatpush2.msra.mxu0 %v2344
        %2416 = vmatprep.subr.mxu0 0.0
        %2417 = vmatpush2.msra.mxu0 %v2343
        %2418 = vmatprep.subr.mxu0 0.0
        %2419 = vmatpush2.msra.mxu0 %v2342
        %2420 = vmatprep.subr.mxu0 0.0
        %2421 = vmatpush2.msra.mxu0 %v2341
        %2422 = vmatprep.subr.mxu0 0.0
        %2423 = vmatpush2.msra.mxu0 %v2340
        %2424 = vmatprep.subr.mxu0 0.0
        %2425 = vmatpush2.msra.mxu0 %v2339
        %2426 = vmatprep.mubr.f32.mxu0 %v2196
        %2427 = vmatmul.mubr.f32.gmra.mxu0 %v2195
        %v2428 = vpop.f32.mrf.mxu0
        %v2429 = vadd.f32 %v2360, %v2428
        %v2430 = vpop.f32.mrf.mxu0
        %2431 = vmatprep.mubr.f32.mxu0 %v2198
        %2432 = vmatmul.mubr.f32.gmra.mxu0 %v2197
        %v2433 = vpop.f32.mrf.mxu0
        %v2434 = vadd.f32 %v2360, %v2433
        %v2435 = vpop.f32.mrf.mxu0
        %2436 = vmatprep.mubr.f32.mxu0 %v2200
        %2437 = vmatmul.mubr.f32.gmra.mxu0 %v2199
        %v2438 = vpop.f32.mrf.mxu0
        %v2439 = vadd.f32 %v2360, %v2438
        %v2440 = vpop.f32.mrf.mxu0
        %2441 = vmatprep.mubr.f32.mxu0 %v2202
        %2442 = vmatmul.mubr.f32.gmra.mxu0 %v2201
        %v2443 = vpop.f32.mrf.mxu0
        %v2444 = vadd.f32 %v2360, %v2443
        %v2445 = vpop.f32.mrf.mxu0
        %2446 = vmatprep.mubr.f32.mxu0 %v2204
        %2447 = vmatmul.mubr.f32.gmra.mxu0 %v2203
        %v2448 = vpop.f32.mrf.mxu0
        %v2449 = vadd.f32 %v2360, %v2448
        %v2450 = vpop.f32.mrf.mxu0
        %2451 = vmatprep.mubr.f32.mxu0 %v2206
        %2452 = vmatmul.mubr.f32.gmra.mxu0 %v2205
        %v2453 = vpop.f32.mrf.mxu0
        %v2454 = vadd.f32 %v2360, %v2453
        %v2455 = vpop.f32.mrf.mxu0
        %2456 = vmatprep.mubr.f32.mxu0 %v2208
        %2457 = vmatmul.mubr.f32.gmra.mxu0 %v2207
        %v2458 = vpop.f32.mrf.mxu0
        %v2459 = vadd.f32 %v2360, %v2458
        %v2460 = vpop.f32.mrf.mxu0
        %2461 = vmatprep.mubr.f32.mxu0 %v2210
        %2462 = vmatmul.mubr.f32.gmra.mxu0 %v2209
        %v2463 = vpop.f32.mrf.mxu0
        %v2464 = vadd.f32 %v2360, %v2463
        %v2465 = vpop.f32.mrf.mxu0
        %2466 = vmatprep.mubr.f32.mxu0 %v2212
        %2467 = vmatmul.mubr.f32.gmra.mxu0 %v2211
        %v2468 = vpop.f32.mrf.mxu0
        %v2469 = vadd.f32 %v2360, %v2468
        %v2470 = vpop.f32.mrf.mxu0
        %2471 = vmatprep.mubr.f32.mxu0 %v2214
        %2472 = vmatmul.mubr.f32.gmra.mxu0 %v2213
        %v2473 = vpop.f32.mrf.mxu0
        %v2474 = vadd.f32 %v2360, %v2473
        %v2475 = vpop.f32.mrf.mxu0
        %2476 = vmatprep.mubr.f32.mxu0 %v2216
        %2477 = vmatmul.mubr.f32.gmra.mxu0 %v2215
        %v2478 = vpop.f32.mrf.mxu0
        %v2479 = vadd.f32 %v2360, %v2478
        %v2480 = vpop.f32.mrf.mxu0
        %2481 = vmatprep.mubr.f32.mxu0 %v2218
        %2482 = vmatmul.mubr.f32.gmra.mxu0 %v2217
        %v2483 = vpop.f32.mrf.mxu0
        %v2484 = vadd.f32 %v2360, %v2483
        %v2485 = vpop.f32.mrf.mxu0
        %2486 = vmatprep.mubr.f32.mxu0 %v2220
        %2487 = vmatmul.mubr.f32.gmra.mxu0 %v2219
        %v2488 = vpop.f32.mrf.mxu0
        %v2489 = vadd.f32 %v2360, %v2488
        %v2490 = vpop.f32.mrf.mxu0
        %2491 = vmatprep.mubr.f32.mxu0 %v2222
        %2492 = vmatmul.mubr.f32.gmra.mxu0 %v2221
        %v2493 = vpop.f32.mrf.mxu0
        %v2494 = vadd.f32 %v2360, %v2493
        %v2495 = vpop.f32.mrf.mxu0
        %2496 = vmatprep.mubr.f32.mxu0 %v2224
        %2497 = vmatmul.mubr.f32.gmra.mxu0 %v2223
        %v2498 = vpop.f32.mrf.mxu0
        %v2499 = vadd.f32 %v2360, %v2498
        %v2500 = vpop.f32.mrf.mxu0
        %2501 = vmatprep.mubr.f32.mxu0 %v2226
        %2502 = vmatmul.mubr.f32.gmra.mxu0 %v2225
        %v2503 = vpop.f32.mrf.mxu0
        %v2504 = vadd.f32 %v2360, %v2503
        %v2505 = vpop.f32.mrf.mxu0
        %2506 = vmatprep.mubr.f32.mxu0 %v2228
        %2507 = vmatmul.mubr.f32.gmra.mxu0 %v2227
        %v2508 = vpop.f32.mrf.mxu0
        %v2509 = vadd.f32 %v2360, %v2508
        %v2510 = vpop.f32.mrf.mxu0
        %2511 = vmatprep.mubr.f32.mxu0 %v2230
        %2512 = vmatmul.mubr.f32.gmra.mxu0 %v2229
        %v2513 = vpop.f32.mrf.mxu0
        %v2514 = vadd.f32 %v2360, %v2513
        %v2515 = vpop.f32.mrf.mxu0
        %2516 = vmatprep.mubr.f32.mxu0 %v2232
        %2517 = vmatmul.mubr.f32.gmra.mxu0 %v2231
        %v2518 = vpop.f32.mrf.mxu0
        %v2519 = vadd.f32 %v2360, %v2518
        %v2520 = vpop.f32.mrf.mxu0
        %2521 = vmatprep.mubr.f32.mxu0 %v2234
        %2522 = vmatmul.mubr.f32.gmra.mxu0 %v2233
        %v2523 = vpop.f32.mrf.mxu0
        %v2524 = vadd.f32 %v2360, %v2523
        %v2525 = vpop.f32.mrf.mxu0
        %2526 = vmatprep.mubr.f32.mxu0 %v2236
        %2527 = vmatmul.mubr.f32.gmra.mxu0 %v2235
        %v2528 = vpop.f32.mrf.mxu0
        %v2529 = vadd.f32 %v2360, %v2528
        %v2530 = vpop.f32.mrf.mxu0
        %2531 = vmatprep.mubr.f32.mxu0 %v2238
        %2532 = vmatmul.mubr.f32.gmra.mxu0 %v2237
        %v2533 = vpop.f32.mrf.mxu0
        %v2534 = vadd.f32 %v2360, %v2533
        %v2535 = vpop.f32.mrf.mxu0
        %2536 = vmatprep.mubr.f32.mxu0 %v2240
        %2537 = vmatmul.mubr.f32.gmra.mxu0 %v2239
        %v2538 = vpop.f32.mrf.mxu0
        %v2539 = vadd.f32 %v2360, %v2538
        %v2540 = vpop.f32.mrf.mxu0
        %2541 = vmatprep.mubr.f32.mxu0 %v2242
        %2542 = vmatmul.mubr.f32.gmra.mxu0 %v2241
        %v2543 = vpop.f32.mrf.mxu0
        %v2544 = vadd.f32 %v2360, %v2543
        %v2545 = vpop.f32.mrf.mxu0
        %2546 = vmatprep.mubr.f32.mxu0 %v2244
        %2547 = vmatmul.mubr.f32.gmra.mxu0 %v2243
        %v2548 = vpop.f32.mrf.mxu0
        %v2549 = vadd.f32 %v2360, %v2548
        %v2550 = vpop.f32.mrf.mxu0
        %2551 = vmatprep.mubr.f32.mxu0 %v2246
        %2552 = vmatmul.mubr.f32.gmra.mxu0 %v2245
        %v2553 = vpop.f32.mrf.mxu0
        %v2554 = vadd.f32 %v2360, %v2553
        %v2555 = vpop.f32.mrf.mxu0
        %2556 = vmatprep.mubr.f32.mxu0 %v2248
        %2557 = vmatmul.mubr.f32.gmra.mxu0 %v2247
        %v2558 = vpop.f32.mrf.mxu0
        %v2559 = vadd.f32 %v2360, %v2558
        %v2560 = vpop.f32.mrf.mxu0
        %2561 = vmatprep.mubr.f32.mxu0 %v2250
        %2562 = vmatmul.mubr.f32.gmra.mxu0 %v2249
        %v2563 = vpop.f32.mrf.mxu0
        %v2564 = vadd.f32 %v2360, %v2563
        %v2565 = vpop.f32.mrf.mxu0
        %2566 = vmatprep.mubr.f32.mxu0 %v2252
        %2567 = vmatmul.mubr.f32.gmra.mxu0 %v2251
        %v2568 = vpop.f32.mrf.mxu0
        %v2569 = vadd.f32 %v2360, %v2568
        %v2570 = vpop.f32.mrf.mxu0
        %2571 = vmatprep.mubr.f32.mxu0 %v2254
        %2572 = vmatmul.mubr.f32.gmra.mxu0 %v2253
        %v2573 = vpop.f32.mrf.mxu0
        %v2574 = vadd.f32 %v2360, %v2573
        %v2575 = vpop.f32.mrf.mxu0
        %2576 = vmatprep.mubr.f32.mxu0 %v2256
        %2577 = vmatmul.mubr.f32.gmra.mxu0 %v2255
        %v2578 = vpop.f32.mrf.mxu0
        %v2579 = vadd.f32 %v2360, %v2578
        %v2580 = vpop.f32.mrf.mxu0
        %2581 = vmatprep.mubr.f32.mxu0 %v2258
        %2582 = vmatmul.mubr.f32.gmra.mxu0 %v2257
        %v2583 = vpop.f32.mrf.mxu0
        %v2584 = vadd.f32 %v2360, %v2583
        %v2585 = vpop.f32.mrf.mxu0
        %2586 = vmatprep.mubr.f32.mxu0 %v2260
        %2587 = vmatmul.mubr.f32.gmra.mxu0 %v2259
        %v2588 = vpop.f32.mrf.mxu0
        %v2589 = vadd.f32 %v2360, %v2588
        %v2590 = vpop.f32.mrf.mxu0
        %2591 = vmatprep.mubr.f32.mxu0 %v2262
        %2592 = vmatmul.mubr.f32.gmra.mxu0 %v2261
        %v2593 = vpop.f32.mrf.mxu0
        %v2594 = vadd.f32 %v2360, %v2593
        %v2595 = vpop.f32.mrf.mxu0
        %2596 = vmatprep.mubr.f32.mxu0 %v2264
        %2597 = vmatmul.mubr.f32.gmra.mxu0 %v2263
        %v2598 = vpop.f32.mrf.mxu0
        %v2599 = vadd.f32 %v2360, %v2598
        %v2600 = vpop.f32.mrf.mxu0
        %2601 = vmatprep.mubr.f32.mxu0 %v2266
        %2602 = vmatmul.mubr.f32.gmra.mxu0 %v2265
        %v2603 = vpop.f32.mrf.mxu0
        %v2604 = vadd.f32 %v2360, %v2603
        %v2605 = vpop.f32.mrf.mxu0
        %2606 = vmatprep.mubr.f32.mxu0 %v2268
        %2607 = vmatmul.mubr.f32.gmra.mxu0 %v2267
        %v2608 = vpop.f32.mrf.mxu0
        %v2609 = vadd.f32 %v2360, %v2608
        %v2610 = vpop.f32.mrf.mxu0
        %2611 = vmatprep.mubr.f32.mxu0 %v2270
        %2612 = vmatmul.mubr.f32.gmra.mxu0 %v2269
        %v2613 = vpop.f32.mrf.mxu0
        %v2614 = vadd.f32 %v2360, %v2613
        %v2615 = vpop.f32.mrf.mxu0
        %2616 = vmatprep.mubr.f32.mxu0 %v2272
        %2617 = vmatmul.mubr.f32.gmra.mxu0 %v2271
        %v2618 = vpop.f32.mrf.mxu0
        %v2619 = vadd.f32 %v2360, %v2618
        %v2620 = vpop.f32.mrf.mxu0
        %2621 = vmatprep.mubr.f32.mxu0 %v2274
        %2622 = vmatmul.mubr.f32.gmra.mxu0 %v2273
        %v2623 = vpop.f32.mrf.mxu0
        %v2624 = vadd.f32 %v2360, %v2623
        %v2625 = vpop.f32.mrf.mxu0
        %2626 = vmatprep.mubr.f32.mxu0 %v2276
        %2627 = vmatmul.mubr.f32.gmra.mxu0 %v2275
        %v2628 = vpop.f32.mrf.mxu0
        %v2629 = vadd.f32 %v2360, %v2628
        %v2630 = vpop.f32.mrf.mxu0
        %2631 = vmatprep.mubr.f32.mxu0 %v2278
        %2632 = vmatmul.mubr.f32.gmra.mxu0 %v2277
        %v2633 = vpop.f32.mrf.mxu0
        %v2634 = vadd.f32 %v2360, %v2633
        %v2635 = vpop.f32.mrf.mxu0
        %2636 = vmatprep.mubr.f32.mxu0 %v2280
        %2637 = vmatmul.mubr.f32.gmra.mxu0 %v2279
        %v2638 = vpop.f32.mrf.mxu0
        %v2639 = vadd.f32 %v2360, %v2638
        %v2640 = vpop.f32.mrf.mxu0
        %2641 = vmatprep.mubr.f32.mxu0 %v2282
        %2642 = vmatmul.mubr.f32.gmra.mxu0 %v2281
        %v2643 = vpop.f32.mrf.mxu0
        %v2644 = vadd.f32 %v2360, %v2643
        %v2645 = vpop.f32.mrf.mxu0
        %2646 = vmatprep.mubr.f32.mxu0 %v2284
        %2647 = vmatmul.mubr.f32.gmra.mxu0 %v2283
        %v2648 = vpop.f32.mrf.mxu0
        %v2649 = vadd.f32 %v2360, %v2648
        %v2650 = vpop.f32.mrf.mxu0
        %2651 = vmatprep.mubr.f32.mxu0 %v2286
        %2652 = vmatmul.mubr.f32.gmra.mxu0 %v2285
        %v2653 = vpop.f32.mrf.mxu0
        %v2654 = vadd.f32 %v2360, %v2653
        %v2655 = vpop.f32.mrf.mxu0
        %2656 = vmatprep.mubr.f32.mxu0 %v2288
        %2657 = vmatmul.mubr.f32.gmra.mxu0 %v2287
        %v2658 = vpop.f32.mrf.mxu0
        %v2659 = vadd.f32 %v2360, %v2658
        %v2660 = vpop.f32.mrf.mxu0
        %2661 = vmatprep.mubr.f32.mxu0 %v2290
        %2662 = vmatmul.mubr.f32.gmra.mxu0 %v2289
        %v2663 = vpop.f32.mrf.mxu0
        %v2664 = vadd.f32 %v2360, %v2663
        %v2665 = vpop.f32.mrf.mxu0
        %2666 = vmatprep.mubr.f32.mxu0 %v2292
        %2667 = vmatmul.mubr.f32.gmra.mxu0 %v2291
        %v2668 = vpop.f32.mrf.mxu0
        %v2669 = vadd.f32 %v2360, %v2668
        %v2670 = vpop.f32.mrf.mxu0
        %2671 = vmatprep.mubr.f32.mxu0 %v2294
        %2672 = vmatmul.mubr.f32.gmra.mxu0 %v2293
        %v2673 = vpop.f32.mrf.mxu0
        %v2674 = vadd.f32 %v2360, %v2673
        %v2675 = vpop.f32.mrf.mxu0
        %2676 = vmatprep.mubr.f32.mxu0 %v2296
        %2677 = vmatmul.mubr.f32.gmra.mxu0 %v2295
        %v2678 = vpop.f32.mrf.mxu0
        %v2679 = vadd.f32 %v2360, %v2678
        %v2680 = vpop.f32.mrf.mxu0
        %2681 = vmatprep.mubr.f32.mxu0 %v2298
        %2682 = vmatmul.mubr.f32.gmra.mxu0 %v2297
        %v2683 = vpop.f32.mrf.mxu0
        %v2684 = vadd.f32 %v2360, %v2683
        %v2685 = vpop.f32.mrf.mxu0
        %2686 = vmatprep.mubr.f32.mxu0 %v2300
        %2687 = vmatmul.mubr.f32.gmra.mxu0 %v2299
        %v2688 = vpop.f32.mrf.mxu0
        %v2689 = vadd.f32 %v2360, %v2688
        %v2690 = vpop.f32.mrf.mxu0
        %2691 = vmatprep.mubr.f32.mxu0 %v2302
        %2692 = vmatmul.mubr.f32.gmra.mxu0 %v2301
        %v2693 = vpop.f32.mrf.mxu0
        %v2694 = vadd.f32 %v2360, %v2693
        %v2695 = vpop.f32.mrf.mxu0
        %2696 = vmatprep.mubr.f32.mxu0 %v2304
        %2697 = vmatmul.mubr.f32.gmra.mxu0 %v2303
        %v2698 = vpop.f32.mrf.mxu0
        %v2699 = vadd.f32 %v2360, %v2698
        %v2700 = vpop.f32.mrf.mxu0
        %2701 = vmatprep.mubr.f32.mxu0 %v2306
        %2702 = vmatmul.mubr.f32.gmra.mxu0 %v2305
        %v2703 = vpop.f32.mrf.mxu0
        %v2704 = vadd.f32 %v2360, %v2703
        %v2705 = vpop.f32.mrf.mxu0
        %2706 = vmatprep.mubr.f32.mxu0 %v2308
        %2707 = vmatmul.mubr.f32.gmra.mxu0 %v2307
        %v2708 = vpop.f32.mrf.mxu0
        %v2709 = vadd.f32 %v2360, %v2708
        %v2710 = vpop.f32.mrf.mxu0
        %2711 = vmatprep.mubr.f32.mxu0 %v2310
        %2712 = vmatmul.mubr.f32.gmra.mxu0 %v2309
        %v2713 = vpop.f32.mrf.mxu0
        %v2714 = vadd.f32 %v2360, %v2713
        %v2715 = vpop.f32.mrf.mxu0
        %2716 = vmatprep.mubr.f32.mxu0 %v2312
        %2717 = vmatmul.mubr.f32.gmra.mxu0 %v2311
        %v2718 = vpop.f32.mrf.mxu0
        %v2719 = vadd.f32 %v2360, %v2718
        %v2720 = vpop.f32.mrf.mxu0
        %2721 = vmatprep.mubr.f32.mxu0 %v2314
        %2722 = vmatmul.mubr.f32.gmra.mxu0 %v2313
        %v2723 = vpop.f32.mrf.mxu0
        %v2724 = vadd.f32 %v2360, %v2723
        %v2725 = vpop.f32.mrf.mxu0
        %2726 = vmatprep.mubr.f32.mxu0 %v2316
        %2727 = vmatmul.mubr.f32.gmra.mxu0 %v2315
        %v2728 = vpop.f32.mrf.mxu0
        %v2729 = vadd.f32 %v2360, %v2728
        %v2730 = vpop.f32.mrf.mxu0
        %2731 = vmatprep.mubr.f32.mxu0 %v2318
        %2732 = vmatmul.mubr.f32.gmra.mxu0 %v2317
        %v2733 = vpop.f32.mrf.mxu0
        %v2734 = vadd.f32 %v2360, %v2733
        %v2735 = vpop.f32.mrf.mxu0
        %2736 = vmatprep.mubr.f32.mxu0 %v2320
        %2737 = vmatmul.mubr.f32.gmra.mxu0 %v2319
        %v2738 = vpop.f32.mrf.mxu0
        %v2739 = vadd.f32 %v2360, %v2738
        %v2740 = vpop.f32.mrf.mxu0
        %2741 = vmatprep.mubr.f32.mxu0 %v2322
        %2742 = vmatmul.mubr.f32.gmra.mxu0 %v2321
        %v2743 = vpop.f32.mrf.mxu0
        %v2744 = vadd.f32 %v2360, %v2743
        %v2745 = vpop.f32.mrf.mxu0
        %2746 = vdwg.mxu0
        %v2747 = vmax.f32 %v2429, 0.0
        %v2748 = vmax.f32 %v2434, 0.0
        %v2749 = vmax.f32 %v2439, 0.0
        %v2750 = vmax.f32 %v2444, 0.0
        %v2751 = vmax.f32 %v2449, 0.0
        %v2752 = vmax.f32 %v2454, 0.0
        %v2753 = vmax.f32 %v2459, 0.0
        %v2754 = vmax.f32 %v2464, 0.0
        %v2755 = vmax.f32 %v2469, 0.0
        %v2756 = vmax.f32 %v2474, 0.0
        %v2757 = vmax.f32 %v2479, 0.0
        %v2758 = vmax.f32 %v2484, 0.0
        %v2759 = vmax.f32 %v2489, 0.0
        %v2760 = vmax.f32 %v2494, 0.0
        %v2761 = vmax.f32 %v2499, 0.0
        %v2762 = vmax.f32 %v2504, 0.0
        %v2763 = vmax.f32 %v2509, 0.0
        %v2764 = vmax.f32 %v2514, 0.0
        %v2765 = vmax.f32 %v2519, 0.0
        %v2766 = vmax.f32 %v2524, 0.0
        %v2767 = vmax.f32 %v2529, 0.0
        %v2768 = vmax.f32 %v2534, 0.0
        %v2769 = vmax.f32 %v2539, 0.0
        %v2770 = vmax.f32 %v2544, 0.0
        %v2771 = vmax.f32 %v2549, 0.0
        %v2772 = vmax.f32 %v2554, 0.0
        %v2773 = vmax.f32 %v2559, 0.0
        %v2774 = vmax.f32 %v2564, 0.0
        %v2775 = vmax.f32 %v2569, 0.0
        %v2776 = vmax.f32 %v2574, 0.0
        %v2777 = vmax.f32 %v2579, 0.0
        %v2778 = vmax.f32 %v2584, 0.0
        %v2779 = vmax.f32 %v2589, 0.0
        %v2780 = vmax.f32 %v2594, 0.0
        %v2781 = vmax.f32 %v2599, 0.0
        %v2782 = vmax.f32 %v2604, 0.0
        %v2783 = vmax.f32 %v2609, 0.0
        %v2784 = vmax.f32 %v2614, 0.0
        %v2785 = vmax.f32 %v2619, 0.0
        %v2786 = vmax.f32 %v2624, 0.0
        %v2787 = vmax.f32 %v2629, 0.0
        %v2788 = vmax.f32 %v2634, 0.0
        %v2789 = vmax.f32 %v2639, 0.0
        %v2790 = vmax.f32 %v2644, 0.0
        %v2791 = vmax.f32 %v2649, 0.0
        %v2792 = vmax.f32 %v2654, 0.0
        %v2793 = vmax.f32 %v2659, 0.0
        %v2794 = vmax.f32 %v2664, 0.0
        %v2795 = vmax.f32 %v2669, 0.0
        %v2796 = vmax.f32 %v2674, 0.0
        %v2797 = vmax.f32 %v2679, 0.0
        %v2798 = vmax.f32 %v2684, 0.0
        %v2799 = vmax.f32 %v2689, 0.0
        %v2800 = vmax.f32 %v2694, 0.0
        %v2801 = vmax.f32 %v2699, 0.0
        %v2802 = vmax.f32 %v2704, 0.0
        %v2803 = vmax.f32 %v2709, 0.0
        %v2804 = vmax.f32 %v2714, 0.0
        %v2805 = vmax.f32 %v2719, 0.0
        %v2806 = vmax.f32 %v2724, 0.0
        %v2807 = vmax.f32 %v2729, 0.0
        %v2808 = vmax.f32 %v2734, 0.0
        %v2809 = vmax.f32 %v2739, 0.0
        %v2810 = vmax.f32 %v2744, 0.0
        %v2811 = vld [vmem:[%s11] sm:$0xff]
        %v2812 = vld [vmem:[%s11 + $0x8] sm:$0xff]
        %v2813 = vld [vmem:[%s11 + $0x10] sm:$0xff]
        %v2814 = vld [vmem:[%s11 + $0x18] sm:$0xff]
        %v2815 = vld [vmem:[%s11 + $0x20] sm:$0xff]
        %v2816 = vld [vmem:[%s11 + $0x28] sm:$0xff]
        %v2817 = vld [vmem:[%s11 + $0x30] sm:$0xff]
        %v2818 = vld [vmem:[%s11 + $0x38] sm:$0xff]
        %v2819 = vld [vmem:[%s11 + $0x40] sm:$0xff]
        %v2820 = vld [vmem:[%s11 + $0x48] sm:$0xff]
        %v2821 = vld [vmem:[%s11 + $0x50] sm:$0xff]
        %v2822 = vld [vmem:[%s11 + $0x58] sm:$0xff]
        %v2823 = vld [vmem:[%s11 + $0x60] sm:$0xff]
        %v2824 = vld [vmem:[%s11 + $0x68] sm:$0xff]
        %v2825 = vld [vmem:[%s11 + $0x70] sm:$0xff]
        %v2826 = vld [vmem:[%s11 + $0x78] sm:$0xff]
        %v2827 = vld [vmem:[%s12] sm:$0x1]
        %v2829 = vlaneseq
        %v2830 = vshrl.u32 %v2829, 7
        %v2831 = vsub.s32 0, %v2830
        %v2832 = vrot.slane %v2827, %v2831
        %2834 = vmatprep.subr.mxu0 0.0
        %2835 = vmatpush1.msra.mxu0 %v2826
        %2836 = vmatprep.subr.mxu0 0.0
        %2837 = vmatpush1.msra.mxu0 %v2825
        %2838 = vmatprep.subr.mxu0 0.0
        %2839 = vmatpush1.msra.mxu0 %v2824
        %2840 = vmatprep.subr.mxu0 0.0
        %2841 = vmatpush1.msra.mxu0 %v2823
        %2842 = vmatprep.subr.mxu0 0.0
        %2843 = vmatpush1.msra.mxu0 %v2822
        %2844 = vmatprep.subr.mxu0 0.0
        %2845 = vmatpush1.msra.mxu0 %v2821
        %2846 = vmatprep.subr.mxu0 0.0
        %2847 = vmatpush1.msra.mxu0 %v2820
        %2848 = vmatprep.subr.mxu0 0.0
        %2849 = vmatpush1.msra.mxu0 %v2819
        %2850 = vmatprep.subr.mxu0 0.0
        %2851 = vmatpush1.msra.mxu0 %v2818
        %2852 = vmatprep.subr.mxu0 0.0
        %2853 = vmatpush1.msra.mxu0 %v2817
        %2854 = vmatprep.subr.mxu0 0.0
        %2855 = vmatpush1.msra.mxu0 %v2816
        %2856 = vmatprep.subr.mxu0 0.0
        %2857 = vmatpush1.msra.mxu0 %v2815
        %2858 = vmatprep.subr.mxu0 0.0
        %2859 = vmatpush1.msra.mxu0 %v2814
        %2860 = vmatprep.subr.mxu0 0.0
        %2861 = vmatpush1.msra.mxu0 %v2813
        %2862 = vmatprep.subr.mxu0 0.0
        %2863 = vmatpush1.msra.mxu0 %v2812
        %2864 = vmatprep.subr.mxu0 0.0
        %2865 = vmatpush1.msra.mxu0 %v2811
        %2866 = vmatprep.subr.mxu0 0.0
        %2867 = vmatpush2.msra.mxu0 0.0
        %2868 = vmatprep.subr.mxu0 0.0
        %2869 = vmatpush2.msra.mxu0 0.0
        %2870 = vmatprep.subr.mxu0 0.0
        %2871 = vmatpush2.msra.mxu0 0.0
        %2872 = vmatprep.subr.mxu0 0.0
        %2873 = vmatpush2.msra.mxu0 0.0
        %2874 = vmatprep.subr.mxu0 0.0
        %2875 = vmatpush2.msra.mxu0 0.0
        %2876 = vmatprep.subr.mxu0 0.0
        %2877 = vmatpush2.msra.mxu0 0.0
        %2878 = vmatprep.subr.mxu0 0.0
        %2879 = vmatpush2.msra.mxu0 0.0
        %2880 = vmatprep.subr.mxu0 0.0
        %2881 = vmatpush2.msra.mxu0 0.0
        %2882 = vmatprep.subr.mxu0 0.0
        %2883 = vmatpush2.msra.mxu0 0.0
        %2884 = vmatprep.subr.mxu0 0.0
        %2885 = vmatpush2.msra.mxu0 0.0
        %2886 = vmatprep.subr.mxu0 0.0
        %2887 = vmatpush2.msra.mxu0 0.0
        %2888 = vmatprep.subr.mxu0 0.0
        %2889 = vmatpush2.msra.mxu0 0.0
        %2890 = vmatprep.subr.mxu0 0.0
        %2891 = vmatpush2.msra.mxu0 0.0
        %2892 = vmatprep.subr.mxu0 0.0
        %2893 = vmatpush2.msra.mxu0 0.0
        %2894 = vmatprep.subr.mxu0 0.0
        %2895 = vmatpush2.msra.mxu0 0.0
        %2896 = vmatprep.subr.mxu0 0.0
        %2897 = vmatpush2.msra.mxu0 0.0
        %2898 = vmatprep.mubr.f32.mxu0 0.0
        %2899 = vmatmul.mubr.f32.gmra.mxu0 %v2747
        %v2900 = vpop.f32.mrf.mxu0
        %v2901 = vadd.f32 %v2832, %v2900
        %v2902 = vpop.f32.mrf.mxu0
        %2903 = vmatprep.mubr.f32.mxu0 0.0
        %2904 = vmatmul.mubr.f32.gmra.mxu0 %v2748
        %v2905 = vpop.f32.mrf.mxu0
        %v2906 = vadd.f32 %v2832, %v2905
        %v2907 = vpop.f32.mrf.mxu0
        %2908 = vmatprep.mubr.f32.mxu0 0.0
        %2909 = vmatmul.mubr.f32.gmra.mxu0 %v2749
        %v2910 = vpop.f32.mrf.mxu0
        %v2911 = vadd.f32 %v2832, %v2910
        %v2912 = vpop.f32.mrf.mxu0
        %2913 = vmatprep.mubr.f32.mxu0 0.0
        %2914 = vmatmul.mubr.f32.gmra.mxu0 %v2750
        %v2915 = vpop.f32.mrf.mxu0
        %v2916 = vadd.f32 %v2832, %v2915
        %v2917 = vpop.f32.mrf.mxu0
        %2918 = vmatprep.mubr.f32.mxu0 0.0
        %2919 = vmatmul.mubr.f32.gmra.mxu0 %v2751
        %v2920 = vpop.f32.mrf.mxu0
        %v2921 = vadd.f32 %v2832, %v2920
        %v2922 = vpop.f32.mrf.mxu0
        %2923 = vmatprep.mubr.f32.mxu0 0.0
        %2924 = vmatmul.mubr.f32.gmra.mxu0 %v2752
        %v2925 = vpop.f32.mrf.mxu0
        %v2926 = vadd.f32 %v2832, %v2925
        %v2927 = vpop.f32.mrf.mxu0
        %2928 = vmatprep.mubr.f32.mxu0 0.0
        %2929 = vmatmul.mubr.f32.gmra.mxu0 %v2753
        %v2930 = vpop.f32.mrf.mxu0
        %v2931 = vadd.f32 %v2832, %v2930
        %v2932 = vpop.f32.mrf.mxu0
        %2933 = vmatprep.mubr.f32.mxu0 0.0
        %2934 = vmatmul.mubr.f32.gmra.mxu0 %v2754
        %v2935 = vpop.f32.mrf.mxu0
        %v2936 = vadd.f32 %v2832, %v2935
        %v2937 = vpop.f32.mrf.mxu0
        %2938 = vmatprep.mubr.f32.mxu0 0.0
        %2939 = vmatmul.mubr.f32.gmra.mxu0 %v2755
        %v2940 = vpop.f32.mrf.mxu0
        %v2941 = vadd.f32 %v2832, %v2940
        %v2942 = vpop.f32.mrf.mxu0
        %2943 = vmatprep.mubr.f32.mxu0 0.0
        %2944 = vmatmul.mubr.f32.gmra.mxu0 %v2756
        %v2945 = vpop.f32.mrf.mxu0
        %v2946 = vadd.f32 %v2832, %v2945
        %v2947 = vpop.f32.mrf.mxu0
        %2948 = vmatprep.mubr.f32.mxu0 0.0
        %2949 = vmatmul.mubr.f32.gmra.mxu0 %v2757
        %v2950 = vpop.f32.mrf.mxu0
        %v2951 = vadd.f32 %v2832, %v2950
        %v2952 = vpop.f32.mrf.mxu0
        %2953 = vmatprep.mubr.f32.mxu0 0.0
        %2954 = vmatmul.mubr.f32.gmra.mxu0 %v2758
        %v2955 = vpop.f32.mrf.mxu0
        %v2956 = vadd.f32 %v2832, %v2955
        %v2957 = vpop.f32.mrf.mxu0
        %2958 = vmatprep.mubr.f32.mxu0 0.0
        %2959 = vmatmul.mubr.f32.gmra.mxu0 %v2759
        %v2960 = vpop.f32.mrf.mxu0
        %v2961 = vadd.f32 %v2832, %v2960
        %v2962 = vpop.f32.mrf.mxu0
        %2963 = vmatprep.mubr.f32.mxu0 0.0
        %2964 = vmatmul.mubr.f32.gmra.mxu0 %v2760
        %v2965 = vpop.f32.mrf.mxu0
        %v2966 = vadd.f32 %v2832, %v2965
        %v2967 = vpop.f32.mrf.mxu0
        %2968 = vmatprep.mubr.f32.mxu0 0.0
        %2969 = vmatmul.mubr.f32.gmra.mxu0 %v2761
        %v2970 = vpop.f32.mrf.mxu0
        %v2971 = vadd.f32 %v2832, %v2970
        %v2972 = vpop.f32.mrf.mxu0
        %2973 = vmatprep.mubr.f32.mxu0 0.0
        %2974 = vmatmul.mubr.f32.gmra.mxu0 %v2762
        %v2975 = vpop.f32.mrf.mxu0
        %v2976 = vadd.f32 %v2832, %v2975
        %v2977 = vpop.f32.mrf.mxu0
        %2978 = vmatprep.mubr.f32.mxu0 0.0
        %2979 = vmatmul.mubr.f32.gmra.mxu0 %v2763
        %v2980 = vpop.f32.mrf.mxu0
        %v2981 = vadd.f32 %v2832, %v2980
        %v2982 = vpop.f32.mrf.mxu0
        %2983 = vmatprep.mubr.f32.mxu0 0.0
        %2984 = vmatmul.mubr.f32.gmra.mxu0 %v2764
        %v2985 = vpop.f32.mrf.mxu0
        %v2986 = vadd.f32 %v2832, %v2985
        %v2987 = vpop.f32.mrf.mxu0
        %2988 = vmatprep.mubr.f32.mxu0 0.0
        %2989 = vmatmul.mubr.f32.gmra.mxu0 %v2765
        %v2990 = vpop.f32.mrf.mxu0
        %v2991 = vadd.f32 %v2832, %v2990
        %v2992 = vpop.f32.mrf.mxu0
        %2993 = vmatprep.mubr.f32.mxu0 0.0
        %2994 = vmatmul.mubr.f32.gmra.mxu0 %v2766
        %v2995 = vpop.f32.mrf.mxu0
        %v2996 = vadd.f32 %v2832, %v2995
        %v2997 = vpop.f32.mrf.mxu0
        %2998 = vmatprep.mubr.f32.mxu0 0.0
        %2999 = vmatmul.mubr.f32.gmra.mxu0 %v2767
        %v3000 = vpop.f32.mrf.mxu0
        %v3001 = vadd.f32 %v2832, %v3000
        %v3002 = vpop.f32.mrf.mxu0
        %3003 = vmatprep.mubr.f32.mxu0 0.0
        %3004 = vmatmul.mubr.f32.gmra.mxu0 %v2768
        %v3005 = vpop.f32.mrf.mxu0
        %v3006 = vadd.f32 %v2832, %v3005
        %v3007 = vpop.f32.mrf.mxu0
        %3008 = vmatprep.mubr.f32.mxu0 0.0
        %3009 = vmatmul.mubr.f32.gmra.mxu0 %v2769
        %v3010 = vpop.f32.mrf.mxu0
        %v3011 = vadd.f32 %v2832, %v3010
        %v3012 = vpop.f32.mrf.mxu0
        %3013 = vmatprep.mubr.f32.mxu0 0.0
        %3014 = vmatmul.mubr.f32.gmra.mxu0 %v2770
        %v3015 = vpop.f32.mrf.mxu0
        %v3016 = vadd.f32 %v2832, %v3015
        %v3017 = vpop.f32.mrf.mxu0
        %3018 = vmatprep.mubr.f32.mxu0 0.0
        %3019 = vmatmul.mubr.f32.gmra.mxu0 %v2771
        %v3020 = vpop.f32.mrf.mxu0
        %v3021 = vadd.f32 %v2832, %v3020
        %v3022 = vpop.f32.mrf.mxu0
        %3023 = vmatprep.mubr.f32.mxu0 0.0
        %3024 = vmatmul.mubr.f32.gmra.mxu0 %v2772
        %v3025 = vpop.f32.mrf.mxu0
        %v3026 = vadd.f32 %v2832, %v3025
        %v3027 = vpop.f32.mrf.mxu0
        %3028 = vmatprep.mubr.f32.mxu0 0.0
        %3029 = vmatmul.mubr.f32.gmra.mxu0 %v2773
        %v3030 = vpop.f32.mrf.mxu0
        %v3031 = vadd.f32 %v2832, %v3030
        %v3032 = vpop.f32.mrf.mxu0
        %3033 = vmatprep.mubr.f32.mxu0 0.0
        %3034 = vmatmul.mubr.f32.gmra.mxu0 %v2774
        %v3035 = vpop.f32.mrf.mxu0
        %v3036 = vadd.f32 %v2832, %v3035
        %v3037 = vpop.f32.mrf.mxu0
        %3038 = vmatprep.mubr.f32.mxu0 0.0
        %3039 = vmatmul.mubr.f32.gmra.mxu0 %v2775
        %v3040 = vpop.f32.mrf.mxu0
        %v3041 = vadd.f32 %v2832, %v3040
        %v3042 = vpop.f32.mrf.mxu0
        %3043 = vmatprep.mubr.f32.mxu0 0.0
        %3044 = vmatmul.mubr.f32.gmra.mxu0 %v2776
        %v3045 = vpop.f32.mrf.mxu0
        %v3046 = vadd.f32 %v2832, %v3045
        %v3047 = vpop.f32.mrf.mxu0
        %3048 = vmatprep.mubr.f32.mxu0 0.0
        %3049 = vmatmul.mubr.f32.gmra.mxu0 %v2777
        %v3050 = vpop.f32.mrf.mxu0
        %v3051 = vadd.f32 %v2832, %v3050
        %v3052 = vpop.f32.mrf.mxu0
        %3053 = vmatprep.mubr.f32.mxu0 0.0
        %3054 = vmatmul.mubr.f32.gmra.mxu0 %v2778
        %v3055 = vpop.f32.mrf.mxu0
        %v3056 = vadd.f32 %v2832, %v3055
        %v3057 = vpop.f32.mrf.mxu0
        %3058 = vmatprep.mubr.f32.mxu0 0.0
        %3059 = vmatmul.mubr.f32.gmra.mxu0 %v2779
        %v3060 = vpop.f32.mrf.mxu0
        %v3061 = vadd.f32 %v2832, %v3060
        %v3062 = vpop.f32.mrf.mxu0
        %3063 = vmatprep.mubr.f32.mxu0 0.0
        %3064 = vmatmul.mubr.f32.gmra.mxu0 %v2780
        %v3065 = vpop.f32.mrf.mxu0
        %v3066 = vadd.f32 %v2832, %v3065
        %v3067 = vpop.f32.mrf.mxu0
        %3068 = vmatprep.mubr.f32.mxu0 0.0
        %3069 = vmatmul.mubr.f32.gmra.mxu0 %v2781
        %v3070 = vpop.f32.mrf.mxu0
        %v3071 = vadd.f32 %v2832, %v3070
        %v3072 = vpop.f32.mrf.mxu0
        %3073 = vmatprep.mubr.f32.mxu0 0.0
        %3074 = vmatmul.mubr.f32.gmra.mxu0 %v2782
        %v3075 = vpop.f32.mrf.mxu0
        %v3076 = vadd.f32 %v2832, %v3075
        %v3077 = vpop.f32.mrf.mxu0
        %3078 = vmatprep.mubr.f32.mxu0 0.0
        %3079 = vmatmul.mubr.f32.gmra.mxu0 %v2783
        %v3080 = vpop.f32.mrf.mxu0
        %v3081 = vadd.f32 %v2832, %v3080
        %v3082 = vpop.f32.mrf.mxu0
        %3083 = vmatprep.mubr.f32.mxu0 0.0
        %3084 = vmatmul.mubr.f32.gmra.mxu0 %v2784
        %v3085 = vpop.f32.mrf.mxu0
        %v3086 = vadd.f32 %v2832, %v3085
        %v3087 = vpop.f32.mrf.mxu0
        %3088 = vmatprep.mubr.f32.mxu0 0.0
        %3089 = vmatmul.mubr.f32.gmra.mxu0 %v2785
        %v3090 = vpop.f32.mrf.mxu0
        %v3091 = vadd.f32 %v2832, %v3090
        %v3092 = vpop.f32.mrf.mxu0
        %3093 = vmatprep.mubr.f32.mxu0 0.0
        %3094 = vmatmul.mubr.f32.gmra.mxu0 %v2786
        %v3095 = vpop.f32.mrf.mxu0
        %v3096 = vadd.f32 %v2832, %v3095
        %v3097 = vpop.f32.mrf.mxu0
        %3098 = vmatprep.mubr.f32.mxu0 0.0
        %3099 = vmatmul.mubr.f32.gmra.mxu0 %v2787
        %v3100 = vpop.f32.mrf.mxu0
        %v3101 = vadd.f32 %v2832, %v3100
        %v3102 = vpop.f32.mrf.mxu0
        %3103 = vmatprep.mubr.f32.mxu0 0.0
        %3104 = vmatmul.mubr.f32.gmra.mxu0 %v2788
        %v3105 = vpop.f32.mrf.mxu0
        %v3106 = vadd.f32 %v2832, %v3105
        %v3107 = vpop.f32.mrf.mxu0
        %3108 = vmatprep.mubr.f32.mxu0 0.0
        %3109 = vmatmul.mubr.f32.gmra.mxu0 %v2789
        %v3110 = vpop.f32.mrf.mxu0
        %v3111 = vadd.f32 %v2832, %v3110
        %v3112 = vpop.f32.mrf.mxu0
        %3113 = vmatprep.mubr.f32.mxu0 0.0
        %3114 = vmatmul.mubr.f32.gmra.mxu0 %v2790
        %v3115 = vpop.f32.mrf.mxu0
        %v3116 = vadd.f32 %v2832, %v3115
        %v3117 = vpop.f32.mrf.mxu0
        %3118 = vmatprep.mubr.f32.mxu0 0.0
        %3119 = vmatmul.mubr.f32.gmra.mxu0 %v2791
        %v3120 = vpop.f32.mrf.mxu0
        %v3121 = vadd.f32 %v2832, %v3120
        %v3122 = vpop.f32.mrf.mxu0
        %3123 = vmatprep.mubr.f32.mxu0 0.0
        %3124 = vmatmul.mubr.f32.gmra.mxu0 %v2792
        %v3125 = vpop.f32.mrf.mxu0
        %v3126 = vadd.f32 %v2832, %v3125
        %v3127 = vpop.f32.mrf.mxu0
        %3128 = vmatprep.mubr.f32.mxu0 0.0
        %3129 = vmatmul.mubr.f32.gmra.mxu0 %v2793
        %v3130 = vpop.f32.mrf.mxu0
        %v3131 = vadd.f32 %v2832, %v3130
        %v3132 = vpop.f32.mrf.mxu0
        %3133 = vmatprep.mubr.f32.mxu0 0.0
        %3134 = vmatmul.mubr.f32.gmra.mxu0 %v2794
        %v3135 = vpop.f32.mrf.mxu0
        %v3136 = vadd.f32 %v2832, %v3135
        %v3137 = vpop.f32.mrf.mxu0
        %3138 = vmatprep.mubr.f32.mxu0 0.0
        %3139 = vmatmul.mubr.f32.gmra.mxu0 %v2795
        %v3140 = vpop.f32.mrf.mxu0
        %v3141 = vadd.f32 %v2832, %v3140
        %v3142 = vpop.f32.mrf.mxu0
        %3143 = vmatprep.mubr.f32.mxu0 0.0
        %3144 = vmatmul.mubr.f32.gmra.mxu0 %v2796
        %v3145 = vpop.f32.mrf.mxu0
        %v3146 = vadd.f32 %v2832, %v3145
        %v3147 = vpop.f32.mrf.mxu0
        %3148 = vmatprep.mubr.f32.mxu0 0.0
        %3149 = vmatmul.mubr.f32.gmra.mxu0 %v2797
        %v3150 = vpop.f32.mrf.mxu0
        %v3151 = vadd.f32 %v2832, %v3150
        %v3152 = vpop.f32.mrf.mxu0
        %3153 = vmatprep.mubr.f32.mxu0 0.0
        %3154 = vmatmul.mubr.f32.gmra.mxu0 %v2798
        %v3155 = vpop.f32.mrf.mxu0
        %v3156 = vadd.f32 %v2832, %v3155
        %v3157 = vpop.f32.mrf.mxu0
        %3158 = vmatprep.mubr.f32.mxu0 0.0
        %3159 = vmatmul.mubr.f32.gmra.mxu0 %v2799
        %v3160 = vpop.f32.mrf.mxu0
        %v3161 = vadd.f32 %v2832, %v3160
        %v3162 = vpop.f32.mrf.mxu0
        %3163 = vmatprep.mubr.f32.mxu0 0.0
        %3164 = vmatmul.mubr.f32.gmra.mxu0 %v2800
        %v3165 = vpop.f32.mrf.mxu0
        %v3166 = vadd.f32 %v2832, %v3165
        %v3167 = vpop.f32.mrf.mxu0
        %3168 = vmatprep.mubr.f32.mxu0 0.0
        %3169 = vmatmul.mubr.f32.gmra.mxu0 %v2801
        %v3170 = vpop.f32.mrf.mxu0
        %v3171 = vadd.f32 %v2832, %v3170
        %v3172 = vpop.f32.mrf.mxu0
        %3173 = vmatprep.mubr.f32.mxu0 0.0
        %3174 = vmatmul.mubr.f32.gmra.mxu0 %v2802
        %v3175 = vpop.f32.mrf.mxu0
        %v3176 = vadd.f32 %v2832, %v3175
        %v3177 = vpop.f32.mrf.mxu0
        %3178 = vmatprep.mubr.f32.mxu0 0.0
        %3179 = vmatmul.mubr.f32.gmra.mxu0 %v2803
        %v3180 = vpop.f32.mrf.mxu0
        %v3181 = vadd.f32 %v2832, %v3180
        %v3182 = vpop.f32.mrf.mxu0
        %3183 = vmatprep.mubr.f32.mxu0 0.0
        %3184 = vmatmul.mubr.f32.gmra.mxu0 %v2804
        %v3185 = vpop.f32.mrf.mxu0
        %v3186 = vadd.f32 %v2832, %v3185
        %v3187 = vpop.f32.mrf.mxu0
        %3188 = vmatprep.mubr.f32.mxu0 0.0
        %3189 = vmatmul.mubr.f32.gmra.mxu0 %v2805
        %v3190 = vpop.f32.mrf.mxu0
        %v3191 = vadd.f32 %v2832, %v3190
        %v3192 = vpop.f32.mrf.mxu0
        %3193 = vmatprep.mubr.f32.mxu0 0.0
        %3194 = vmatmul.mubr.f32.gmra.mxu0 %v2806
        %v3195 = vpop.f32.mrf.mxu0
        %v3196 = vadd.f32 %v2832, %v3195
        %v3197 = vpop.f32.mrf.mxu0
        %3198 = vmatprep.mubr.f32.mxu0 0.0
        %3199 = vmatmul.mubr.f32.gmra.mxu0 %v2807
        %v3200 = vpop.f32.mrf.mxu0
        %v3201 = vadd.f32 %v2832, %v3200
        %v3202 = vpop.f32.mrf.mxu0
        %3203 = vmatprep.mubr.f32.mxu0 0.0
        %3204 = vmatmul.mubr.f32.gmra.mxu0 %v2808
        %v3205 = vpop.f32.mrf.mxu0
        %v3206 = vadd.f32 %v2832, %v3205
        %v3207 = vpop.f32.mrf.mxu0
        %3208 = vmatprep.mubr.f32.mxu0 0.0
        %3209 = vmatmul.mubr.f32.gmra.mxu0 %v2809
        %v3210 = vpop.f32.mrf.mxu0
        %v3211 = vadd.f32 %v2832, %v3210
        %v3212 = vpop.f32.mrf.mxu0
        %3213 = vmatprep.mubr.f32.mxu0 0.0
        %3214 = vmatmul.mubr.f32.gmra.mxu0 %v2810
        %v3215 = vpop.f32.mrf.mxu0
        %v3216 = vadd.f32 %v2832, %v3215
        %v3217 = vpop.f32.mrf.mxu0
        %3218 = vdwg.mxu0
        %3251 = vrot.lane.b32.xlu0 %v3061, 32
        %v3252 = vpop.permute.xlu0 %3251
        %3253 = vrot.lane.b32.xlu0 %v3066, 32
        %v3254 = vpop.permute.xlu0 %3253
        %3255 = vrot.lane.b32.xlu0 %v3071, 32
        %v3256 = vpop.permute.xlu0 %3255
        %3257 = vrot.lane.b32.xlu0 %v3076, 32
        %v3258 = vpop.permute.xlu0 %3257
        %3259 = vrot.lane.b32.xlu0 %v3081, 32
        %v3260 = vpop.permute.xlu0 %3259
        %3261 = vrot.lane.b32.xlu0 %v3086, 32
        %v3262 = vpop.permute.xlu0 %3261
        %3263 = vrot.lane.b32.xlu0 %v3091, 32
        %v3264 = vpop.permute.xlu0 %3263
        %3265 = vrot.lane.b32.xlu0 %v3096, 32
        %v3266 = vpop.permute.xlu0 %3265
        %3267 = vrot.lane.b32.xlu0 %v3101, 32
        %v3268 = vpop.permute.xlu0 %3267
        %3269 = vrot.lane.b32.xlu0 %v3106, 32
        %v3270 = vpop.permute.xlu0 %3269
        %3271 = vrot.lane.b32.xlu0 %v3111, 32
        %v3272 = vpop.permute.xlu0 %3271
        %3273 = vrot.lane.b32.xlu0 %v3116, 32
        %v3274 = vpop.permute.xlu0 %3273
        %3275 = vrot.lane.b32.xlu0 %v3121, 32
        %v3276 = vpop.permute.xlu0 %3275
        %3277 = vrot.lane.b32.xlu0 %v3126, 32
        %v3278 = vpop.permute.xlu0 %3277
        %3279 = vrot.lane.b32.xlu0 %v3131, 32
        %v3280 = vpop.permute.xlu0 %3279
        %3281 = vrot.lane.b32.xlu0 %v3136, 32
        %v3282 = vpop.permute.xlu0 %3281
        %3283 = vrot.lane.b32.xlu0 %v3141, 32
        %v3284 = vpop.permute.xlu0 %3283
        %3285 = vrot.lane.b32.xlu0 %v3146, 32
        %v3286 = vpop.permute.xlu0 %3285
        %3287 = vrot.lane.b32.xlu0 %v3151, 32
        %v3288 = vpop.permute.xlu0 %3287
        %3289 = vrot.lane.b32.xlu0 %v3156, 32
        %v3290 = vpop.permute.xlu0 %3289
        %3291 = vrot.lane.b32.xlu0 %v3161, 32
        %v3292 = vpop.permute.xlu0 %3291
        %3293 = vrot.lane.b32.xlu0 %v3166, 32
        %v3294 = vpop.permute.xlu0 %3293
        %3295 = vrot.lane.b32.xlu0 %v3171, 32
        %v3296 = vpop.permute.xlu0 %3295
        %3297 = vrot.lane.b32.xlu0 %v3176, 32
        %v3298 = vpop.permute.xlu0 %3297
        %3299 = vrot.lane.b32.xlu0 %v3181, 32
        %v3300 = vpop.permute.xlu0 %3299
        %3301 = vrot.lane.b32.xlu0 %v3186, 32
        %v3302 = vpop.permute.xlu0 %3301
        %3303 = vrot.lane.b32.xlu0 %v3191, 32
        %v3304 = vpop.permute.xlu0 %3303
        %3305 = vrot.lane.b32.xlu0 %v3196, 32
        %v3306 = vpop.permute.xlu0 %3305
        %3307 = vrot.lane.b32.xlu0 %v3201, 32
        %v3308 = vpop.permute.xlu0 %3307
        %3309 = vrot.lane.b32.xlu0 %v3206, 32
        %v3310 = vpop.permute.xlu0 %3309
        %3311 = vrot.lane.b32.xlu0 %v3211, 32
        %v3312 = vpop.permute.xlu0 %3311
        %3313 = vrot.lane.b32.xlu0 %v3216, 32
        %v3314 = vpop.permute.xlu0 %3313
        %vm3347 = vcmask 261120
        %v3348 = vsel %vm3347, %v2901, %v3252
        %v3349 = vsel %vm3347, %v2906, %v3254
        %v3350 = vsel %vm3347, %v2911, %v3256
        %v3351 = vsel %vm3347, %v2916, %v3258
        %v3352 = vsel %vm3347, %v2921, %v3260
        %v3353 = vsel %vm3347, %v2926, %v3262
        %v3354 = vsel %vm3347, %v2931, %v3264
        %v3355 = vsel %vm3347, %v2936, %v3266
        %v3356 = vsel %vm3347, %v2941, %v3268
        %v3357 = vsel %vm3347, %v2946, %v3270
        %v3358 = vsel %vm3347, %v2951, %v3272
        %v3359 = vsel %vm3347, %v2956, %v3274
        %v3360 = vsel %vm3347, %v2961, %v3276
        %v3361 = vsel %vm3347, %v2966, %v3278
        %v3362 = vsel %vm3347, %v2971, %v3280
        %v3363 = vsel %vm3347, %v2976, %v3282
        %v3364 = vsel %vm3347, %v2981, %v3284
        %v3365 = vsel %vm3347, %v2986, %v3286
        %v3366 = vsel %vm3347, %v2991, %v3288
        %v3367 = vsel %vm3347, %v2996, %v3290
        %v3368 = vsel %vm3347, %v3001, %v3292
        %v3369 = vsel %vm3347, %v3006, %v3294
        %v3370 = vsel %vm3347, %v3011, %v3296
        %v3371 = vsel %vm3347, %v3016, %v3298
        %v3372 = vsel %vm3347, %v3021, %v3300
        %v3373 = vsel %vm3347, %v3026, %v3302
        %v3374 = vsel %vm3347, %v3031, %v3304
        %v3375 = vsel %vm3347, %v3036, %v3306
        %v3376 = vsel %vm3347, %v3041, %v3308
        %v3377 = vsel %vm3347, %v3046, %v3310
        %v3378 = vsel %vm3347, %v3051, %v3312
        %v3379 = vsel %vm3347, %v3056, %v3314
        %vm3380 = vcmask 523264
        %3381 = vst.msk [vmem:[%s582] sm:$0xff] %vm3380, %v3348
        %3382 = vst.msk [vmem:[%s582 + $0x8] sm:$0xff] %vm3380, %v3349
        %3383 = vst.msk [vmem:[%s582 + $0x10] sm:$0xff] %vm3380, %v3350
        %3384 = vst.msk [vmem:[%s582 + $0x18] sm:$0xff] %vm3380, %v3351
        %3385 = vst.msk [vmem:[%s582 + $0x20] sm:$0xff] %vm3380, %v3352
        %3386 = vst.msk [vmem:[%s582 + $0x28] sm:$0xff] %vm3380, %v3353
        %3387 = vst.msk [vmem:[%s582 + $0x30] sm:$0xff] %vm3380, %v3354
        %3388 = vst.msk [vmem:[%s582 + $0x38] sm:$0xff] %vm3380, %v3355
        %3389 = vst.msk [vmem:[%s582 + $0x40] sm:$0xff] %vm3380, %v3356
        %3390 = vst.msk [vmem:[%s582 + $0x48] sm:$0xff] %vm3380, %v3357
        %3391 = vst.msk [vmem:[%s582 + $0x50] sm:$0xff] %vm3380, %v3358
        %3392 = vst.msk [vmem:[%s582 + $0x58] sm:$0xff] %vm3380, %v3359
        %3393 = vst.msk [vmem:[%s582 + $0x60] sm:$0xff] %vm3380, %v3360
        %3394 = vst.msk [vmem:[%s582 + $0x68] sm:$0xff] %vm3380, %v3361
        %3395 = vst.msk [vmem:[%s582 + $0x70] sm:$0xff] %vm3380, %v3362
        %3396 = vst.msk [vmem:[%s582 + $0x78] sm:$0xff] %vm3380, %v3363
        %3397 = vst.msk [vmem:[%s582 + $0x80] sm:$0xff] %vm3380, %v3364
        %3398 = vst.msk [vmem:[%s582 + $0x88] sm:$0xff] %vm3380, %v3365
        %3399 = vst.msk [vmem:[%s582 + $0x90] sm:$0xff] %vm3380, %v3366
        %3400 = vst.msk [vmem:[%s582 + $0x98] sm:$0xff] %vm3380, %v3367
        %3401 = vst.msk [vmem:[%s582 + $0xa0] sm:$0xff] %vm3380, %v3368
        %3402 = vst.msk [vmem:[%s582 + $0xa8] sm:$0xff] %vm3380, %v3369
        %3403 = vst.msk [vmem:[%s582 + $0xb0] sm:$0xff] %vm3380, %v3370
        %3404 = vst.msk [vmem:[%s582 + $0xb8] sm:$0xff] %vm3380, %v3371
        %3405 = vst.msk [vmem:[%s582 + $0xc0] sm:$0xff] %vm3380, %v3372
        %3406 = vst.msk [vmem:[%s582 + $0xc8] sm:$0xff] %vm3380, %v3373
        %3407 = vst.msk [vmem:[%s582 + $0xd0] sm:$0xff] %vm3380, %v3374
        %3408 = vst.msk [vmem:[%s582 + $0xd8] sm:$0xff] %vm3380, %v3375
        %3409 = vst.msk [vmem:[%s582 + $0xe0] sm:$0xff] %vm3380, %v3376
        %3410 = vst.msk [vmem:[%s582 + $0xe8] sm:$0xff] %vm3380, %v3377
        %3411 = vst.msk [vmem:[%s582 + $0xf0] sm:$0xff] %vm3380, %v3378
        %3412 = vst.msk [vmem:[%s582 + $0xf8] sm:$0xff] %vm3380, %v3379
        %s3413 = sand.u32 %s324, 1
        %s3414 = scalar_lea.sflag [#allocation4], %s3413
        %s3415 = sand.u32 %s324, 1
        %s3416 = smul.addr %s3415, 256
        %s3417 = scalar_lea.vmem [#allocation10], %s3416
        %s3418 = sand.u32 %s350, 1
        %s3419 = scalar_lea.sflag [#allocation12], %s3418
        %s3420 = sand.u32 %s350, 1
        %s3421 = smul.addr %s3420, 256
        %s3422 = scalar_lea.vmem [#allocation11], %s3421
        %s3423 = smul.u32 32, %s38
        %p3424 = scmp.lt.s32.totalorder %s3423, 63
        %s3425 = scalar_select %p3424, %s3423, 63
        %s3426 = smul.addr %s3425, 8
        %s3427 = scalar_lea.vmem %s15, %s3426
        // Predicated region
        $region89: #{tpu_custom_call.1} parent=71 // pred_check
          %p3428 = pneg %p334
        $region90: #{tpu_custom_call.1} parent=71 // pred_check_branch
          %3430 = sbr.rel (%p3428) target = $region92
        $region91: #{tpu_custom_call.1} parent=71 // pred_region
          %s3431 = smul.u32 32, %s38
          %s3433 = ssub.s32 4096, 4096
          %3434 = vsyncadd %s3414, %s3433
          %s3435 = smul.addr %s3431, 128
          %s3436 = scalar_lea.hbm %s13, %s3435
          %s3437 = sshll.u32 %s3417, 4
          %s3438 = int_to_ptr.vmem [resolvable:$true] %s3437
          %3443 = dma.vmem_to_hbm [thread:$0]  %s3438, 4096, %s3436, %s3414, 128, 128, 8
        $region92: #{tpu_custom_call.1} parent=71 // pred_fallthru
          _
        // Predicated region
        $region93: #{tpu_custom_call.1} parent=71 // pred_check
          %p3444 = pneg %p360
        $region94: #{tpu_custom_call.1} parent=71 // pred_check_branch
          %3446 = sbr.rel (%p3444) target = $region96
        $region95: #{tpu_custom_call.1} parent=71 // pred_region
          %s3447 = smul.u32 32, %s38
          %s3449 = ssub.s32 4096, 4096
          %3450 = vsyncadd %s3419, %s3449
          %s3451 = smul.addr %s3447, 128
          %s3452 = scalar_lea.hbm %s14, %s3451
          %s3453 = sshll.u32 %s3422, 4
          %s3454 = int_to_ptr.vmem [resolvable:$true] %s3453
          %3459 = dma.vmem_to_hbm [thread:$0]  %s3454, 4096, %s3452, %s3419, 128, 128, 8
        $region96: #{tpu_custom_call.1} parent=71 // pred_fallthru
          _
        // Predicated region
        $region97: #{tpu_custom_call.1} parent=71 // pred_check
          %p3460 = pneg %p386
        $region98: #{tpu_custom_call.1} parent=71 // pred_check_branch
          %3462 = sbr.rel (%p3460) target = $region100
        $region99: #{tpu_custom_call.1} parent=71 // pred_region
          %s3463 = smul.u32 32, %s38
        $region100: #{tpu_custom_call.1} parent=71 // pred_fallthru
          _
      $region72: #{tpu_custom_call.1} parent=5 // pred_fallthru
        _
      %p3464 = scmp.le.s32.totalorder 2, %s33
      // Predicated region
      $region101: #{tpu_custom_call.1} parent=5 // pred_check
        %p3465 = pneg %p3464
      $region102: #{tpu_custom_call.1} parent=5 // pred_check_branch
        %3467 = sbr.rel (%p3465) target = $region104
      $region103: #{tpu_custom_call.1} parent=5 // pred_region
        %s3468 = ssub.s32 %s33, 2
        // Predicated region
        $region105: #{tpu_custom_call.1} parent=103 // pred_check
          %p3469 = pneg %p340
        $region106: #{tpu_custom_call.1} parent=103 // pred_check_branch
          %3471 = sbr.rel (%p3469) target = $region108
        $region107: #{tpu_custom_call.1} parent=103 // pred_region
          %s3472 = sand.u32 %s325, 1
          %s3473 = scalar_lea.sflag [#allocation4], %s3472
          %s3474 = sand.u32 %s325, 1
          %s3475 = smul.addr %s3474, 256
          %s3476 = scalar_lea.vmem [#allocation10], %s3475
          %3477 = dma.done %s3473, 4096
        $region108: #{tpu_custom_call.1} parent=103 // pred_fallthru
          _
        // Predicated region
        $region109: #{tpu_custom_call.1} parent=103 // pred_check
          %p3478 = pneg %p366
        $region110: #{tpu_custom_call.1} parent=103 // pred_check_branch
          %3480 = sbr.rel (%p3478) target = $region112
        $region111: #{tpu_custom_call.1} parent=103 // pred_region
          %s3481 = sand.u32 %s351, 1
          %s3482 = scalar_lea.sflag [#allocation12], %s3481
          %s3483 = sand.u32 %s351, 1
          %s3484 = smul.addr %s3483, 256
          %s3485 = scalar_lea.vmem [#allocation11], %s3484
          %3486 = dma.done %s3482, 4096
        $region112: #{tpu_custom_call.1} parent=103 // pred_fallthru
          _
        // Predicated region
        $region113: #{tpu_custom_call.1} parent=103 // pred_check
          %p3487 = pneg %p392
        $region114: #{tpu_custom_call.1} parent=103 // pred_check_branch
          %3489 = sbr.rel (%p3487) target = $region116
        $region115: #{tpu_custom_call.1} parent=103 // pred_region
          %s3490 = smul.u32 32, %s39
          %p3491 = scmp.lt.s32.totalorder %s3490, 63
          %s3492 = scalar_select %p3491, %s3490, 63
          %s3493 = smul.addr %s3492, 8
          %s3494 = scalar_lea.vmem %s15, %s3493
        $region116: #{tpu_custom_call.1} parent=103 // pred_fallthru
          _
      $region104: #{tpu_custom_call.1} parent=5 // pred_fallthru
        _
    $region6: #{tpu_custom_call.1} parent=1 // loop_footer
      %s37 = sadd.s32 1, %s33
    $region7: #{tpu_custom_call.1} parent=1 // loop_footer_branch
      %32 = sbr.rel target = $region3
    $region8: #{tpu_custom_call.1} parent=1 // loop_exit
      _
    %3495 = vsyncpa [#allocation3], 1
    %s3496 = scalar_lea.sflag [#allocation3], 1
    %3497 = vsyncpa %s3496, 1
    %3498 = vsyncpa [#allocation6], 1
    %3499 = vsyncpa [#allocation9], 1
    %3500 = vsyncpa [#allocation4], 1
    %s3501 = scalar_lea.sflag [#allocation4], 1
    %3502 = vsyncpa %s3501, 1
    %3503 = vsyncpa [#allocation12], 1
    %s3504 = scalar_lea.sflag [#allocation12], 1
    %3505 = vsyncpa %s3504, 1

</llo_original>
